<compile_context>
chip_gen: v7x
topology: tpu7x:2x2x1
jax: 0.10.0
libtpu: 0.0.40
codegen_flags: <defaults>
</compile_context>

<pallas_src>
import jax
import jax.numpy as jnp
from jax.experimental import pallas as pl
from jax.experimental.pallas import tpu as pltpu

D_IN = 128        # layer1 in_features
D_H1 = 1056       # layer1 out_features (true)
D_H1_PAD = 1152   # padded to 9*128 for dense lanes / clean K tiling (~9% waste)
D_H2 = 128        # layer2 out_features
D_OUT = 2         # layer3 out_features (true, also the kernel's output width)
D_OUT_PAD = 128   # W3/b3 padded so the final matmul stays 128-lane in-register


def _hidden_chunks(total, ck=256):
    """Static K-chunking of the padded hidden axis: 4x256 + 1x128 for 1152."""
    chunks, lo = [], 0
    while lo < total:
        c = min(ck, total - lo)
        chunks.append((lo, c))
        lo += c
    return tuple(chunks)


_CHUNKS = _hidden_chunks(D_H1_PAD)


def mlp_kernel(x_ref, w1_ref, w2_ref, b2_ref, w3_ref, b3_ref, o_ref):
    """Fused 3-layer affine MLP on one (tb, 128) batch tile.

    layer1+layer2 are computed chunk-by-chunk over the (padded) 1152-wide
    hidden axis so only a (tb, <=256) slab of h1 is ever live.  All matmuls hit
    the MXU in bf16 with f32 accumulation; bias adds are f32 (VPU, v5e-safe).
    layer1's bias is pre-folded into b2_ref, so no per-chunk bias pass.
    """
    x = x_ref[...].astype(jnp.bfloat16)                  # in-kernel cast (VPU)
    tb = x.shape[0]

    acc = jnp.zeros((tb, D_H2), jnp.float32)             # layer2 pre-bias accum
    for lo, ck in _CHUNKS:                               # 5 static chunks
        h1c = jnp.dot(x, w1_ref[:, lo:lo + ck],
                      preferred_element_type=jnp.float32)          # (tb, ck) f32
        acc = acc + jnp.dot(h1c.astype(w2_ref.dtype), w2_ref[lo:lo + ck, :],
                            preferred_element_type=jnp.float32)    # (tb, 128) f32

    h2 = acc + b2_ref[...]                               # (tb, 128) f32 (b1 folded in)
    out = jnp.dot(h2.astype(w3_ref.dtype), w3_ref[...],
                  preferred_element_type=jnp.float32) + b3_ref[...]  # (tb, 128) f32
    o_ref[...] = out[:, :D_OUT].astype(o_ref.dtype)      # narrow (tb, 2) store


def prepare_params(params):
    """Pad to TPU-friendly shapes, cast matmul operands to bf16, fold b1 -> b2.

    Zero padding is value-preserving (padded W1 columns / W2 rows are zero).
    The b1 fold (b2' = b1 @ W2 + b2, computed in f32) is exact in real
    arithmetic; it only moves the bf16 rounding point of the h1 intermediate.
    """
    w1t, b1, w2t, b2, w3t, b3 = params
    b2f = (jnp.dot(b1, w2t, preferred_element_type=jnp.float32)
           + b2).astype(jnp.float32)                                  # (1, 128) f32
    w1p = jnp.pad(w1t, ((0, 0), (0, D_H1_PAD - D_H1))).astype(jnp.bfloat16)
    w2p = jnp.pad(w2t, ((0, D_H1_PAD - D_H1), (0, 0))).astype(jnp.bfloat16)
    w3p = jnp.pad(w3t, ((0, 0), (0, D_OUT_PAD - D_OUT))).astype(jnp.bfloat16)
    b3p = jnp.pad(b3, ((0, 0), (0, D_OUT_PAD - D_OUT))).astype(jnp.float32)
    return w1p, w2p, b2f, w3p, b3p


def nn_forward(x, prepared_params, *, tb=512):
    """x: (B, 128) f32 -> (B, 2) f32."""
    w1, w2, b2, w3, b3 = prepared_params
    B = x.shape[0]

    # Keep >= 2 grid steps when the batch allows it so v7x can shard the
    # "parallel" batch axis across both TensorCores; floor the tile at 256.
    while tb > 256 and pl.cdiv(B, tb) < 2:
        tb //= 2
    Bp = pl.cdiv(B, tb) * tb

    xp = x if Bp == B else jnp.pad(x, ((0, Bp - B), (0, 0)))   # f32 pad only if needed

    full = lambda i: (0, 0)                   # weights/biases: same block each step

    out = pl.pallas_call(
        mlp_kernel,
        out_shape=jax.ShapeDtypeStruct((Bp, D_OUT), jnp.float32),
        grid_spec=pltpu.PrefetchScalarGridSpec(
            num_scalar_prefetch=0,
            grid=(Bp // tb,),
            in_specs=[
                pl.BlockSpec((tb, D_IN), lambda i: (i, 0)),       # x tile (f32)
                pl.BlockSpec((D_IN, D_H1_PAD), full),             # W1^T (128, 1152) bf16
                pl.BlockSpec((D_H1_PAD, D_H2), full),             # W2^T (1152, 128) bf16
                pl.BlockSpec((1, D_H2), full),                    # b2'  (1, 128)    f32
                pl.BlockSpec((D_H2, D_OUT_PAD), full),            # W3^T (128, 128)  bf16
                pl.BlockSpec((1, D_OUT_PAD), full),               # b3   (1, 128)    f32
            ],
            out_specs=pl.BlockSpec((tb, D_OUT), lambda i: (i, 0)),  # (tb, 2) narrow out
        ),
        compiler_params=pltpu.CompilerParams(
            dimension_semantics=("parallel",)),   # batch tiles shard across TCs (v7x)
    )(xp, w1, w2, b2, w3, b3)

    return out if Bp == B else out[:B]


def init_params(key):
    """Deterministic init matching PyTorch Linear default (uniform +/- 1/sqrt(fan_in))."""
    ks = jax.random.split(key, 6)

    def lin(kw, kb, fan_in, fan_out):
        bound = 1.0 / jnp.sqrt(float(fan_in))
        w = jax.random.uniform(kw, (fan_in, fan_out), jnp.float32, -bound, bound)
        b = jax.random.uniform(kb, (1, fan_out), jnp.float32, -bound, bound)
        return w, b

    w1t, b1 = lin(ks[0], ks[1], D_IN, D_H1)    # layer1: 128 -> 1056
    w2t, b2 = lin(ks[2], ks[3], D_H1, D_H2)    # layer2: (1056) -> 128, see TODO above
    w3t, b3 = lin(ks[4], ks[5], D_H2, D_OUT)   # layer3: 128 -> 2
    return (w1t, b1, w2t, b2, w3t, b3)


if __name__ == "__main__":
    key = jax.random.PRNGKey(0)
    k_x, k_p = jax.random.split(key)

    B = 512                                     # 2 grid steps at the adaptive tb=256
    x = jax.random.normal(k_x, (B, D_IN), dtype=jnp.float32)
    params = init_params(k_p)
    prep = prepare_params(params)

    out = nn_forward(x, prep)
    out = jax.block_until_ready(out)

    # Pure-JAX layer-by-layer reference with bf16-MXU / f32-accumulate numerics
    # (includes b1 at its original position; the kernel folds it into b2, which
    # only moves the bf16 rounding point of the intermediate — tolerances cover it).
    w1t, b1, w2t, b2, w3t, b3 = params
    xb = x.astype(jnp.bfloat16)
    h1 = jnp.dot(xb, w1t.astype(jnp.bfloat16),
                 preferred_element_type=jnp.float32) + b1
    h2 = jnp.dot(h1.astype(jnp.bfloat16), w2t.astype(jnp.bfloat16),
                 preferred_element_type=jnp.float32) + b2
    ref = jnp.dot(h2.astype(jnp.bfloat16), w3t.astype(jnp.bfloat16),
                  preferred_element_type=jnp.float32) + b3

    assert out.shape == (B, D_OUT)
    assert jnp.allclose(out, ref, atol=2e-2, rtol=2e-2)

    print("KERNEL_OK")
</pallas_src>

<mosaic_0001>
module attributes {stable_mosaic.version = 11 : i64} {
  func.func @mlp_kernel(%arg0: i32, %arg1: memref<256x128xf32, #tpu.memory_space<vmem>>, %arg2: memref<128x1152xbf16, #tpu.memory_space<vmem>>, %arg3: memref<1152x128xbf16, #tpu.memory_space<vmem>>, %arg4: memref<1x128xf32, #tpu.memory_space<vmem>>, %arg5: memref<128x128xbf16, #tpu.memory_space<vmem>>, %arg6: memref<1x128xf32, #tpu.memory_space<vmem>>, %arg7: memref<256x2xf32, #tpu.memory_space<vmem>>) attributes {dimension_semantics = [#tpu.dimension_semantics<parallel>], iteration_bounds = array<i64: 2>, scalar_prefetch = 0 : i64, scratch_operands = 0 : i64, tpu.core_type = #tpu.core_type<tc>, window_params = [{transform_indices = @transform_0, window_bounds = array<i64: 256, 128>}, {pipeline_mode = #tpu.pipeline_mode<synchronous>, transform_indices = @transform_1, window_bounds = array<i64: 128, 1152>}, {pipeline_mode = #tpu.pipeline_mode<synchronous>, transform_indices = @transform_2, window_bounds = array<i64: 1152, 128>}, {pipeline_mode = #tpu.pipeline_mode<synchronous>, transform_indices = @transform_3, window_bounds = array<i64: 1, 128>}, {pipeline_mode = #tpu.pipeline_mode<synchronous>, transform_indices = @transform_4, window_bounds = array<i64: 128, 128>}, {pipeline_mode = #tpu.pipeline_mode<synchronous>, transform_indices = @transform_5, window_bounds = array<i64: 1, 128>}, {transform_indices = @transform_6, window_bounds = array<i64: 256, 2>}]} {
    %c0 = arith.constant 0 : index
    %c0_0 = arith.constant 0 : index
    %0 = vector.load %arg1[%c0, %c0_0] : memref<256x128xf32, #tpu.memory_space<vmem>>, vector<256x128xf32>
    %1 = arith.truncf %0 : vector<256x128xf32> to vector<256x128xbf16>
    %cst = arith.constant 0.000000e+00 : f32
    %2 = vector.broadcast %cst : f32 to vector<256x128xf32>
    %c0_1 = arith.constant 0 : index
    %c0_2 = arith.constant 0 : index
    %3 = vector.load %arg2[%c0_1, %c0_2] : memref<128x1152xbf16, #tpu.memory_space<vmem>>, vector<128x256xbf16>
    %cst_3 = arith.constant dense<0.000000e+00> : vector<256x256xf32>
    %4 = tpu.matmul %1, %3, %cst_3 {dimension_numbers = #tpu.dot_dimension_numbers<[1], [0], [0], [1], [0, 0, 1, 1], [], []>} : vector<256x128xbf16>, vector<128x256xbf16>, vector<256x256xf32> -> vector<256x256xf32>
    %5 = arith.truncf %4 : vector<256x256xf32> to vector<256x256xbf16>
    %c0_4 = arith.constant 0 : index
    %c0_5 = arith.constant 0 : index
    %6 = vector.load %arg3[%c0_4, %c0_5] : memref<1152x128xbf16, #tpu.memory_space<vmem>>, vector<256x128xbf16>
    %cst_6 = arith.constant dense<0.000000e+00> : vector<256x128xf32>
    %7 = tpu.matmul %5, %6, %cst_6 {dimension_numbers = #tpu.dot_dimension_numbers<[1], [0], [0], [1], [0, 0, 1, 1], [], []>} : vector<256x256xbf16>, vector<256x128xbf16>, vector<256x128xf32> -> vector<256x128xf32>
    %8 = arith.addf %2, %7 : vector<256x128xf32>
    %c0_7 = arith.constant 0 : index
    %c256 = arith.constant 256 : index
    %9 = vector.load %arg2[%c0_7, %c256] : memref<128x1152xbf16, #tpu.memory_space<vmem>>, vector<128x256xbf16>
    %cst_8 = arith.constant dense<0.000000e+00> : vector<256x256xf32>
    %10 = tpu.matmul %1, %9, %cst_8 {dimension_numbers = #tpu.dot_dimension_numbers<[1], [0], [0], [1], [0, 0, 1, 1], [], []>} : vector<256x128xbf16>, vector<128x256xbf16>, vector<256x256xf32> -> vector<256x256xf32>
    %11 = arith.truncf %10 : vector<256x256xf32> to vector<256x256xbf16>
    %c256_9 = arith.constant 256 : index
    %c0_10 = arith.constant 0 : index
    %12 = vector.load %arg3[%c256_9, %c0_10] : memref<1152x128xbf16, #tpu.memory_space<vmem>>, vector<256x128xbf16>
    %cst_11 = arith.constant dense<0.000000e+00> : vector<256x128xf32>
    %13 = tpu.matmul %11, %12, %cst_11 {dimension_numbers = #tpu.dot_dimension_numbers<[1], [0], [0], [1], [0, 0, 1, 1], [], []>} : vector<256x256xbf16>, vector<256x128xbf16>, vector<256x128xf32> -> vector<256x128xf32>
    %14 = arith.addf %8, %13 : vector<256x128xf32>
    %c0_12 = arith.constant 0 : index
    %c512 = arith.constant 512 : index
    %15 = vector.load %arg2[%c0_12, %c512] : memref<128x1152xbf16, #tpu.memory_space<vmem>>, vector<128x256xbf16>
    %cst_13 = arith.constant dense<0.000000e+00> : vector<256x256xf32>
    %16 = tpu.matmul %1, %15, %cst_13 {dimension_numbers = #tpu.dot_dimension_numbers<[1], [0], [0], [1], [0, 0, 1, 1], [], []>} : vector<256x128xbf16>, vector<128x256xbf16>, vector<256x256xf32> -> vector<256x256xf32>
    %17 = arith.truncf %16 : vector<256x256xf32> to vector<256x256xbf16>
    %c512_14 = arith.constant 512 : index
    %c0_15 = arith.constant 0 : index
    %18 = vector.load %arg3[%c512_14, %c0_15] : memref<1152x128xbf16, #tpu.memory_space<vmem>>, vector<256x128xbf16>
    %cst_16 = arith.constant dense<0.000000e+00> : vector<256x128xf32>
    %19 = tpu.matmul %17, %18, %cst_16 {dimension_numbers = #tpu.dot_dimension_numbers<[1], [0], [0], [1], [0, 0, 1, 1], [], []>} : vector<256x256xbf16>, vector<256x128xbf16>, vector<256x128xf32> -> vector<256x128xf32>
    %20 = arith.addf %14, %19 : vector<256x128xf32>
    %c0_17 = arith.constant 0 : index
    %c768 = arith.constant 768 : index
    %21 = vector.load %arg2[%c0_17, %c768] : memref<128x1152xbf16, #tpu.memory_space<vmem>>, vector<128x256xbf16>
    %cst_18 = arith.constant dense<0.000000e+00> : vector<256x256xf32>
    %22 = tpu.matmul %1, %21, %cst_18 {dimension_numbers = #tpu.dot_dimension_numbers<[1], [0], [0], [1], [0, 0, 1, 1], [], []>} : vector<256x128xbf16>, vector<128x256xbf16>, vector<256x256xf32> -> vector<256x256xf32>
    %23 = arith.truncf %22 : vector<256x256xf32> to vector<256x256xbf16>
    %c768_19 = arith.constant 768 : index
    %c0_20 = arith.constant 0 : index
    %24 = vector.load %arg3[%c768_19, %c0_20] : memref<1152x128xbf16, #tpu.memory_space<vmem>>, vector<256x128xbf16>
    %cst_21 = arith.constant dense<0.000000e+00> : vector<256x128xf32>
    %25 = tpu.matmul %23, %24, %cst_21 {dimension_numbers = #tpu.dot_dimension_numbers<[1], [0], [0], [1], [0, 0, 1, 1], [], []>} : vector<256x256xbf16>, vector<256x128xbf16>, vector<256x128xf32> -> vector<256x128xf32>
    %26 = arith.addf %20, %25 : vector<256x128xf32>
    %c0_22 = arith.constant 0 : index
    %c1024 = arith.constant 1024 : index
    %27 = vector.load %arg2[%c0_22, %c1024] : memref<128x1152xbf16, #tpu.memory_space<vmem>>, vector<128x128xbf16>
    %cst_23 = arith.constant dense<0.000000e+00> : vector<256x128xf32>
    %28 = tpu.matmul %1, %27, %cst_23 {dimension_numbers = #tpu.dot_dimension_numbers<[1], [0], [0], [1], [0, 0, 1, 1], [], []>} : vector<256x128xbf16>, vector<128x128xbf16>, vector<256x128xf32> -> vector<256x128xf32>
    %29 = arith.truncf %28 : vector<256x128xf32> to vector<256x128xbf16>
    %c1024_24 = arith.constant 1024 : index
    %c0_25 = arith.constant 0 : index
    %30 = vector.load %arg3[%c1024_24, %c0_25] : memref<1152x128xbf16, #tpu.memory_space<vmem>>, vector<128x128xbf16>
    %cst_26 = arith.constant dense<0.000000e+00> : vector<256x128xf32>
    %31 = tpu.matmul %29, %30, %cst_26 {dimension_numbers = #tpu.dot_dimension_numbers<[1], [0], [0], [1], [0, 0, 1, 1], [], []>} : vector<256x128xbf16>, vector<128x128xbf16>, vector<256x128xf32> -> vector<256x128xf32>
    %32 = arith.addf %26, %31 : vector<256x128xf32>
    %c0_27 = arith.constant 0 : index
    %c0_28 = arith.constant 0 : index
    %33 = vector.load %arg4[%c0_27, %c0_28] : memref<1x128xf32, #tpu.memory_space<vmem>>, vector<1x128xf32>
    %34 = vector.broadcast %33 : vector<1x128xf32> to vector<256x128xf32>
    %35 = arith.addf %32, %34 : vector<256x128xf32>
    %36 = arith.truncf %35 : vector<256x128xf32> to vector<256x128xbf16>
    %c0_29 = arith.constant 0 : index
    %c0_30 = arith.constant 0 : index
    %37 = vector.load %arg5[%c0_29, %c0_30] : memref<128x128xbf16, #tpu.memory_space<vmem>>, vector<128x128xbf16>
    %cst_31 = arith.constant dense<0.000000e+00> : vector<256x128xf32>
    %38 = tpu.matmul %36, %37, %cst_31 {dimension_numbers = #tpu.dot_dimension_numbers<[1], [0], [0], [1], [0, 0, 1, 1], [], []>} : vector<256x128xbf16>, vector<128x128xbf16>, vector<256x128xf32> -> vector<256x128xf32>
    %c0_32 = arith.constant 0 : index
    %c0_33 = arith.constant 0 : index
    %39 = vector.load %arg6[%c0_32, %c0_33] : memref<1x128xf32, #tpu.memory_space<vmem>>, vector<1x128xf32>
    %40 = vector.broadcast %39 : vector<1x128xf32> to vector<256x128xf32>
    %41 = arith.addf %38, %40 : vector<256x128xf32>
    %42 = vector.extract_strided_slice %41 {offsets = [0, 0], sizes = [256, 2], strides = [1, 1]} : vector<256x128xf32> to vector<256x2xf32>
    %c0_34 = arith.constant 0 : index
    %c0_35 = arith.constant 0 : index
    %43 = vector.load %arg7[%c0_34, %c0_35] : memref<256x2xf32, #tpu.memory_space<vmem>>, vector<256x2xf32>
    tpu.vector_store %arg7[%c0_34, %c0_35], %42 {strides = array<i32>} : memref<256x2xf32, #tpu.memory_space<vmem>>, vector<256x2xf32>,
    return
  }
  func.func @transform_0(%arg0: i32) -> (i32, i32) {
    %c0_i32 = arith.constant 0 : i32
    %c0_i32_0 = arith.constant 0 : i32
    return %arg0, %c0_i32 : i32, i32
  }
  func.func @transform_1(%arg0: i32) -> (i32, i32) {
    %c0_i32 = arith.constant 0 : i32
    %c0_i32_0 = arith.constant 0 : i32
    %c0_i32_1 = arith.constant 0 : i32
    return %c0_i32, %c0_i32_0 : i32, i32
  }
  func.func @transform_2(%arg0: i32) -> (i32, i32) {
    %c0_i32 = arith.constant 0 : i32
    %c0_i32_0 = arith.constant 0 : i32
    %c0_i32_1 = arith.constant 0 : i32
    return %c0_i32, %c0_i32_0 : i32, i32
  }
  func.func @transform_3(%arg0: i32) -> (i32, i32) {
    %c0_i32 = arith.constant 0 : i32
    %c0_i32_0 = arith.constant 0 : i32
    %c0_i32_1 = arith.constant 0 : i32
    return %c0_i32, %c0_i32_0 : i32, i32
  }
  func.func @transform_4(%arg0: i32) -> (i32, i32) {
    %c0_i32 = arith.constant 0 : i32
    %c0_i32_0 = arith.constant 0 : i32
    %c0_i32_1 = arith.constant 0 : i32
    return %c0_i32, %c0_i32_0 : i32, i32
  }
  func.func @transform_5(%arg0: i32) -> (i32, i32) {
    %c0_i32 = arith.constant 0 : i32
    %c0_i32_0 = arith.constant 0 : i32
    %c0_i32_1 = arith.constant 0 : i32
    return %c0_i32, %c0_i32_0 : i32, i32
  }
  func.func @transform_6(%arg0: i32) -> (i32, i32) {
    %c0_i32 = arith.constant 0 : i32
    %c0_i32_0 = arith.constant 0 : i32
    return %arg0, %c0_i32 : i32, i32
  }
}

</mosaic_0001>

<llo_original>
// kernel: tpu_custom_call.1
$region0: #{tpu_custom_call.1}
  #allocation0 [shape = 'u32[]', space=smem, size = 0x4, offset = 0x4, fixed_abs, tag = 'smem constant byte address 0x4 - core index']
  #allocation1 [shape = 'u32[144,128]{1,0:T(1,128)}', space=vmem, size = 0x12000, scoped, tag = 'internal scratch']
  %s0 = inlined_call_operand.hbm [shape: f32[512,128], index: 0, kind: input, shape index: {}]
  %s1 = inlined_call_operand.hbm [shape: bf16[128,1152], index: 1, kind: input, shape index: {}]
  %s2 = inlined_call_operand.hbm [shape: bf16[1152,128], index: 2, kind: input, shape index: {}]
  %s3 = inlined_call_operand.vmem [shape: f32[1,128], index: 3, kind: input, shape index: {}]
  %s4 = inlined_call_operand.hbm [shape: bf16[128,128], index: 4, kind: input, shape index: {}]
  %s5 = inlined_call_operand.vmem [shape: f32[1,128], index: 5, kind: input, shape index: {}]
  %s6 = inlined_call_operand.vmem [shape: f32[512,2], index: 6, kind: output, shape index: {}]
  %s7 = sld [smem:[#allocation0]]
  $region73: #{tpu_custom_call.1} parent=0
    _
  %s9 = ssub.s32 1, %s7
  %s10 = scalar_select 0, %s9, %s7
  $region1: #{tpu_custom_call.1} parent=0
    #allocation2 [shape = 'u8[262144]{0}', space=vmem, size = 0x40000, scoped, tag = 'input window, operand 0']
    #allocation3 [shape = 's32[2]{0}', space=sflag, size = 0x8, scoped, tag = 'scoped memory for tpu_custom_call.1']
    #allocation4 [shape = 'u8[294912]{0}', space=vmem, size = 0x48000, scoped, tag = 'input window, operand 1, single buffered']
    #allocation5 [shape = 's32[1]{0}', space=sflag, size = 0x4, scoped, tag = 'scoped memory for tpu_custom_call.1']
    #allocation6 [shape = 'u8[294912]{0}', space=vmem, size = 0x48000, scoped, tag = 'input window, operand 2, single buffered']
    #allocation7 [shape = 'u8[32768]{0}', space=vmem, size = 0x8000, scoped, tag = 'input window, operand 4, single buffered']
    #allocation8 [shape = 's32[1]{0}', space=sflag, size = 0x4, scoped, tag = 'scoped memory for tpu_custom_call.1']
    %11 = vsyncpa [#allocation3], 0
    %s12 = scalar_lea.sflag [#allocation3], 1
    %13 = vsyncpa %s12, 0
    %14 = vsyncpa [#allocation5], 0
    %15 = vsyncpa [#allocation8], 0
    loop: start=0, step=1, limit=4
    $region2: #{tpu_custom_call.1} parent=1 // loop_pre_header
      _
    $region3: #{tpu_custom_call.1} parent=1 // loop_header
      %s17 = sphi 0, %s21
      %p18 = scmp.ge.s32.totalorder %s17, 4
      %s27 = sphi 0, %s29
      %s30 = sphi 0, %s27
      %s31 = sphi 0, %s30
      %s47 = sphi 0, %s31
      %s51 = sphi 0, %s51
      %s53 = sphi 0, %s51
      %s54 = sphi 0, %s53
      %s68 = sphi 0, %s54
      %s72 = sphi 0, %s72
      %s74 = sphi 0, %s72
      %s75 = sphi 0, %s74
      %s89 = sphi 0, %s75
      %s93 = sphi 0, %s93
      %s95 = sphi 0, %s93
      %s96 = sphi 0, %s95
      %s110 = sphi 0, %s96
      %s114 = sphi 0, %s114
      %s116 = sphi 0, %s114
      %s117 = sphi 0, %s116
      %s131 = sphi 0, %s117
      %s135 = sphi 0, %s135
      %s137 = sphi 0, %s135
      %s138 = sphi 0, %s137
      %s152 = sphi 0, %s138
      %s158 = sphi 0, %s160
      %s161 = sphi 0, %s158
      %s162 = sphi 0, %s161
      %s178 = sphi 0, %s162
    $region4: #{tpu_custom_call.1} parent=1 // loop_header_branch
      %20 = sbr.rel (%p18) target = $region8
    $region5: #{tpu_custom_call.1} parent=1 // loop_body
      %s22 = ssub.s32 %s17, 1
      %s23 = ssub.s32 %s17, 2
      %s24 = sadd.s32 %s17, 1
      %s25 = ssub.s32 %s17, %s24
      %p26 = scmp.eq.s32.totalorder %s25, 0
      %s28 = sadd.s32 %s27, 1
      %s29 = scalar_select %p26, %s27, %s28
      %p32 = pneg %p26
      %p33 = scmp.eq.s32.totalorder %s17, 1
      %p34 = por %p32, %p33
      %p35 = scmp.ne.s32.totalorder %s27, %s30
      %p36 = scmp.eq.s32.totalorder %s17, 0
      %p37 = por %p35, %p36
      %p38 = scmp.ne.s32.totalorder %s27, %s30
      %p39 = scmp.eq.s32.totalorder %s22, 1
      %p40 = por %p38, %p39
      %p41 = scmp.ne.s32.totalorder %s30, %s31
      %p42 = scmp.eq.s32.totalorder %s22, 0
      %p43 = por %p41, %p42
      %p44 = scmp.ne.s32.totalorder %s30, %s31
      %p45 = scmp.eq.s32.totalorder %s23, 1
      %p46 = por %p44, %p45
      %p48 = scmp.ne.s32.totalorder %s31, %s47
      %p49 = scmp.eq.s32.totalorder %s23, 0
      %p50 = por %p48, %p49
      %s52 = sadd.s32 %s51, 1
      %p55 = scmp.eq.s32.totalorder %s17, 1
      %p56 = scmp.ne.s32.totalorder %s51, %s53
      %p57 = scmp.eq.s32.totalorder %s17, 0
      %p58 = por %p56, %p57
      %p59 = scmp.ne.s32.totalorder %s51, %s53
      %p60 = scmp.eq.s32.totalorder %s22, 1
      %p61 = por %p59, %p60
      %p62 = scmp.ne.s32.totalorder %s53, %s54
      %p63 = scmp.eq.s32.totalorder %s22, 0
      %p64 = por %p62, %p63
      %p65 = scmp.ne.s32.totalorder %s53, %s54
      %p66 = scmp.eq.s32.totalorder %s23, 1
      %p67 = por %p65, %p66
      %p69 = scmp.ne.s32.totalorder %s54, %s68
      %p70 = scmp.eq.s32.totalorder %s23, 0
      %p71 = por %p69, %p70
      %s73 = sadd.s32 %s72, 1
      %p76 = scmp.eq.s32.totalorder %s17, 1
      %p77 = scmp.ne.s32.totalorder %s72, %s74
      %p78 = scmp.eq.s32.totalorder %s17, 0
      %p79 = por %p77, %p78
      %p80 = scmp.ne.s32.totalorder %s72, %s74
      %p81 = scmp.eq.s32.totalorder %s22, 1
      %p82 = por %p80, %p81
      %p83 = scmp.ne.s32.totalorder %s74, %s75
      %p84 = scmp.eq.s32.totalorder %s22, 0
      %p85 = por %p83, %p84
      %p86 = scmp.ne.s32.totalorder %s74, %s75
      %p87 = scmp.eq.s32.totalorder %s23, 1
      %p88 = por %p86, %p87
      %p90 = scmp.ne.s32.totalorder %s75, %s89
      %p91 = scmp.eq.s32.totalorder %s23, 0
      %p92 = por %p90, %p91
      %s94 = sadd.s32 %s93, 1
      %p97 = scmp.eq.s32.totalorder %s17, 1
      %p98 = scmp.ne.s32.totalorder %s93, %s95
      %p99 = scmp.eq.s32.totalorder %s17, 0
      %p100 = por %p98, %p99
      %p101 = scmp.ne.s32.totalorder %s93, %s95
      %p102 = scmp.eq.s32.totalorder %s22, 1
      %p103 = por %p101, %p102
      %p104 = scmp.ne.s32.totalorder %s95, %s96
      %p105 = scmp.eq.s32.totalorder %s22, 0
      %p106 = por %p104, %p105
      %p107 = scmp.ne.s32.totalorder %s95, %s96
      %p108 = scmp.eq.s32.totalorder %s23, 1
      %p109 = por %p107, %p108
      %p111 = scmp.ne.s32.totalorder %s96, %s110
      %p112 = scmp.eq.s32.totalorder %s23, 0
      %p113 = por %p111, %p112
      %s115 = sadd.s32 %s114, 1
      %p118 = scmp.eq.s32.totalorder %s17, 1
      %p119 = scmp.ne.s32.totalorder %s114, %s116
      %p120 = scmp.eq.s32.totalorder %s17, 0
      %p121 = por %p119, %p120
      %p122 = scmp.ne.s32.totalorder %s114, %s116
      %p123 = scmp.eq.s32.totalorder %s22, 1
      %p124 = por %p122, %p123
      %p125 = scmp.ne.s32.totalorder %s116, %s117
      %p126 = scmp.eq.s32.totalorder %s22, 0
      %p127 = por %p125, %p126
      %p128 = scmp.ne.s32.totalorder %s116, %s117
      %p129 = scmp.eq.s32.totalorder %s23, 1
      %p130 = por %p128, %p129
      %p132 = scmp.ne.s32.totalorder %s117, %s131
      %p133 = scmp.eq.s32.totalorder %s23, 0
      %p134 = por %p132, %p133
      %s136 = sadd.s32 %s135, 1
      %p139 = scmp.eq.s32.totalorder %s17, 1
      %p140 = scmp.ne.s32.totalorder %s135, %s137
      %p141 = scmp.eq.s32.totalorder %s17, 0
      %p142 = por %p140, %p141
      %p143 = scmp.ne.s32.totalorder %s135, %s137
      %p144 = scmp.eq.s32.totalorder %s22, 1
      %p145 = por %p143, %p144
      %p146 = scmp.ne.s32.totalorder %s137, %s138
      %p147 = scmp.eq.s32.totalorder %s22, 0
      %p148 = por %p146, %p147
      %p149 = scmp.ne.s32.totalorder %s137, %s138
      %p150 = scmp.eq.s32.totalorder %s23, 1
      %p151 = por %p149, %p150
      %p153 = scmp.ne.s32.totalorder %s138, %s152
      %p154 = scmp.eq.s32.totalorder %s23, 0
      %p155 = por %p153, %p154
      %s156 = ssub.s32 %s17, %s24
      %p157 = scmp.eq.s32.totalorder %s156, 0
      %s159 = sadd.s32 %s158, 1
      %s160 = scalar_select %p157, %s158, %s159
      %p163 = pneg %p157
      %p164 = scmp.eq.s32.totalorder %s17, 1
      %p165 = por %p163, %p164
      %p166 = scmp.ne.s32.totalorder %s158, %s161
      %p167 = scmp.eq.s32.totalorder %s17, 0
      %p168 = por %p166, %p167
      %p169 = scmp.ne.s32.totalorder %s158, %s161
      %p170 = scmp.eq.s32.totalorder %s22, 1
      %p171 = por %p169, %p170
      %p172 = scmp.ne.s32.totalorder %s161, %s162
      %p173 = scmp.eq.s32.totalorder %s22, 0
      %p174 = por %p172, %p173
      %p175 = scmp.ne.s32.totalorder %s161, %s162
      %p176 = scmp.eq.s32.totalorder %s23, 1
      %p177 = por %p175, %p176
      %p179 = scmp.ne.s32.totalorder %s162, %s178
      %p180 = scmp.eq.s32.totalorder %s23, 0
      %p181 = por %p179, %p180
      %p182 = scmp.le.s32.totalorder 1, %s17
      %p183 = scmp.lt.s32.totalorder %s17, 3
      %p184 = pnand %p182, %p183
      %p185 = pneg %p184
      // Predicated region
      $region9: #{tpu_custom_call.1} parent=5 // pred_check
        _
      $region10: #{tpu_custom_call.1} parent=5 // pred_check_branch
        %187 = sbr.rel (%p184) target = $region12
      $region11: #{tpu_custom_call.1} parent=5 // pred_region
        %s188 = ssub.s32 %s17, 1
        // Predicated region
        $region13: #{tpu_custom_call.1} parent=11 // pred_check
          %p189 = pneg %p64
        $region14: #{tpu_custom_call.1} parent=11 // pred_check_branch
          %191 = sbr.rel (%p189) target = $region16
        $region15: #{tpu_custom_call.1} parent=11 // pred_region
          %s193 = ssub.s32 9216, 9216
          %194 = vsyncadd [#allocation5], %s193
          %s195 = sshll.u32 [#allocation4], 4
          %s196 = int_to_ptr.vmem [resolvable:$true] %s195
          %201 = dma.hbm_to_vmem [thread:$0]  %s1, 9216, %s196, [#allocation5], 576, 576, 36
        $region16: #{tpu_custom_call.1} parent=11 // pred_fallthru
          _
        // Predicated region
        $region17: #{tpu_custom_call.1} parent=11 // pred_check
          %p202 = pneg %p85
        $region18: #{tpu_custom_call.1} parent=11 // pred_check_branch
          %204 = sbr.rel (%p202) target = $region20
        $region19: #{tpu_custom_call.1} parent=11 // pred_region
          %s206 = ssub.s32 9216, 9216
          %207 = vsyncadd [#allocation5], %s206
          %s208 = sshll.u32 [#allocation6], 4
          %s209 = int_to_ptr.vmem [resolvable:$true] %s208
          %214 = dma.hbm_to_vmem [thread:$0]  %s2, 9216, %s209, [#allocation5], 64, 64, 4
        $region20: #{tpu_custom_call.1} parent=11 // pred_fallthru
          _
        // Predicated region
        $region21: #{tpu_custom_call.1} parent=11 // pred_check
          %p215 = pneg %p106
        $region22: #{tpu_custom_call.1} parent=11 // pred_check_branch
          %217 = sbr.rel (%p215) target = $region24
        $region23: #{tpu_custom_call.1} parent=11 // pred_region
          _
        $region24: #{tpu_custom_call.1} parent=11 // pred_fallthru
          _
        // Predicated region
        $region25: #{tpu_custom_call.1} parent=11 // pred_check
          %p218 = pneg %p127
        $region26: #{tpu_custom_call.1} parent=11 // pred_check_branch
          %220 = sbr.rel (%p218) target = $region28
        $region27: #{tpu_custom_call.1} parent=11 // pred_region
          %s222 = ssub.s32 1024, 1024
          %223 = vsyncadd [#allocation8], %s222
          %s224 = sshll.u32 [#allocation7], 4
          %s225 = int_to_ptr.vmem [resolvable:$true] %s224
          %230 = dma.hbm_to_vmem [thread:$0]  %s4, 1024, %s225, [#allocation8], 64, 64, 4
        $region28: #{tpu_custom_call.1} parent=11 // pred_fallthru
          _
        // Predicated region
        $region29: #{tpu_custom_call.1} parent=11 // pred_check
          %p231 = pneg %p148
        $region30: #{tpu_custom_call.1} parent=11 // pred_check_branch
          %233 = sbr.rel (%p231) target = $region32
        $region31: #{tpu_custom_call.1} parent=11 // pred_region
          _
        $region32: #{tpu_custom_call.1} parent=11 // pred_fallthru
          _
      $region12: #{tpu_custom_call.1} parent=5 // pred_fallthru
        _
      %p234 = scmp.lt.s32.totalorder %s17, 2
      // Predicated region
      $region33: #{tpu_custom_call.1} parent=5 // pred_check
        %p235 = pneg %p234
      $region34: #{tpu_custom_call.1} parent=5 // pred_check_branch
        %237 = sbr.rel (%p235) target = $region36
      $region35: #{tpu_custom_call.1} parent=5 // pred_region
        // Predicated region
        $region37: #{tpu_custom_call.1} parent=35 // pred_check
          %p238 = pneg %p37
        $region38: #{tpu_custom_call.1} parent=35 // pred_check_branch
          %240 = sbr.rel (%p238) target = $region40
        $region39: #{tpu_custom_call.1} parent=35 // pred_region
          %s241 = sand.u32 %s27, 1
          %s242 = scalar_lea.sflag [#allocation3], %s241
          %s243 = sand.u32 %s27, 1
          %s244 = smul.addr %s243, 256
          %s245 = scalar_lea.vmem [#allocation2], %s244
          %s246 = smul.u32 32, %s17
          %s248 = ssub.s32 4096, 4096
          %249 = vsyncadd %s242, %s248
          %s250 = smul.addr %s246, 128
          %s251 = scalar_lea.hbm %s0, %s250
          %s252 = sshll.u32 %s245, 4
          %s253 = int_to_ptr.vmem [resolvable:$true] %s252
          %258 = dma.hbm_to_vmem [thread:$0]  %s251, 4096, %s253, %s242, 128, 128, 8
        $region40: #{tpu_custom_call.1} parent=35 // pred_fallthru
          _
      $region36: #{tpu_custom_call.1} parent=5 // pred_fallthru
        _
      %p259 = scmp.le.s32.totalorder 1, %s17
      %p260 = scmp.lt.s32.totalorder %s17, 3
      %p261 = pnand %p259, %p260
      %p262 = pneg %p261
      // Predicated region
      $region41: #{tpu_custom_call.1} parent=5 // pred_check
        _
      $region42: #{tpu_custom_call.1} parent=5 // pred_check_branch
        %264 = sbr.rel (%p261) target = $region44
      $region43: #{tpu_custom_call.1} parent=5 // pred_region
        %s265 = ssub.s32 %s17, 1
        %s266 = sand.u32 %s30, 1
        %s267 = scalar_lea.sflag [#allocation3], %s266
        %s268 = sand.u32 %s30, 1
        %s269 = smul.addr %s268, 256
        %s270 = scalar_lea.vmem [#allocation2], %s269
        // Predicated region
        $region45: #{tpu_custom_call.1} parent=43 // pred_check
          %p271 = pneg %p43
        $region46: #{tpu_custom_call.1} parent=43 // pred_check_branch
          %273 = sbr.rel (%p271) target = $region48
        $region47: #{tpu_custom_call.1} parent=43 // pred_region
          %274 = dma.done %s267, 4096
        $region48: #{tpu_custom_call.1} parent=43 // pred_fallthru
          _
        // Predicated region
        $region49: #{tpu_custom_call.1} parent=43 // pred_check
          %p275 = pneg %p64
        $region50: #{tpu_custom_call.1} parent=43 // pred_check_branch
          %277 = sbr.rel (%p275) target = $region52
        $region51: #{tpu_custom_call.1} parent=43 // pred_region
          %278 = dma.done [#allocation5], 9216
        $region52: #{tpu_custom_call.1} parent=43 // pred_fallthru
          _
        // Predicated region
        $region53: #{tpu_custom_call.1} parent=43 // pred_check
          %p279 = pneg %p85
        $region54: #{tpu_custom_call.1} parent=43 // pred_check_branch
          %281 = sbr.rel (%p279) target = $region56
        $region55: #{tpu_custom_call.1} parent=43 // pred_region
          %282 = dma.done [#allocation5], 9216
        $region56: #{tpu_custom_call.1} parent=43 // pred_fallthru
          _
        // Predicated region
        $region57: #{tpu_custom_call.1} parent=43 // pred_check
          %p283 = pneg %p127
        $region58: #{tpu_custom_call.1} parent=43 // pred_check_branch
          %285 = sbr.rel (%p283) target = $region60
        $region59: #{tpu_custom_call.1} parent=43 // pred_region
          %286 = dma.done [#allocation8], 1024
        $region60: #{tpu_custom_call.1} parent=43 // pred_fallthru
          _
        %s287 = sand.u32 %s30, 1
        %s288 = scalar_lea.sflag [#allocation3], %s287
        %s289 = sand.u32 %s30, 1
        %s290 = smul.addr %s289, 256
        %s291 = scalar_lea.vmem [#allocation2], %s290
        %p292 = pneg %p43
        %p293 = pneg %p40
        %p294 = pneg %p64
        %p295 = pneg %p61
        %p296 = pneg %p85
        %p297 = pneg %p82
        %p298 = pneg %p106
        %p299 = pneg %p103
        %p300 = pneg %p127
        %p301 = pneg %p124
        %p302 = pneg %p148
        %p303 = pneg %p145
        %p304 = pneg %p174
        %p305 = pneg %p171
        %s306 = smul.u32 32, %s22
        %p307 = scmp.lt.s32.totalorder %s306, 63
        %s308 = scalar_select %p307, %s306, 63
        %s309 = smul.addr %s308, 8
        %s310 = scalar_lea.vmem %s6, %s309
        %s311 = smul.u32 32, %s22
        %s312 = smul.u32 32, %s22
        %p313 = scmp.lt.s32.totalorder %s312, 63
        %s314 = scalar_select %p313, %s312, 63
        %s315 = smul.addr %s314, 8
        %s316 = scalar_lea.vmem %s6, %s315
        %s317 = smul.u32 32, %s22
        %v319 = vld [vmem:[%s270] sm:$0xff]
        %v320 = vld [vmem:[%s270 + $0x8] sm:$0xff]
        %v321 = vld [vmem:[%s270 + $0x10] sm:$0xff]
        %v322 = vld [vmem:[%s270 + $0x18] sm:$0xff]
        %v323 = vld [vmem:[%s270 + $0x20] sm:$0xff]
        %v324 = vld [vmem:[%s270 + $0x28] sm:$0xff]
        %v325 = vld [vmem:[%s270 + $0x30] sm:$0xff]
        %v326 = vld [vmem:[%s270 + $0x38] sm:$0xff]
        %v327 = vld [vmem:[%s270 + $0x40] sm:$0xff]
        %v328 = vld [vmem:[%s270 + $0x48] sm:$0xff]
        %v329 = vld [vmem:[%s270 + $0x50] sm:$0xff]
        %v330 = vld [vmem:[%s270 + $0x58] sm:$0xff]
        %v331 = vld [vmem:[%s270 + $0x60] sm:$0xff]
        %v332 = vld [vmem:[%s270 + $0x68] sm:$0xff]
        %v333 = vld [vmem:[%s270 + $0x70] sm:$0xff]
        %v334 = vld [vmem:[%s270 + $0x78] sm:$0xff]
        %v335 = vld [vmem:[%s270 + $0x80] sm:$0xff]
        %v336 = vld [vmem:[%s270 + $0x88] sm:$0xff]
        %v337 = vld [vmem:[%s270 + $0x90] sm:$0xff]
        %v338 = vld [vmem:[%s270 + $0x98] sm:$0xff]
        %v339 = vld [vmem:[%s270 + $0xa0] sm:$0xff]
        %v340 = vld [vmem:[%s270 + $0xa8] sm:$0xff]
        %v341 = vld [vmem:[%s270 + $0xb0] sm:$0xff]
        %v342 = vld [vmem:[%s270 + $0xb8] sm:$0xff]
        %v343 = vld [vmem:[%s270 + $0xc0] sm:$0xff]
        %v344 = vld [vmem:[%s270 + $0xc8] sm:$0xff]
        %v345 = vld [vmem:[%s270 + $0xd0] sm:$0xff]
        %v346 = vld [vmem:[%s270 + $0xd8] sm:$0xff]
        %v347 = vld [vmem:[%s270 + $0xe0] sm:$0xff]
        %v348 = vld [vmem:[%s270 + $0xe8] sm:$0xff]
        %v349 = vld [vmem:[%s270 + $0xf0] sm:$0xff]
        %v350 = vld [vmem:[%s270 + $0xf8] sm:$0xff]
        %v351 = vpack.c.bf16 %v320, %v319
        %v352 = vpack.c.bf16 %v322, %v321
        %v353 = vpack.c.bf16 %v324, %v323
        %v354 = vpack.c.bf16 %v326, %v325
        %v355 = vpack.c.bf16 %v328, %v327
        %v356 = vpack.c.bf16 %v330, %v329
        %v357 = vpack.c.bf16 %v332, %v331
        %v358 = vpack.c.bf16 %v334, %v333
        %v359 = vpack.c.bf16 %v336, %v335
        %v360 = vpack.c.bf16 %v338, %v337
        %v361 = vpack.c.bf16 %v340, %v339
        %v362 = vpack.c.bf16 %v342, %v341
        %v363 = vpack.c.bf16 %v344, %v343
        %v364 = vpack.c.bf16 %v346, %v345
        %v365 = vpack.c.bf16 %v348, %v347
        %v366 = vpack.c.bf16 %v350, %v349
        %v367 = vld [vmem:[#allocation4] sm:$0xff]
        %v368 = vld [vmem:[#allocation4 + $0x24] sm:$0xff]
        %v369 = vld [vmem:[#allocation4 + $0x48] sm:$0xff]
        %v370 = vld [vmem:[#allocation4 + $0x6c] sm:$0xff]
        %v371 = vld [vmem:[#allocation4 + $0x90] sm:$0xff]
        %v372 = vld [vmem:[#allocation4 + $0xb4] sm:$0xff]
        %v373 = vld [vmem:[#allocation4 + $0xd8] sm:$0xff]
        %v374 = vld [vmem:[#allocation4 + $0xfc] sm:$0xff]
        %v375 = vld [vmem:[#allocation4 + $0x120] sm:$0xff]
        %v376 = vld [vmem:[#allocation4 + $0x144] sm:$0xff]
        %v377 = vld [vmem:[#allocation4 + $0x168] sm:$0xff]
        %v378 = vld [vmem:[#allocation4 + $0x18c] sm:$0xff]
        %v379 = vld [vmem:[#allocation4 + $0x1b0] sm:$0xff]
        %v380 = vld [vmem:[#allocation4 + $0x1d4] sm:$0xff]
        %v381 = vld [vmem:[#allocation4 + $0x1f8] sm:$0xff]
        %v382 = vld [vmem:[#allocation4 + $0x21c] sm:$0xff]
        %v399 = vunpack.c.l.b16 %v367
        %v400 = vunpack.c.h.b16 %v367
        %v401 = vunpack.c.l.b16 %v368
        %v402 = vunpack.c.h.b16 %v368
        %v403 = vunpack.c.l.b16 %v369
        %v404 = vunpack.c.h.b16 %v369
        %v405 = vunpack.c.l.b16 %v370
        %v406 = vunpack.c.h.b16 %v370
        %v407 = vunpack.c.l.b16 %v371
        %v408 = vunpack.c.h.b16 %v371
        %v409 = vunpack.c.l.b16 %v372
        %v410 = vunpack.c.h.b16 %v372
        %v411 = vunpack.c.l.b16 %v373
        %v412 = vunpack.c.h.b16 %v373
        %v413 = vunpack.c.l.b16 %v374
        %v414 = vunpack.c.h.b16 %v374
        %v415 = vunpack.c.l.b16 %v375
        %v416 = vunpack.c.h.b16 %v375
        %v417 = vunpack.c.l.b16 %v376
        %v418 = vunpack.c.h.b16 %v376
        %v419 = vunpack.c.l.b16 %v377
        %v420 = vunpack.c.h.b16 %v377
        %v421 = vunpack.c.l.b16 %v378
        %v422 = vunpack.c.h.b16 %v378
        %v423 = vunpack.c.l.b16 %v379
        %v424 = vunpack.c.h.b16 %v379
        %v425 = vunpack.c.l.b16 %v380
        %v426 = vunpack.c.h.b16 %v380
        %v427 = vunpack.c.l.b16 %v381
        %v428 = vunpack.c.h.b16 %v381
        %v429 = vunpack.c.l.b16 %v382
        %v430 = vunpack.c.h.b16 %v382
        %v431 = vpack.c.b16 %v401, %v399
        %v432 = vpack.c.b16 %v402, %v400
        %v433 = vpack.c.b16 %v405, %v403
        %v434 = vpack.c.b16 %v406, %v404
        %v435 = vpack.c.b16 %v409, %v407
        %v436 = vpack.c.b16 %v410, %v408
        %v437 = vpack.c.b16 %v413, %v411
        %v438 = vpack.c.b16 %v414, %v412
        %v439 = vpack.c.b16 %v417, %v415
        %v440 = vpack.c.b16 %v418, %v416
        %v441 = vpack.c.b16 %v421, %v419
        %v442 = vpack.c.b16 %v422, %v420
        %v443 = vpack.c.b16 %v425, %v423
        %v444 = vpack.c.b16 %v426, %v424
        %v445 = vpack.c.b16 %v429, %v427
        %v446 = vpack.c.b16 %v430, %v428
        %463 = vmatprep.subr.bf16.mxu0 %v432
        %464 = vmatpush1.bf16.msra.mxu0 %v431
        %465 = vmatprep.subr.bf16.mxu0 %v434
        %466 = vmatpush1.bf16.msra.mxu0 %v433
        %467 = vmatprep.subr.bf16.mxu0 %v436
        %468 = vmatpush1.bf16.msra.mxu0 %v435
        %469 = vmatprep.subr.bf16.mxu0 %v438
        %470 = vmatpush1.bf16.msra.mxu0 %v437
        %471 = vmatprep.subr.bf16.mxu0 %v440
        %472 = vmatpush1.bf16.msra.mxu0 %v439
        %473 = vmatprep.subr.bf16.mxu0 %v442
        %474 = vmatpush1.bf16.msra.mxu0 %v441
        %475 = vmatprep.subr.bf16.mxu0 %v444
        %476 = vmatpush1.bf16.msra.mxu0 %v443
        %477 = vmatprep.subr.bf16.mxu0 %v446
        %478 = vmatpush1.bf16.msra.mxu0 %v445
        %479 = vmatprep.subr.bf16.mxu0 0
        %480 = vmatpush1.bf16.msra.mxu0 0
        %481 = vmatprep.subr.bf16.mxu0 0
        %482 = vmatpush1.bf16.msra.mxu0 0
        %483 = vmatprep.subr.bf16.mxu0 0
        %484 = vmatpush1.bf16.msra.mxu0 0
        %485 = vmatprep.subr.bf16.mxu0 0
        %486 = vmatpush1.bf16.msra.mxu0 0
        %487 = vmatprep.subr.bf16.mxu0 0
        %488 = vmatpush1.bf16.msra.mxu0 0
        %489 = vmatprep.subr.bf16.mxu0 0
        %490 = vmatpush1.bf16.msra.mxu0 0
        %491 = vmatprep.subr.bf16.mxu0 0
        %492 = vmatpush1.bf16.msra.mxu0 0
        %493 = vmatprep.subr.bf16.mxu0 0
        %494 = vmatpush1.bf16.msra.mxu0 0
        %495 = vmatprep.mubr.bf16.mxu0 0
        %496 = vmatmul.mubr.bf16.gmra.mrb[0].mxu0 %v351
        %v497 = vpop.f32.mrb[0].mxu0
        %v498 = vadd.f32 0.0, %v497
        %v499 = vpop.f32.mrb[0].mxu0
        %v500 = vadd.f32 0.0, %v499
        %v501 = vpop.f32.mrb[0].mxu0
        %v502 = vadd.f32 0.0, %v501
        %v503 = vpop.f32.mrb[0].mxu0
        %v504 = vadd.f32 0.0, %v503
        %505 = vmatprep.mubr.bf16.mxu0 0
        %506 = vmatmul.mubr.bf16.gmra.mrb[0].mxu0 %v352
        %v507 = vpop.f32.mrb[0].mxu0
        %v508 = vadd.f32 0.0, %v507
        %v509 = vpop.f32.mrb[0].mxu0
        %v510 = vadd.f32 0.0, %v509
        %v511 = vpop.f32.mrb[0].mxu0
        %v512 = vadd.f32 0.0, %v511
        %v513 = vpop.f32.mrb[0].mxu0
        %v514 = vadd.f32 0.0, %v513
        %515 = vmatprep.mubr.bf16.mxu0 0
        %516 = vmatmul.mubr.bf16.gmra.mrb[0].mxu0 %v353
        %v517 = vpop.f32.mrb[0].mxu0
        %v518 = vadd.f32 0.0, %v517
        %v519 = vpop.f32.mrb[0].mxu0
        %v520 = vadd.f32 0.0, %v519
        %v521 = vpop.f32.mrb[0].mxu0
        %v522 = vadd.f32 0.0, %v521
        %v523 = vpop.f32.mrb[0].mxu0
        %v524 = vadd.f32 0.0, %v523
        %525 = vmatprep.mubr.bf16.mxu0 0
        %526 = vmatmul.mubr.bf16.gmra.mrb[0].mxu0 %v354
        %v527 = vpop.f32.mrb[0].mxu0
        %v528 = vadd.f32 0.0, %v527
        %v529 = vpop.f32.mrb[0].mxu0
        %v530 = vadd.f32 0.0, %v529
        %v531 = vpop.f32.mrb[0].mxu0
        %v532 = vadd.f32 0.0, %v531
        %v533 = vpop.f32.mrb[0].mxu0
        %v534 = vadd.f32 0.0, %v533
        %535 = vmatprep.mubr.bf16.mxu0 0
        %536 = vmatmul.mubr.bf16.gmra.mrb[0].mxu0 %v355
        %v537 = vpop.f32.mrb[0].mxu0
        %v538 = vadd.f32 0.0, %v537
        %v539 = vpop.f32.mrb[0].mxu0
        %v540 = vadd.f32 0.0, %v539
        %v541 = vpop.f32.mrb[0].mxu0
        %v542 = vadd.f32 0.0, %v541
        %v543 = vpop.f32.mrb[0].mxu0
        %v544 = vadd.f32 0.0, %v543
        %545 = vmatprep.mubr.bf16.mxu0 0
        %546 = vmatmul.mubr.bf16.gmra.mrb[0].mxu0 %v356
        %v547 = vpop.f32.mrb[0].mxu0
        %v548 = vadd.f32 0.0, %v547
        %v549 = vpop.f32.mrb[0].mxu0
        %v550 = vadd.f32 0.0, %v549
        %v551 = vpop.f32.mrb[0].mxu0
        %v552 = vadd.f32 0.0, %v551
        %v553 = vpop.f32.mrb[0].mxu0
        %v554 = vadd.f32 0.0, %v553
        %555 = vmatprep.mubr.bf16.mxu0 0
        %556 = vmatmul.mubr.bf16.gmra.mrb[0].mxu0 %v357
        %v557 = vpop.f32.mrb[0].mxu0
        %v558 = vadd.f32 0.0, %v557
        %v559 = vpop.f32.mrb[0].mxu0
        %v560 = vadd.f32 0.0, %v559
        %v561 = vpop.f32.mrb[0].mxu0
        %v562 = vadd.f32 0.0, %v561
        %v563 = vpop.f32.mrb[0].mxu0
        %v564 = vadd.f32 0.0, %v563
        %565 = vmatprep.mubr.bf16.mxu0 0
        %566 = vmatmul.mubr.bf16.gmra.mrb[0].mxu0 %v358
        %v567 = vpop.f32.mrb[0].mxu0
        %v568 = vadd.f32 0.0, %v567
        %v569 = vpop.f32.mrb[0].mxu0
        %v570 = vadd.f32 0.0, %v569
        %v571 = vpop.f32.mrb[0].mxu0
        %v572 = vadd.f32 0.0, %v571
        %v573 = vpop.f32.mrb[0].mxu0
        %v574 = vadd.f32 0.0, %v573
        %575 = vmatprep.mubr.bf16.mxu0 0
        %576 = vmatmul.mubr.bf16.gmra.mrb[0].mxu0 %v359
        %v577 = vpop.f32.mrb[0].mxu0
        %v578 = vadd.f32 0.0, %v577
        %v579 = vpop.f32.mrb[0].mxu0
        %v580 = vadd.f32 0.0, %v579
        %v581 = vpop.f32.mrb[0].mxu0
        %v582 = vadd.f32 0.0, %v581
        %v583 = vpop.f32.mrb[0].mxu0
        %v584 = vadd.f32 0.0, %v583
        %585 = vmatprep.mubr.bf16.mxu0 0
        %586 = vmatmul.mubr.bf16.gmra.mrb[0].mxu0 %v360
        %v587 = vpop.f32.mrb[0].mxu0
        %v588 = vadd.f32 0.0, %v587
        %v589 = vpop.f32.mrb[0].mxu0
        %v590 = vadd.f32 0.0, %v589
        %v591 = vpop.f32.mrb[0].mxu0
        %v592 = vadd.f32 0.0, %v591
        %v593 = vpop.f32.mrb[0].mxu0
        %v594 = vadd.f32 0.0, %v593
        %595 = vmatprep.mubr.bf16.mxu0 0
        %596 = vmatmul.mubr.bf16.gmra.mrb[0].mxu0 %v361
        %v597 = vpop.f32.mrb[0].mxu0
        %v598 = vadd.f32 0.0, %v597
        %v599 = vpop.f32.mrb[0].mxu0
        %v600 = vadd.f32 0.0, %v599
        %v601 = vpop.f32.mrb[0].mxu0
        %v602 = vadd.f32 0.0, %v601
        %v603 = vpop.f32.mrb[0].mxu0
        %v604 = vadd.f32 0.0, %v603
        %605 = vmatprep.mubr.bf16.mxu0 0
        %606 = vmatmul.mubr.bf16.gmra.mrb[0].mxu0 %v362
        %v607 = vpop.f32.mrb[0].mxu0
        %v608 = vadd.f32 0.0, %v607
        %v609 = vpop.f32.mrb[0].mxu0
        %v610 = vadd.f32 0.0, %v609
        %v611 = vpop.f32.mrb[0].mxu0
        %v612 = vadd.f32 0.0, %v611
        %v613 = vpop.f32.mrb[0].mxu0
        %v614 = vadd.f32 0.0, %v613
        %615 = vmatprep.mubr.bf16.mxu0 0
        %616 = vmatmul.mubr.bf16.gmra.mrb[0].mxu0 %v363
        %v617 = vpop.f32.mrb[0].mxu0
        %v618 = vadd.f32 0.0, %v617
        %v619 = vpop.f32.mrb[0].mxu0
        %v620 = vadd.f32 0.0, %v619
        %v621 = vpop.f32.mrb[0].mxu0
        %v622 = vadd.f32 0.0, %v621
        %v623 = vpop.f32.mrb[0].mxu0
        %v624 = vadd.f32 0.0, %v623
        %625 = vmatprep.mubr.bf16.mxu0 0
        %626 = vmatmul.mubr.bf16.gmra.mrb[0].mxu0 %v364
        %v627 = vpop.f32.mrb[0].mxu0
        %v628 = vadd.f32 0.0, %v627
        %v629 = vpop.f32.mrb[0].mxu0
        %v630 = vadd.f32 0.0, %v629
        %v631 = vpop.f32.mrb[0].mxu0
        %v632 = vadd.f32 0.0, %v631
        %v633 = vpop.f32.mrb[0].mxu0
        %v634 = vadd.f32 0.0, %v633
        %635 = vmatprep.mubr.bf16.mxu0 0
        %636 = vmatmul.mubr.bf16.gmra.mrb[0].mxu0 %v365
        %v637 = vpop.f32.mrb[0].mxu0
        %v638 = vadd.f32 0.0, %v637
        %v639 = vpop.f32.mrb[0].mxu0
        %v640 = vadd.f32 0.0, %v639
        %v641 = vpop.f32.mrb[0].mxu0
        %v642 = vadd.f32 0.0, %v641
        %v643 = vpop.f32.mrb[0].mxu0
        %v644 = vadd.f32 0.0, %v643
        %645 = vmatprep.mubr.bf16.mxu0 0
        %646 = vmatmul.mubr.bf16.gmra.mrb[0].mxu0 %v366
        %v647 = vpop.f32.mrb[0].mxu0
        %v648 = vadd.f32 0.0, %v647
        %v649 = vpop.f32.mrb[0].mxu0
        %v650 = vadd.f32 0.0, %v649
        %v651 = vpop.f32.mrb[0].mxu0
        %v652 = vadd.f32 0.0, %v651
        %v653 = vpop.f32.mrb[0].mxu0
        %v654 = vadd.f32 0.0, %v653
        %655 = vdwg.mxu0
        %v656 = vpack.c.bf16 %v502, %v498
        %v657 = vpack.c.bf16 %v504, %v500
        %v658 = vpack.c.bf16 %v512, %v508
        %v659 = vpack.c.bf16 %v514, %v510
        %v660 = vpack.c.bf16 %v522, %v518
        %v661 = vpack.c.bf16 %v524, %v520
        %v662 = vpack.c.bf16 %v532, %v528
        %v663 = vpack.c.bf16 %v534, %v530
        %v664 = vpack.c.bf16 %v542, %v538
        %v665 = vpack.c.bf16 %v544, %v540
        %v666 = vpack.c.bf16 %v552, %v548
        %v667 = vpack.c.bf16 %v554, %v550
        %v668 = vpack.c.bf16 %v562, %v558
        %v669 = vpack.c.bf16 %v564, %v560
        %v670 = vpack.c.bf16 %v572, %v568
        %v671 = vpack.c.bf16 %v574, %v570
        %v672 = vpack.c.bf16 %v582, %v578
        %v673 = vpack.c.bf16 %v584, %v580
        %v674 = vpack.c.bf16 %v592, %v588
        %v675 = vpack.c.bf16 %v594, %v590
        %v676 = vpack.c.bf16 %v602, %v598
        %v677 = vpack.c.bf16 %v604, %v600
        %v678 = vpack.c.bf16 %v612, %v608
        %v679 = vpack.c.bf16 %v614, %v610
        %v680 = vpack.c.bf16 %v622, %v618
        %v681 = vpack.c.bf16 %v624, %v620
        %v682 = vpack.c.bf16 %v632, %v628
        %v683 = vpack.c.bf16 %v634, %v630
        %v684 = vpack.c.bf16 %v642, %v638
        %v685 = vpack.c.bf16 %v644, %v640
        %v686 = vpack.c.bf16 %v652, %v648
        %v687 = vpack.c.bf16 %v654, %v650
        %v688 = vld [vmem:[#allocation6] sm:$0xf]
        %v689 = vld [vmem:[#allocation6 + $0x4] sm:$0xf]
        %v690 = vld [vmem:[#allocation6 + $0x8] sm:$0xf]
        %v691 = vld [vmem:[#allocation6 + $0xc] sm:$0xf]
        %v692 = vld [vmem:[#allocation6 + $0x10] sm:$0xf]
        %v693 = vld [vmem:[#allocation6 + $0x14] sm:$0xf]
        %v694 = vld [vmem:[#allocation6 + $0x18] sm:$0xf]
        %v695 = vld [vmem:[#allocation6 + $0x1c] sm:$0xf]
        %v696 = vld [vmem:[#allocation6 + $0x20] sm:$0xf]
        %v697 = vld [vmem:[#allocation6 + $0x24] sm:$0xf]
        %v698 = vld [vmem:[#allocation6 + $0x28] sm:$0xf]
        %v699 = vld [vmem:[#allocation6 + $0x2c] sm:$0xf]
        %v700 = vld [vmem:[#allocation6 + $0x30] sm:$0xf]
        %v701 = vld [vmem:[#allocation6 + $0x34] sm:$0xf]
        %v702 = vld [vmem:[#allocation6 + $0x38] sm:$0xf]
        %v703 = vld [vmem:[#allocation6 + $0x3c] sm:$0xf]
        %v704 = vld [vmem:[#allocation6 + $0x40] sm:$0xf]
        %v705 = vld [vmem:[#allocation6 + $0x44] sm:$0xf]
        %v706 = vld [vmem:[#allocation6 + $0x48] sm:$0xf]
        %v707 = vld [vmem:[#allocation6 + $0x4c] sm:$0xf]
        %v708 = vld [vmem:[#allocation6 + $0x50] sm:$0xf]
        %v709 = vld [vmem:[#allocation6 + $0x54] sm:$0xf]
        %v710 = vld [vmem:[#allocation6 + $0x58] sm:$0xf]
        %v711 = vld [vmem:[#allocation6 + $0x5c] sm:$0xf]
        %v712 = vld [vmem:[#allocation6 + $0x60] sm:$0xf]
        %v713 = vld [vmem:[#allocation6 + $0x64] sm:$0xf]
        %v714 = vld [vmem:[#allocation6 + $0x68] sm:$0xf]
        %v715 = vld [vmem:[#allocation6 + $0x6c] sm:$0xf]
        %v716 = vld [vmem:[#allocation6 + $0x70] sm:$0xf]
        %v717 = vld [vmem:[#allocation6 + $0x74] sm:$0xf]
        %v718 = vld [vmem:[#allocation6 + $0x78] sm:$0xf]
        %v719 = vld [vmem:[#allocation6 + $0x7c] sm:$0xf]
        %v720 = vld [vmem:[#allocation4 + $0x8] sm:$0xff]
        %v721 = vld [vmem:[#allocation4 + $0x2c] sm:$0xff]
        %v722 = vld [vmem:[#allocation4 + $0x50] sm:$0xff]
        %v723 = vld [vmem:[#allocation4 + $0x74] sm:$0xff]
        %v724 = vld [vmem:[#allocation4 + $0x98] sm:$0xff]
        %v725 = vld [vmem:[#allocation4 + $0xbc] sm:$0xff]
        %v726 = vld [vmem:[#allocation4 + $0xe0] sm:$0xff]
        %v727 = vld [vmem:[#allocation4 + $0x104] sm:$0xff]
        %v728 = vld [vmem:[#allocation4 + $0x128] sm:$0xff]
        %v729 = vld [vmem:[#allocation4 + $0x14c] sm:$0xff]
        %v730 = vld [vmem:[#allocation4 + $0x170] sm:$0xff]
        %v731 = vld [vmem:[#allocation4 + $0x194] sm:$0xff]
        %v732 = vld [vmem:[#allocation4 + $0x1b8] sm:$0xff]
        %v733 = vld [vmem:[#allocation4 + $0x1dc] sm:$0xff]
        %v734 = vld [vmem:[#allocation4 + $0x200] sm:$0xff]
        %v735 = vld [vmem:[#allocation4 + $0x224] sm:$0xff]
        %v752 = vunpack.c.l.b16 %v720
        %v753 = vunpack.c.h.b16 %v720
        %v754 = vunpack.c.l.b16 %v721
        %v755 = vunpack.c.h.b16 %v721
        %v756 = vunpack.c.l.b16 %v722
        %v757 = vunpack.c.h.b16 %v722
        %v758 = vunpack.c.l.b16 %v723
        %v759 = vunpack.c.h.b16 %v723
        %v760 = vunpack.c.l.b16 %v724
        %v761 = vunpack.c.h.b16 %v724
        %v762 = vunpack.c.l.b16 %v725
        %v763 = vunpack.c.h.b16 %v725
        %v764 = vunpack.c.l.b16 %v726
        %v765 = vunpack.c.h.b16 %v726
        %v766 = vunpack.c.l.b16 %v727
        %v767 = vunpack.c.h.b16 %v727
        %v768 = vunpack.c.l.b16 %v728
        %v769 = vunpack.c.h.b16 %v728
        %v770 = vunpack.c.l.b16 %v729
        %v771 = vunpack.c.h.b16 %v729
        %v772 = vunpack.c.l.b16 %v730
        %v773 = vunpack.c.h.b16 %v730
        %v774 = vunpack.c.l.b16 %v731
        %v775 = vunpack.c.h.b16 %v731
        %v776 = vunpack.c.l.b16 %v732
        %v777 = vunpack.c.h.b16 %v732
        %v778 = vunpack.c.l.b16 %v733
        %v779 = vunpack.c.h.b16 %v733
        %v780 = vunpack.c.l.b16 %v734
        %v781 = vunpack.c.h.b16 %v734
        %v782 = vunpack.c.l.b16 %v735
        %v783 = vunpack.c.h.b16 %v735
        %v784 = vpack.c.b16 %v754, %v752
        %v785 = vpack.c.b16 %v755, %v753
        %v786 = vpack.c.b16 %v758, %v756
        %v787 = vpack.c.b16 %v759, %v757
        %v788 = vpack.c.b16 %v762, %v760
        %v789 = vpack.c.b16 %v763, %v761
        %v790 = vpack.c.b16 %v766, %v764
        %v791 = vpack.c.b16 %v767, %v765
        %v792 = vpack.c.b16 %v770, %v768
        %v793 = vpack.c.b16 %v771, %v769
        %v794 = vpack.c.b16 %v774, %v772
        %v795 = vpack.c.b16 %v775, %v773
        %v796 = vpack.c.b16 %v778, %v776
        %v797 = vpack.c.b16 %v779, %v777
        %v798 = vpack.c.b16 %v782, %v780
        %v799 = vpack.c.b16 %v783, %v781
        %816 = vmatprep.subr.bf16.mxu0 %v785
        %817 = vmatpush1.bf16.msra.mxu0 %v784
        %818 = vmatprep.subr.bf16.mxu0 %v787
        %819 = vmatpush1.bf16.msra.mxu0 %v786
        %820 = vmatprep.subr.bf16.mxu0 %v789
        %821 = vmatpush1.bf16.msra.mxu0 %v788
        %822 = vmatprep.subr.bf16.mxu0 %v791
        %823 = vmatpush1.bf16.msra.mxu0 %v790
        %824 = vmatprep.subr.bf16.mxu0 %v793
        %825 = vmatpush1.bf16.msra.mxu0 %v792
        %826 = vmatprep.subr.bf16.mxu0 %v795
        %827 = vmatpush1.bf16.msra.mxu0 %v794
        %828 = vmatprep.subr.bf16.mxu0 %v797
        %829 = vmatpush1.bf16.msra.mxu0 %v796
        %830 = vmatprep.subr.bf16.mxu0 %v799
        %831 = vmatpush1.bf16.msra.mxu0 %v798
        %832 = vmatprep.subr.bf16.mxu0 0
        %833 = vmatpush1.bf16.msra.mxu0 0
        %834 = vmatprep.subr.bf16.mxu0 0
        %835 = vmatpush1.bf16.msra.mxu0 0
        %836 = vmatprep.subr.bf16.mxu0 0
        %837 = vmatpush1.bf16.msra.mxu0 0
        %838 = vmatprep.subr.bf16.mxu0 0
        %839 = vmatpush1.bf16.msra.mxu0 0
        %840 = vmatprep.subr.bf16.mxu0 0
        %841 = vmatpush1.bf16.msra.mxu0 0
        %842 = vmatprep.subr.bf16.mxu0 0
        %843 = vmatpush1.bf16.msra.mxu0 0
        %844 = vmatprep.subr.bf16.mxu0 0
        %845 = vmatpush1.bf16.msra.mxu0 0
        %846 = vmatprep.subr.bf16.mxu0 0
        %847 = vmatpush1.bf16.msra.mxu0 0
        %848 = vmatprep.mubr.bf16.mxu0 0
        %849 = vmatmul.mubr.bf16.gmra.mrb[0].mxu0 %v351
        %v850 = vpop.f32.mrb[0].mxu0
        %v851 = vadd.f32 0.0, %v850
        %v852 = vpop.f32.mrb[0].mxu0
        %v853 = vadd.f32 0.0, %v852
        %v854 = vpop.f32.mrb[0].mxu0
        %v855 = vadd.f32 0.0, %v854
        %v856 = vpop.f32.mrb[0].mxu0
        %v857 = vadd.f32 0.0, %v856
        %858 = vmatprep.mubr.bf16.mxu0 0
        %859 = vmatmul.mubr.bf16.gmra.mrb[0].mxu0 %v352
        %v860 = vpop.f32.mrb[0].mxu0
        %v861 = vadd.f32 0.0, %v860
        %v862 = vpop.f32.mrb[0].mxu0
        %v863 = vadd.f32 0.0, %v862
        %v864 = vpop.f32.mrb[0].mxu0
        %v865 = vadd.f32 0.0, %v864
        %v866 = vpop.f32.mrb[0].mxu0
        %v867 = vadd.f32 0.0, %v866
        %868 = vmatprep.mubr.bf16.mxu0 0
        %869 = vmatmul.mubr.bf16.gmra.mrb[0].mxu0 %v353
        %v870 = vpop.f32.mrb[0].mxu0
        %v871 = vadd.f32 0.0, %v870
        %v872 = vpop.f32.mrb[0].mxu0
        %v873 = vadd.f32 0.0, %v872
        %v874 = vpop.f32.mrb[0].mxu0
        %v875 = vadd.f32 0.0, %v874
        %v876 = vpop.f32.mrb[0].mxu0
        %v877 = vadd.f32 0.0, %v876
        %878 = vmatprep.mubr.bf16.mxu0 0
        %879 = vmatmul.mubr.bf16.gmra.mrb[0].mxu0 %v354
        %v880 = vpop.f32.mrb[0].mxu0
        %v881 = vadd.f32 0.0, %v880
        %v882 = vpop.f32.mrb[0].mxu0
        %v883 = vadd.f32 0.0, %v882
        %v884 = vpop.f32.mrb[0].mxu0
        %v885 = vadd.f32 0.0, %v884
        %v886 = vpop.f32.mrb[0].mxu0
        %v887 = vadd.f32 0.0, %v886
        %888 = vmatprep.mubr.bf16.mxu0 0
        %889 = vmatmul.mubr.bf16.gmra.mrb[0].mxu0 %v355
        %v890 = vpop.f32.mrb[0].mxu0
        %v891 = vadd.f32 0.0, %v890
        %v892 = vpop.f32.mrb[0].mxu0
        %v893 = vadd.f32 0.0, %v892
        %v894 = vpop.f32.mrb[0].mxu0
        %v895 = vadd.f32 0.0, %v894
        %v896 = vpop.f32.mrb[0].mxu0
        %v897 = vadd.f32 0.0, %v896
        %898 = vmatprep.mubr.bf16.mxu0 0
        %899 = vmatmul.mubr.bf16.gmra.mrb[0].mxu0 %v356
        %v900 = vpop.f32.mrb[0].mxu0
        %v901 = vadd.f32 0.0, %v900
        %v902 = vpop.f32.mrb[0].mxu0
        %v903 = vadd.f32 0.0, %v902
        %v904 = vpop.f32.mrb[0].mxu0
        %v905 = vadd.f32 0.0, %v904
        %v906 = vpop.f32.mrb[0].mxu0
        %v907 = vadd.f32 0.0, %v906
        %908 = vmatprep.mubr.bf16.mxu0 0
        %909 = vmatmul.mubr.bf16.gmra.mrb[0].mxu0 %v357
        %v910 = vpop.f32.mrb[0].mxu0
        %v911 = vadd.f32 0.0, %v910
        %v912 = vpop.f32.mrb[0].mxu0
        %v913 = vadd.f32 0.0, %v912
        %v914 = vpop.f32.mrb[0].mxu0
        %v915 = vadd.f32 0.0, %v914
        %v916 = vpop.f32.mrb[0].mxu0
        %v917 = vadd.f32 0.0, %v916
        %918 = vmatprep.mubr.bf16.mxu0 0
        %919 = vmatmul.mubr.bf16.gmra.mrb[0].mxu0 %v358
        %v920 = vpop.f32.mrb[0].mxu0
        %v921 = vadd.f32 0.0, %v920
        %v922 = vpop.f32.mrb[0].mxu0
        %v923 = vadd.f32 0.0, %v922
        %v924 = vpop.f32.mrb[0].mxu0
        %v925 = vadd.f32 0.0, %v924
        %v926 = vpop.f32.mrb[0].mxu0
        %v927 = vadd.f32 0.0, %v926
        %928 = vmatprep.mubr.bf16.mxu0 0
        %929 = vmatmul.mubr.bf16.gmra.mrb[0].mxu0 %v359
        %v930 = vpop.f32.mrb[0].mxu0
        %v931 = vadd.f32 0.0, %v930
        %v932 = vpop.f32.mrb[0].mxu0
        %v933 = vadd.f32 0.0, %v932
        %v934 = vpop.f32.mrb[0].mxu0
        %v935 = vadd.f32 0.0, %v934
        %v936 = vpop.f32.mrb[0].mxu0
        %v937 = vadd.f32 0.0, %v936
        %938 = vmatprep.mubr.bf16.mxu0 0
        %939 = vmatmul.mubr.bf16.gmra.mrb[0].mxu0 %v360
        %v940 = vpop.f32.mrb[0].mxu0
        %v941 = vadd.f32 0.0, %v940
        %v942 = vpop.f32.mrb[0].mxu0
        %v943 = vadd.f32 0.0, %v942
        %v944 = vpop.f32.mrb[0].mxu0
        %v945 = vadd.f32 0.0, %v944
        %v946 = vpop.f32.mrb[0].mxu0
        %v947 = vadd.f32 0.0, %v946
        %948 = vmatprep.mubr.bf16.mxu0 0
        %949 = vmatmul.mubr.bf16.gmra.mrb[0].mxu0 %v361
        %v950 = vpop.f32.mrb[0].mxu0
        %v951 = vadd.f32 0.0, %v950
        %v952 = vpop.f32.mrb[0].mxu0
        %v953 = vadd.f32 0.0, %v952
        %v954 = vpop.f32.mrb[0].mxu0
        %v955 = vadd.f32 0.0, %v954
        %v956 = vpop.f32.mrb[0].mxu0
        %v957 = vadd.f32 0.0, %v956
        %958 = vmatprep.mubr.bf16.mxu0 0
        %959 = vmatmul.mubr.bf16.gmra.mrb[0].mxu0 %v362
        %v960 = vpop.f32.mrb[0].mxu0
        %v961 = vadd.f32 0.0, %v960
        %v962 = vpop.f32.mrb[0].mxu0
        %v963 = vadd.f32 0.0, %v962
        %v964 = vpop.f32.mrb[0].mxu0
        %v965 = vadd.f32 0.0, %v964
        %v966 = vpop.f32.mrb[0].mxu0
        %v967 = vadd.f32 0.0, %v966
        %968 = vmatprep.mubr.bf16.mxu0 0
        %969 = vmatmul.mubr.bf16.gmra.mrb[0].mxu0 %v363
        %v970 = vpop.f32.mrb[0].mxu0
        %v971 = vadd.f32 0.0, %v970
        %v972 = vpop.f32.mrb[0].mxu0
        %v973 = vadd.f32 0.0, %v972
        %v974 = vpop.f32.mrb[0].mxu0
        %v975 = vadd.f32 0.0, %v974
        %v976 = vpop.f32.mrb[0].mxu0
        %v977 = vadd.f32 0.0, %v976
        %978 = vmatprep.mubr.bf16.mxu0 0
        %979 = vmatmul.mubr.bf16.gmra.mrb[0].mxu0 %v364
        %v980 = vpop.f32.mrb[0].mxu0
        %v981 = vadd.f32 0.0, %v980
        %v982 = vpop.f32.mrb[0].mxu0
        %v983 = vadd.f32 0.0, %v982
        %v984 = vpop.f32.mrb[0].mxu0
        %v985 = vadd.f32 0.0, %v984
        %v986 = vpop.f32.mrb[0].mxu0
        %v987 = vadd.f32 0.0, %v986
        %988 = vmatprep.mubr.bf16.mxu0 0
        %989 = vmatmul.mubr.bf16.gmra.mrb[0].mxu0 %v365
        %v990 = vpop.f32.mrb[0].mxu0
        %v991 = vadd.f32 0.0, %v990
        %v992 = vpop.f32.mrb[0].mxu0
        %v993 = vadd.f32 0.0, %v992
        %v994 = vpop.f32.mrb[0].mxu0
        %v995 = vadd.f32 0.0, %v994
        %v996 = vpop.f32.mrb[0].mxu0
        %v997 = vadd.f32 0.0, %v996
        %998 = vmatprep.mubr.bf16.mxu0 0
        %999 = vmatmul.mubr.bf16.gmra.mrb[0].mxu0 %v366
        %v1000 = vpop.f32.mrb[0].mxu0
        %v1001 = vadd.f32 0.0, %v1000
        %v1002 = vpop.f32.mrb[0].mxu0
        %v1003 = vadd.f32 0.0, %v1002
        %v1004 = vpop.f32.mrb[0].mxu0
        %v1005 = vadd.f32 0.0, %v1004
        %v1006 = vpop.f32.mrb[0].mxu0
        %v1007 = vadd.f32 0.0, %v1006
        %1008 = vdwg.mxu0
        %v1009 = vpack.c.bf16 %v855, %v851
        %v1010 = vpack.c.bf16 %v857, %v853
        %v1011 = vpack.c.bf16 %v865, %v861
        %v1012 = vpack.c.bf16 %v867, %v863
        %v1013 = vpack.c.bf16 %v875, %v871
        %v1014 = vpack.c.bf16 %v877, %v873
        %v1015 = vpack.c.bf16 %v885, %v881
        %v1016 = vpack.c.bf16 %v887, %v883
        %v1017 = vpack.c.bf16 %v895, %v891
        %v1018 = vpack.c.bf16 %v897, %v893
        %v1019 = vpack.c.bf16 %v905, %v901
        %v1020 = vpack.c.bf16 %v907, %v903
        %v1021 = vpack.c.bf16 %v915, %v911
        %v1022 = vpack.c.bf16 %v917, %v913
        %v1023 = vpack.c.bf16 %v925, %v921
        %v1024 = vpack.c.bf16 %v927, %v923
        %v1025 = vpack.c.bf16 %v935, %v931
        %v1026 = vpack.c.bf16 %v937, %v933
        %v1027 = vpack.c.bf16 %v945, %v941
        %v1028 = vpack.c.bf16 %v947, %v943
        %v1029 = vpack.c.bf16 %v955, %v951
        %v1030 = vpack.c.bf16 %v957, %v953
        %v1031 = vpack.c.bf16 %v965, %v961
        %v1032 = vpack.c.bf16 %v967, %v963
        %v1033 = vpack.c.bf16 %v975, %v971
        %v1034 = vpack.c.bf16 %v977, %v973
        %v1035 = vpack.c.bf16 %v985, %v981
        %v1036 = vpack.c.bf16 %v987, %v983
        %v1037 = vpack.c.bf16 %v995, %v991
        %v1038 = vpack.c.bf16 %v997, %v993
        %v1039 = vpack.c.bf16 %v1005, %v1001
        %v1040 = vpack.c.bf16 %v1007, %v1003
        %v1041 = vld [vmem:[#allocation6 + $0x80] sm:$0xf]
        %v1042 = vld [vmem:[#allocation6 + $0x84] sm:$0xf]
        %v1043 = vld [vmem:[#allocation6 + $0x88] sm:$0xf]
        %v1044 = vld [vmem:[#allocation6 + $0x8c] sm:$0xf]
        %v1045 = vld [vmem:[#allocation6 + $0x90] sm:$0xf]
        %v1046 = vld [vmem:[#allocation6 + $0x94] sm:$0xf]
        %v1047 = vld [vmem:[#allocation6 + $0x98] sm:$0xf]
        %v1048 = vld [vmem:[#allocation6 + $0x9c] sm:$0xf]
        %v1049 = vld [vmem:[#allocation6 + $0xa0] sm:$0xf]
        %v1050 = vld [vmem:[#allocation6 + $0xa4] sm:$0xf]
        %v1051 = vld [vmem:[#allocation6 + $0xa8] sm:$0xf]
        %v1052 = vld [vmem:[#allocation6 + $0xac] sm:$0xf]
        %v1053 = vld [vmem:[#allocation6 + $0xb0] sm:$0xf]
        %v1054 = vld [vmem:[#allocation6 + $0xb4] sm:$0xf]
        %v1055 = vld [vmem:[#allocation6 + $0xb8] sm:$0xf]
        %v1056 = vld [vmem:[#allocation6 + $0xbc] sm:$0xf]
        %v1057 = vld [vmem:[#allocation6 + $0xc0] sm:$0xf]
        %v1058 = vld [vmem:[#allocation6 + $0xc4] sm:$0xf]
        %v1059 = vld [vmem:[#allocation6 + $0xc8] sm:$0xf]
        %v1060 = vld [vmem:[#allocation6 + $0xcc] sm:$0xf]
        %v1061 = vld [vmem:[#allocation6 + $0xd0] sm:$0xf]
        %v1062 = vld [vmem:[#allocation6 + $0xd4] sm:$0xf]
        %v1063 = vld [vmem:[#allocation6 + $0xd8] sm:$0xf]
        %v1064 = vld [vmem:[#allocation6 + $0xdc] sm:$0xf]
        %v1065 = vld [vmem:[#allocation6 + $0xe0] sm:$0xf]
        %v1066 = vld [vmem:[#allocation6 + $0xe4] sm:$0xf]
        %v1067 = vld [vmem:[#allocation6 + $0xe8] sm:$0xf]
        %v1068 = vld [vmem:[#allocation6 + $0xec] sm:$0xf]
        %v1069 = vld [vmem:[#allocation6 + $0xf0] sm:$0xf]
        %v1070 = vld [vmem:[#allocation6 + $0xf4] sm:$0xf]
        %v1071 = vld [vmem:[#allocation6 + $0xf8] sm:$0xf]
        %v1072 = vld [vmem:[#allocation6 + $0xfc] sm:$0xf]
        %v1105 = vunpack.c.l.b16 %v1041
        %v1106 = vunpack.c.l.b16 %v1042
        %v1107 = vunpack.c.l.b16 %v1043
        %v1108 = vunpack.c.l.b16 %v1044
        %v1109 = vunpack.c.l.b16 %v1045
        %v1110 = vunpack.c.l.b16 %v1046
        %v1111 = vunpack.c.l.b16 %v1047
        %v1112 = vunpack.c.l.b16 %v1048
        %v1113 = vunpack.c.l.b16 %v1049
        %v1114 = vunpack.c.l.b16 %v1050
        %v1115 = vunpack.c.l.b16 %v1051
        %v1116 = vunpack.c.l.b16 %v1052
        %v1117 = vunpack.c.l.b16 %v1053
        %v1118 = vunpack.c.l.b16 %v1054
        %v1119 = vunpack.c.l.b16 %v1055
        %v1120 = vunpack.c.l.b16 %v1056
        %v1121 = vunpack.c.l.b16 %v1057
        %v1122 = vunpack.c.l.b16 %v1058
        %v1123 = vunpack.c.l.b16 %v1059
        %v1124 = vunpack.c.l.b16 %v1060
        %v1125 = vunpack.c.l.b16 %v1061
        %v1126 = vunpack.c.l.b16 %v1062
        %v1127 = vunpack.c.l.b16 %v1063
        %v1128 = vunpack.c.l.b16 %v1064
        %v1129 = vunpack.c.l.b16 %v1065
        %v1130 = vunpack.c.l.b16 %v1066
        %v1131 = vunpack.c.l.b16 %v1067
        %v1132 = vunpack.c.l.b16 %v1068
        %v1133 = vunpack.c.l.b16 %v1069
        %v1134 = vunpack.c.l.b16 %v1070
        %v1135 = vunpack.c.l.b16 %v1071
        %v1136 = vunpack.c.l.b16 %v1072
        %v1137 = vpack.c.b16 %v1106, %v1105
        %v1138 = vpack.c.b16 %v1108, %v1107
        %v1139 = vpack.c.b16 %v1110, %v1109
        %v1140 = vpack.c.b16 %v1112, %v1111
        %v1141 = vpack.c.b16 %v1114, %v1113
        %v1142 = vpack.c.b16 %v1116, %v1115
        %v1143 = vpack.c.b16 %v1118, %v1117
        %v1144 = vpack.c.b16 %v1120, %v1119
        %v1145 = vpack.c.b16 %v1122, %v1121
        %v1146 = vpack.c.b16 %v1124, %v1123
        %v1147 = vpack.c.b16 %v1126, %v1125
        %v1148 = vpack.c.b16 %v1128, %v1127
        %v1149 = vpack.c.b16 %v1130, %v1129
        %v1150 = vpack.c.b16 %v1132, %v1131
        %v1151 = vpack.c.b16 %v1134, %v1133
        %v1152 = vpack.c.b16 %v1136, %v1135
        %1169 = vmatprep.subr.bf16.mxu0 0
        %1170 = vmatpush1.bf16.msra.mxu0 %v1137
        %1171 = vmatprep.subr.bf16.mxu0 0
        %1172 = vmatpush1.bf16.msra.mxu0 %v1138
        %1173 = vmatprep.subr.bf16.mxu0 0
        %1174 = vmatpush1.bf16.msra.mxu0 %v1139
        %1175 = vmatprep.subr.bf16.mxu0 0
        %1176 = vmatpush1.bf16.msra.mxu0 %v1140
        %1177 = vmatprep.subr.bf16.mxu0 0
        %1178 = vmatpush1.bf16.msra.mxu0 %v1141
        %1179 = vmatprep.subr.bf16.mxu0 0
        %1180 = vmatpush1.bf16.msra.mxu0 %v1142
        %1181 = vmatprep.subr.bf16.mxu0 0
        %1182 = vmatpush1.bf16.msra.mxu0 %v1143
        %1183 = vmatprep.subr.bf16.mxu0 0
        %1184 = vmatpush1.bf16.msra.mxu0 %v1144
        %1185 = vmatprep.subr.bf16.mxu0 0
        %1186 = vmatpush1.bf16.msra.mxu0 %v1145
        %1187 = vmatprep.subr.bf16.mxu0 0
        %1188 = vmatpush1.bf16.msra.mxu0 %v1146
        %1189 = vmatprep.subr.bf16.mxu0 0
        %1190 = vmatpush1.bf16.msra.mxu0 %v1147
        %1191 = vmatprep.subr.bf16.mxu0 0
        %1192 = vmatpush1.bf16.msra.mxu0 %v1148
        %1193 = vmatprep.subr.bf16.mxu0 0
        %1194 = vmatpush1.bf16.msra.mxu0 %v1149
        %1195 = vmatprep.subr.bf16.mxu0 0
        %1196 = vmatpush1.bf16.msra.mxu0 %v1150
        %1197 = vmatprep.subr.bf16.mxu0 0
        %1198 = vmatpush1.bf16.msra.mxu0 %v1151
        %1199 = vmatprep.subr.bf16.mxu0 0
        %1200 = vmatpush1.bf16.msra.mxu0 %v1152
        %1201 = vmatprep.mubr.bf16.mxu0 %v1010
        %1202 = vmatmul.mubr.bf16.gmra.mrb[0].mxu0 %v1009
        %v1203 = vpop.f32.mrb[0].mxu0
        %v1204 = vadd.f32 0.0, %v1203
        %v1205 = vpop.f32.mrb[0].mxu0
        %v1206 = vpop.f32.mrb[0].mxu0
        %v1207 = vadd.f32 0.0, %v1206
        %v1208 = vpop.f32.mrb[0].mxu0
        %1209 = vmatprep.mubr.bf16.mxu0 %v1012
        %1210 = vmatmul.mubr.bf16.gmra.mrb[0].mxu0 %v1011
        %v1211 = vpop.f32.mrb[0].mxu0
        %v1212 = vadd.f32 0.0, %v1211
        %v1213 = vpop.f32.mrb[0].mxu0
        %v1214 = vpop.f32.mrb[0].mxu0
        %v1215 = vadd.f32 0.0, %v1214
        %v1216 = vpop.f32.mrb[0].mxu0
        %1217 = vmatprep.mubr.bf16.mxu0 %v1014
        %1218 = vmatmul.mubr.bf16.gmra.mrb[0].mxu0 %v1013
        %v1219 = vpop.f32.mrb[0].mxu0
        %v1220 = vadd.f32 0.0, %v1219
        %v1221 = vpop.f32.mrb[0].mxu0
        %v1222 = vpop.f32.mrb[0].mxu0
        %v1223 = vadd.f32 0.0, %v1222
        %v1224 = vpop.f32.mrb[0].mxu0
        %1225 = vmatprep.mubr.bf16.mxu0 %v1016
        %1226 = vmatmul.mubr.bf16.gmra.mrb[0].mxu0 %v1015
        %v1227 = vpop.f32.mrb[0].mxu0
        %v1228 = vadd.f32 0.0, %v1227
        %v1229 = vpop.f32.mrb[0].mxu0
        %v1230 = vpop.f32.mrb[0].mxu0
        %v1231 = vadd.f32 0.0, %v1230
        %v1232 = vpop.f32.mrb[0].mxu0
        %1233 = vmatprep.mubr.bf16.mxu0 %v1018
        %1234 = vmatmul.mubr.bf16.gmra.mrb[0].mxu0 %v1017
        %v1235 = vpop.f32.mrb[0].mxu0
        %v1236 = vadd.f32 0.0, %v1235
        %v1237 = vpop.f32.mrb[0].mxu0
        %v1238 = vpop.f32.mrb[0].mxu0
        %v1239 = vadd.f32 0.0, %v1238
        %v1240 = vpop.f32.mrb[0].mxu0
        %1241 = vmatprep.mubr.bf16.mxu0 %v1020
        %1242 = vmatmul.mubr.bf16.gmra.mrb[0].mxu0 %v1019
        %v1243 = vpop.f32.mrb[0].mxu0
        %v1244 = vadd.f32 0.0, %v1243
        %v1245 = vpop.f32.mrb[0].mxu0
        %v1246 = vpop.f32.mrb[0].mxu0
        %v1247 = vadd.f32 0.0, %v1246
        %v1248 = vpop.f32.mrb[0].mxu0
        %1249 = vmatprep.mubr.bf16.mxu0 %v1022
        %1250 = vmatmul.mubr.bf16.gmra.mrb[0].mxu0 %v1021
        %v1251 = vpop.f32.mrb[0].mxu0
        %v1252 = vadd.f32 0.0, %v1251
        %v1253 = vpop.f32.mrb[0].mxu0
        %v1254 = vpop.f32.mrb[0].mxu0
        %v1255 = vadd.f32 0.0, %v1254
        %v1256 = vpop.f32.mrb[0].mxu0
        %1257 = vmatprep.mubr.bf16.mxu0 %v1024
        %1258 = vmatmul.mubr.bf16.gmra.mrb[0].mxu0 %v1023
        %v1259 = vpop.f32.mrb[0].mxu0
        %v1260 = vadd.f32 0.0, %v1259
        %v1261 = vpop.f32.mrb[0].mxu0
        %v1262 = vpop.f32.mrb[0].mxu0
        %v1263 = vadd.f32 0.0, %v1262
        %v1264 = vpop.f32.mrb[0].mxu0
        %1265 = vmatprep.mubr.bf16.mxu0 %v1026
        %1266 = vmatmul.mubr.bf16.gmra.mrb[0].mxu0 %v1025
        %v1267 = vpop.f32.mrb[0].mxu0
        %v1268 = vadd.f32 0.0, %v1267
        %v1269 = vpop.f32.mrb[0].mxu0
        %v1270 = vpop.f32.mrb[0].mxu0
        %v1271 = vadd.f32 0.0, %v1270
        %v1272 = vpop.f32.mrb[0].mxu0
        %1273 = vmatprep.mubr.bf16.mxu0 %v1028
        %1274 = vmatmul.mubr.bf16.gmra.mrb[0].mxu0 %v1027
        %v1275 = vpop.f32.mrb[0].mxu0
        %v1276 = vadd.f32 0.0, %v1275
        %v1277 = vpop.f32.mrb[0].mxu0
        %v1278 = vpop.f32.mrb[0].mxu0
        %v1279 = vadd.f32 0.0, %v1278
        %v1280 = vpop.f32.mrb[0].mxu0
        %1281 = vmatprep.mubr.bf16.mxu0 %v1030
        %1282 = vmatmul.mubr.bf16.gmra.mrb[0].mxu0 %v1029
        %v1283 = vpop.f32.mrb[0].mxu0
        %v1284 = vadd.f32 0.0, %v1283
        %v1285 = vpop.f32.mrb[0].mxu0
        %v1286 = vpop.f32.mrb[0].mxu0
        %v1287 = vadd.f32 0.0, %v1286
        %v1288 = vpop.f32.mrb[0].mxu0
        %1289 = vmatprep.mubr.bf16.mxu0 %v1032
        %1290 = vmatmul.mubr.bf16.gmra.mrb[0].mxu0 %v1031
        %v1291 = vpop.f32.mrb[0].mxu0
        %v1292 = vadd.f32 0.0, %v1291
        %v1293 = vpop.f32.mrb[0].mxu0
        %v1294 = vpop.f32.mrb[0].mxu0
        %v1295 = vadd.f32 0.0, %v1294
        %v1296 = vpop.f32.mrb[0].mxu0
        %1297 = vmatprep.mubr.bf16.mxu0 %v1034
        %1298 = vmatmul.mubr.bf16.gmra.mrb[0].mxu0 %v1033
        %v1299 = vpop.f32.mrb[0].mxu0
        %v1300 = vadd.f32 0.0, %v1299
        %v1301 = vpop.f32.mrb[0].mxu0
        %v1302 = vpop.f32.mrb[0].mxu0
        %v1303 = vadd.f32 0.0, %v1302
        %v1304 = vpop.f32.mrb[0].mxu0
        %1305 = vmatprep.mubr.bf16.mxu0 %v1036
        %1306 = vmatmul.mubr.bf16.gmra.mrb[0].mxu0 %v1035
        %v1307 = vpop.f32.mrb[0].mxu0
        %v1308 = vadd.f32 0.0, %v1307
        %v1309 = vpop.f32.mrb[0].mxu0
        %v1310 = vpop.f32.mrb[0].mxu0
        %v1311 = vadd.f32 0.0, %v1310
        %v1312 = vpop.f32.mrb[0].mxu0
        %1313 = vmatprep.mubr.bf16.mxu0 %v1038
        %1314 = vmatmul.mubr.bf16.gmra.mrb[0].mxu0 %v1037
        %v1315 = vpop.f32.mrb[0].mxu0
        %v1316 = vadd.f32 0.0, %v1315
        %v1317 = vpop.f32.mrb[0].mxu0
        %v1318 = vpop.f32.mrb[0].mxu0
        %v1319 = vadd.f32 0.0, %v1318
        %v1320 = vpop.f32.mrb[0].mxu0
        %1321 = vmatprep.mubr.bf16.mxu0 %v1040
        %1322 = vmatmul.mubr.bf16.gmra.mrb[0].mxu0 %v1039
        %v1323 = vpop.f32.mrb[0].mxu0
        %v1324 = vadd.f32 0.0, %v1323
        %v1325 = vpop.f32.mrb[0].mxu0
        %v1326 = vpop.f32.mrb[0].mxu0
        %v1327 = vadd.f32 0.0, %v1326
        %v1328 = vpop.f32.mrb[0].mxu0
        %1329 = vdwg.mxu0
        %v1362 = vunpack.c.l.b16 %v688
        %v1363 = vunpack.c.l.b16 %v689
        %v1364 = vunpack.c.l.b16 %v690
        %v1365 = vunpack.c.l.b16 %v691
        %v1366 = vunpack.c.l.b16 %v692
        %v1367 = vunpack.c.l.b16 %v693
        %v1368 = vunpack.c.l.b16 %v694
        %v1369 = vunpack.c.l.b16 %v695
        %v1370 = vunpack.c.l.b16 %v696
        %v1371 = vunpack.c.l.b16 %v697
        %v1372 = vunpack.c.l.b16 %v698
        %v1373 = vunpack.c.l.b16 %v699
        %v1374 = vunpack.c.l.b16 %v700
        %v1375 = vunpack.c.l.b16 %v701
        %v1376 = vunpack.c.l.b16 %v702
        %v1377 = vunpack.c.l.b16 %v703
        %v1378 = vunpack.c.l.b16 %v704
        %v1379 = vunpack.c.l.b16 %v705
        %v1380 = vunpack.c.l.b16 %v706
        %v1381 = vunpack.c.l.b16 %v707
        %v1382 = vunpack.c.l.b16 %v708
        %v1383 = vunpack.c.l.b16 %v709
        %v1384 = vunpack.c.l.b16 %v710
        %v1385 = vunpack.c.l.b16 %v711
        %v1386 = vunpack.c.l.b16 %v712
        %v1387 = vunpack.c.l.b16 %v713
        %v1388 = vunpack.c.l.b16 %v714
        %v1389 = vunpack.c.l.b16 %v715
        %v1390 = vunpack.c.l.b16 %v716
        %v1391 = vunpack.c.l.b16 %v717
        %v1392 = vunpack.c.l.b16 %v718
        %v1393 = vunpack.c.l.b16 %v719
        %v1394 = vpack.c.b16 %v1363, %v1362
        %v1395 = vpack.c.b16 %v1365, %v1364
        %v1396 = vpack.c.b16 %v1367, %v1366
        %v1397 = vpack.c.b16 %v1369, %v1368
        %v1398 = vpack.c.b16 %v1371, %v1370
        %v1399 = vpack.c.b16 %v1373, %v1372
        %v1400 = vpack.c.b16 %v1375, %v1374
        %v1401 = vpack.c.b16 %v1377, %v1376
        %v1402 = vpack.c.b16 %v1379, %v1378
        %v1403 = vpack.c.b16 %v1381, %v1380
        %v1404 = vpack.c.b16 %v1383, %v1382
        %v1405 = vpack.c.b16 %v1385, %v1384
        %v1406 = vpack.c.b16 %v1387, %v1386
        %v1407 = vpack.c.b16 %v1389, %v1388
        %v1408 = vpack.c.b16 %v1391, %v1390
        %v1409 = vpack.c.b16 %v1393, %v1392
        %1426 = vmatprep.subr.bf16.mxu0 0
        %1427 = vmatpush1.bf16.msra.mxu0 %v1394
        %1428 = vmatprep.subr.bf16.mxu0 0
        %1429 = vmatpush1.bf16.msra.mxu0 %v1395
        %1430 = vmatprep.subr.bf16.mxu0 0
        %1431 = vmatpush1.bf16.msra.mxu0 %v1396
        %1432 = vmatprep.subr.bf16.mxu0 0
        %1433 = vmatpush1.bf16.msra.mxu0 %v1397
        %1434 = vmatprep.subr.bf16.mxu0 0
        %1435 = vmatpush1.bf16.msra.mxu0 %v1398
        %1436 = vmatprep.subr.bf16.mxu0 0
        %1437 = vmatpush1.bf16.msra.mxu0 %v1399
        %1438 = vmatprep.subr.bf16.mxu0 0
        %1439 = vmatpush1.bf16.msra.mxu0 %v1400
        %1440 = vmatprep.subr.bf16.mxu0 0
        %1441 = vmatpush1.bf16.msra.mxu0 %v1401
        %1442 = vmatprep.subr.bf16.mxu0 0
        %1443 = vmatpush1.bf16.msra.mxu0 %v1402
        %1444 = vmatprep.subr.bf16.mxu0 0
        %1445 = vmatpush1.bf16.msra.mxu0 %v1403
        %1446 = vmatprep.subr.bf16.mxu0 0
        %1447 = vmatpush1.bf16.msra.mxu0 %v1404
        %1448 = vmatprep.subr.bf16.mxu0 0
        %1449 = vmatpush1.bf16.msra.mxu0 %v1405
        %1450 = vmatprep.subr.bf16.mxu0 0
        %1451 = vmatpush1.bf16.msra.mxu0 %v1406
        %1452 = vmatprep.subr.bf16.mxu0 0
        %1453 = vmatpush1.bf16.msra.mxu0 %v1407
        %1454 = vmatprep.subr.bf16.mxu0 0
        %1455 = vmatpush1.bf16.msra.mxu0 %v1408
        %1456 = vmatprep.subr.bf16.mxu0 0
        %1457 = vmatpush1.bf16.msra.mxu0 %v1409
        %1458 = vmatprep.mubr.bf16.mxu0 %v657
        %1459 = vmatmul.mubr.bf16.gmra.mrb[0].mxu0 %v656
        %v1460 = vpop.f32.mrb[0].mxu0
        %v1461 = vadd.f32 %v1204, %v1460
        %v1462 = vpop.f32.mrb[0].mxu0
        %v1463 = vpop.f32.mrb[0].mxu0
        %v1464 = vadd.f32 %v1207, %v1463
        %v1465 = vpop.f32.mrb[0].mxu0
        %1466 = vmatprep.mubr.bf16.mxu0 %v659
        %1467 = vmatmul.mubr.bf16.gmra.mrb[0].mxu0 %v658
        %v1468 = vpop.f32.mrb[0].mxu0
        %v1469 = vadd.f32 %v1212, %v1468
        %v1470 = vpop.f32.mrb[0].mxu0
        %v1471 = vpop.f32.mrb[0].mxu0
        %v1472 = vadd.f32 %v1215, %v1471
        %v1473 = vpop.f32.mrb[0].mxu0
        %1474 = vmatprep.mubr.bf16.mxu0 %v661
        %1475 = vmatmul.mubr.bf16.gmra.mrb[0].mxu0 %v660
        %v1476 = vpop.f32.mrb[0].mxu0
        %v1477 = vadd.f32 %v1220, %v1476
        %v1478 = vpop.f32.mrb[0].mxu0
        %v1479 = vpop.f32.mrb[0].mxu0
        %v1480 = vadd.f32 %v1223, %v1479
        %v1481 = vpop.f32.mrb[0].mxu0
        %1482 = vmatprep.mubr.bf16.mxu0 %v663
        %1483 = vmatmul.mubr.bf16.gmra.mrb[0].mxu0 %v662
        %v1484 = vpop.f32.mrb[0].mxu0
        %v1485 = vadd.f32 %v1228, %v1484
        %v1486 = vpop.f32.mrb[0].mxu0
        %v1487 = vpop.f32.mrb[0].mxu0
        %v1488 = vadd.f32 %v1231, %v1487
        %v1489 = vpop.f32.mrb[0].mxu0
        %1490 = vmatprep.mubr.bf16.mxu0 %v665
        %1491 = vmatmul.mubr.bf16.gmra.mrb[0].mxu0 %v664
        %v1492 = vpop.f32.mrb[0].mxu0
        %v1493 = vadd.f32 %v1236, %v1492
        %v1494 = vpop.f32.mrb[0].mxu0
        %v1495 = vpop.f32.mrb[0].mxu0
        %v1496 = vadd.f32 %v1239, %v1495
        %v1497 = vpop.f32.mrb[0].mxu0
        %1498 = vmatprep.mubr.bf16.mxu0 %v667
        %1499 = vmatmul.mubr.bf16.gmra.mrb[0].mxu0 %v666
        %v1500 = vpop.f32.mrb[0].mxu0
        %v1501 = vadd.f32 %v1244, %v1500
        %v1502 = vpop.f32.mrb[0].mxu0
        %v1503 = vpop.f32.mrb[0].mxu0
        %v1504 = vadd.f32 %v1247, %v1503
        %v1505 = vpop.f32.mrb[0].mxu0
        %1506 = vmatprep.mubr.bf16.mxu0 %v669
        %1507 = vmatmul.mubr.bf16.gmra.mrb[0].mxu0 %v668
        %v1508 = vpop.f32.mrb[0].mxu0
        %v1509 = vadd.f32 %v1252, %v1508
        %v1510 = vpop.f32.mrb[0].mxu0
        %v1511 = vpop.f32.mrb[0].mxu0
        %v1512 = vadd.f32 %v1255, %v1511
        %v1513 = vpop.f32.mrb[0].mxu0
        %1514 = vmatprep.mubr.bf16.mxu0 %v671
        %1515 = vmatmul.mubr.bf16.gmra.mrb[0].mxu0 %v670
        %v1516 = vpop.f32.mrb[0].mxu0
        %v1517 = vadd.f32 %v1260, %v1516
        %v1518 = vpop.f32.mrb[0].mxu0
        %v1519 = vpop.f32.mrb[0].mxu0
        %v1520 = vadd.f32 %v1263, %v1519
        %v1521 = vpop.f32.mrb[0].mxu0
        %1522 = vmatprep.mubr.bf16.mxu0 %v673
        %1523 = vmatmul.mubr.bf16.gmra.mrb[0].mxu0 %v672
        %v1524 = vpop.f32.mrb[0].mxu0
        %v1525 = vadd.f32 %v1268, %v1524
        %v1526 = vpop.f32.mrb[0].mxu0
        %v1527 = vpop.f32.mrb[0].mxu0
        %v1528 = vadd.f32 %v1271, %v1527
        %v1529 = vpop.f32.mrb[0].mxu0
        %1530 = vmatprep.mubr.bf16.mxu0 %v675
        %1531 = vmatmul.mubr.bf16.gmra.mrb[0].mxu0 %v674
        %v1532 = vpop.f32.mrb[0].mxu0
        %v1533 = vadd.f32 %v1276, %v1532
        %v1534 = vpop.f32.mrb[0].mxu0
        %v1535 = vpop.f32.mrb[0].mxu0
        %v1536 = vadd.f32 %v1279, %v1535
        %v1537 = vpop.f32.mrb[0].mxu0
        %1538 = vmatprep.mubr.bf16.mxu0 %v677
        %1539 = vmatmul.mubr.bf16.gmra.mrb[0].mxu0 %v676
        %v1540 = vpop.f32.mrb[0].mxu0
        %v1541 = vadd.f32 %v1284, %v1540
        %v1542 = vpop.f32.mrb[0].mxu0
        %v1543 = vpop.f32.mrb[0].mxu0
        %v1544 = vadd.f32 %v1287, %v1543
        %v1545 = vpop.f32.mrb[0].mxu0
        %1546 = vmatprep.mubr.bf16.mxu0 %v679
        %1547 = vmatmul.mubr.bf16.gmra.mrb[0].mxu0 %v678
        %v1548 = vpop.f32.mrb[0].mxu0
        %v1549 = vadd.f32 %v1292, %v1548
        %v1550 = vpop.f32.mrb[0].mxu0
        %v1551 = vpop.f32.mrb[0].mxu0
        %v1552 = vadd.f32 %v1295, %v1551
        %v1553 = vpop.f32.mrb[0].mxu0
        %1554 = vmatprep.mubr.bf16.mxu0 %v681
        %1555 = vmatmul.mubr.bf16.gmra.mrb[0].mxu0 %v680
        %v1556 = vpop.f32.mrb[0].mxu0
        %v1557 = vadd.f32 %v1300, %v1556
        %v1558 = vpop.f32.mrb[0].mxu0
        %v1559 = vpop.f32.mrb[0].mxu0
        %v1560 = vadd.f32 %v1303, %v1559
        %v1561 = vpop.f32.mrb[0].mxu0
        %1562 = vmatprep.mubr.bf16.mxu0 %v683
        %1563 = vmatmul.mubr.bf16.gmra.mrb[0].mxu0 %v682
        %v1564 = vpop.f32.mrb[0].mxu0
        %v1565 = vadd.f32 %v1308, %v1564
        %v1566 = vpop.f32.mrb[0].mxu0
        %v1567 = vpop.f32.mrb[0].mxu0
        %v1568 = vadd.f32 %v1311, %v1567
        %v1569 = vpop.f32.mrb[0].mxu0
        %1570 = vmatprep.mubr.bf16.mxu0 %v685
        %1571 = vmatmul.mubr.bf16.gmra.mrb[0].mxu0 %v684
        %v1572 = vpop.f32.mrb[0].mxu0
        %v1573 = vadd.f32 %v1316, %v1572
        %v1574 = vpop.f32.mrb[0].mxu0
        %v1575 = vpop.f32.mrb[0].mxu0
        %v1576 = vadd.f32 %v1319, %v1575
        %v1577 = vpop.f32.mrb[0].mxu0
        %1578 = vmatprep.mubr.bf16.mxu0 %v687
        %1579 = vmatmul.mubr.bf16.gmra.mrb[0].mxu0 %v686
        %v1580 = vpop.f32.mrb[0].mxu0
        %v1581 = vadd.f32 %v1324, %v1580
        %v1582 = vpop.f32.mrb[0].mxu0
        %v1583 = vpop.f32.mrb[0].mxu0
        %v1584 = vadd.f32 %v1327, %v1583
        %v1585 = vpop.f32.mrb[0].mxu0
        %1586 = vdwg.mxu0
        %v1587 = vld [vmem:[#allocation4 + $0x10] sm:$0xff]
        %v1588 = vld [vmem:[#allocation4 + $0x34] sm:$0xff]
        %v1589 = vld [vmem:[#allocation4 + $0x58] sm:$0xff]
        %v1590 = vld [vmem:[#allocation4 + $0x7c] sm:$0xff]
        %v1591 = vld [vmem:[#allocation4 + $0xa0] sm:$0xff]
        %v1592 = vld [vmem:[#allocation4 + $0xc4] sm:$0xff]
        %v1593 = vld [vmem:[#allocation4 + $0xe8] sm:$0xff]
        %v1594 = vld [vmem:[#allocation4 + $0x10c] sm:$0xff]
        %v1595 = vld [vmem:[#allocation4 + $0x130] sm:$0xff]
        %v1596 = vld [vmem:[#allocation4 + $0x154] sm:$0xff]
        %v1597 = vld [vmem:[#allocation4 + $0x178] sm:$0xff]
        %v1598 = vld [vmem:[#allocation4 + $0x19c] sm:$0xff]
        %v1599 = vld [vmem:[#allocation4 + $0x1c0] sm:$0xff]
        %v1600 = vld [vmem:[#allocation4 + $0x1e4] sm:$0xff]
        %v1601 = vld [vmem:[#allocation4 + $0x208] sm:$0xff]
        %v1602 = vld [vmem:[#allocation4 + $0x22c] sm:$0xff]
        %v1619 = vunpack.c.l.b16 %v1587
        %v1620 = vunpack.c.h.b16 %v1587
        %v1621 = vunpack.c.l.b16 %v1588
        %v1622 = vunpack.c.h.b16 %v1588
        %v1623 = vunpack.c.l.b16 %v1589
        %v1624 = vunpack.c.h.b16 %v1589
        %v1625 = vunpack.c.l.b16 %v1590
        %v1626 = vunpack.c.h.b16 %v1590
        %v1627 = vunpack.c.l.b16 %v1591
        %v1628 = vunpack.c.h.b16 %v1591
        %v1629 = vunpack.c.l.b16 %v1592
        %v1630 = vunpack.c.h.b16 %v1592
        %v1631 = vunpack.c.l.b16 %v1593
        %v1632 = vunpack.c.h.b16 %v1593
        %v1633 = vunpack.c.l.b16 %v1594
        %v1634 = vunpack.c.h.b16 %v1594
        %v1635 = vunpack.c.l.b16 %v1595
        %v1636 = vunpack.c.h.b16 %v1595
        %v1637 = vunpack.c.l.b16 %v1596
        %v1638 = vunpack.c.h.b16 %v1596
        %v1639 = vunpack.c.l.b16 %v1597
        %v1640 = vunpack.c.h.b16 %v1597
        %v1641 = vunpack.c.l.b16 %v1598
        %v1642 = vunpack.c.h.b16 %v1598
        %v1643 = vunpack.c.l.b16 %v1599
        %v1644 = vunpack.c.h.b16 %v1599
        %v1645 = vunpack.c.l.b16 %v1600
        %v1646 = vunpack.c.h.b16 %v1600
        %v1647 = vunpack.c.l.b16 %v1601
        %v1648 = vunpack.c.h.b16 %v1601
        %v1649 = vunpack.c.l.b16 %v1602
        %v1650 = vunpack.c.h.b16 %v1602
        %v1651 = vpack.c.b16 %v1621, %v1619
        %v1652 = vpack.c.b16 %v1622, %v1620
        %v1653 = vpack.c.b16 %v1625, %v1623
        %v1654 = vpack.c.b16 %v1626, %v1624
        %v1655 = vpack.c.b16 %v1629, %v1627
        %v1656 = vpack.c.b16 %v1630, %v1628
        %v1657 = vpack.c.b16 %v1633, %v1631
        %v1658 = vpack.c.b16 %v1634, %v1632
        %v1659 = vpack.c.b16 %v1637, %v1635
        %v1660 = vpack.c.b16 %v1638, %v1636
        %v1661 = vpack.c.b16 %v1641, %v1639
        %v1662 = vpack.c.b16 %v1642, %v1640
        %v1663 = vpack.c.b16 %v1645, %v1643
        %v1664 = vpack.c.b16 %v1646, %v1644
        %v1665 = vpack.c.b16 %v1649, %v1647
        %v1666 = vpack.c.b16 %v1650, %v1648
        %1683 = vmatprep.subr.bf16.mxu0 %v1652
        %1684 = vmatpush1.bf16.msra.mxu0 %v1651
        %1685 = vmatprep.subr.bf16.mxu0 %v1654
        %1686 = vmatpush1.bf16.msra.mxu0 %v1653
        %1687 = vmatprep.subr.bf16.mxu0 %v1656
        %1688 = vmatpush1.bf16.msra.mxu0 %v1655
        %1689 = vmatprep.subr.bf16.mxu0 %v1658
        %1690 = vmatpush1.bf16.msra.mxu0 %v1657
        %1691 = vmatprep.subr.bf16.mxu0 %v1660
        %1692 = vmatpush1.bf16.msra.mxu0 %v1659
        %1693 = vmatprep.subr.bf16.mxu0 %v1662
        %1694 = vmatpush1.bf16.msra.mxu0 %v1661
        %1695 = vmatprep.subr.bf16.mxu0 %v1664
        %1696 = vmatpush1.bf16.msra.mxu0 %v1663
        %1697 = vmatprep.subr.bf16.mxu0 %v1666
        %1698 = vmatpush1.bf16.msra.mxu0 %v1665
        %1699 = vmatprep.subr.bf16.mxu0 0
        %1700 = vmatpush1.bf16.msra.mxu0 0
        %1701 = vmatprep.subr.bf16.mxu0 0
        %1702 = vmatpush1.bf16.msra.mxu0 0
        %1703 = vmatprep.subr.bf16.mxu0 0
        %1704 = vmatpush1.bf16.msra.mxu0 0
        %1705 = vmatprep.subr.bf16.mxu0 0
        %1706 = vmatpush1.bf16.msra.mxu0 0
        %1707 = vmatprep.subr.bf16.mxu0 0
        %1708 = vmatpush1.bf16.msra.mxu0 0
        %1709 = vmatprep.subr.bf16.mxu0 0
        %1710 = vmatpush1.bf16.msra.mxu0 0
        %1711 = vmatprep.subr.bf16.mxu0 0
        %1712 = vmatpush1.bf16.msra.mxu0 0
        %1713 = vmatprep.subr.bf16.mxu0 0
        %1714 = vmatpush1.bf16.msra.mxu0 0
        %1715 = vmatprep.mubr.bf16.mxu0 0
        %1716 = vmatmul.mubr.bf16.gmra.mrb[0].mxu0 %v351
        %v1717 = vpop.f32.mrb[0].mxu0
        %v1718 = vadd.f32 0.0, %v1717
        %v1719 = vpop.f32.mrb[0].mxu0
        %v1720 = vadd.f32 0.0, %v1719
        %v1721 = vpop.f32.mrb[0].mxu0
        %v1722 = vadd.f32 0.0, %v1721
        %v1723 = vpop.f32.mrb[0].mxu0
        %v1724 = vadd.f32 0.0, %v1723
        %1725 = vmatprep.mubr.bf16.mxu0 0
        %1726 = vmatmul.mubr.bf16.gmra.mrb[0].mxu0 %v352
        %v1727 = vpop.f32.mrb[0].mxu0
        %v1728 = vadd.f32 0.0, %v1727
        %v1729 = vpop.f32.mrb[0].mxu0
        %v1730 = vadd.f32 0.0, %v1729
        %v1731 = vpop.f32.mrb[0].mxu0
        %v1732 = vadd.f32 0.0, %v1731
        %v1733 = vpop.f32.mrb[0].mxu0
        %v1734 = vadd.f32 0.0, %v1733
        %1735 = vmatprep.mubr.bf16.mxu0 0
        %1736 = vmatmul.mubr.bf16.gmra.mrb[0].mxu0 %v353
        %v1737 = vpop.f32.mrb[0].mxu0
        %v1738 = vadd.f32 0.0, %v1737
        %v1739 = vpop.f32.mrb[0].mxu0
        %v1740 = vadd.f32 0.0, %v1739
        %v1741 = vpop.f32.mrb[0].mxu0
        %v1742 = vadd.f32 0.0, %v1741
        %v1743 = vpop.f32.mrb[0].mxu0
        %v1744 = vadd.f32 0.0, %v1743
        %1745 = vmatprep.mubr.bf16.mxu0 0
        %1746 = vmatmul.mubr.bf16.gmra.mrb[0].mxu0 %v354
        %v1747 = vpop.f32.mrb[0].mxu0
        %v1748 = vadd.f32 0.0, %v1747
        %v1749 = vpop.f32.mrb[0].mxu0
        %v1750 = vadd.f32 0.0, %v1749
        %v1751 = vpop.f32.mrb[0].mxu0
        %v1752 = vadd.f32 0.0, %v1751
        %v1753 = vpop.f32.mrb[0].mxu0
        %v1754 = vadd.f32 0.0, %v1753
        %1755 = vmatprep.mubr.bf16.mxu0 0
        %1756 = vmatmul.mubr.bf16.gmra.mrb[0].mxu0 %v355
        %v1757 = vpop.f32.mrb[0].mxu0
        %v1758 = vadd.f32 0.0, %v1757
        %v1759 = vpop.f32.mrb[0].mxu0
        %v1760 = vadd.f32 0.0, %v1759
        %v1761 = vpop.f32.mrb[0].mxu0
        %v1762 = vadd.f32 0.0, %v1761
        %v1763 = vpop.f32.mrb[0].mxu0
        %v1764 = vadd.f32 0.0, %v1763
        %1765 = vmatprep.mubr.bf16.mxu0 0
        %1766 = vmatmul.mubr.bf16.gmra.mrb[0].mxu0 %v356
        %v1767 = vpop.f32.mrb[0].mxu0
        %v1768 = vadd.f32 0.0, %v1767
        %v1769 = vpop.f32.mrb[0].mxu0
        %v1770 = vadd.f32 0.0, %v1769
        %v1771 = vpop.f32.mrb[0].mxu0
        %v1772 = vadd.f32 0.0, %v1771
        %v1773 = vpop.f32.mrb[0].mxu0
        %v1774 = vadd.f32 0.0, %v1773
        %1775 = vmatprep.mubr.bf16.mxu0 0
        %1776 = vmatmul.mubr.bf16.gmra.mrb[0].mxu0 %v357
        %v1777 = vpop.f32.mrb[0].mxu0
        %v1778 = vadd.f32 0.0, %v1777
        %v1779 = vpop.f32.mrb[0].mxu0
        %v1780 = vadd.f32 0.0, %v1779
        %v1781 = vpop.f32.mrb[0].mxu0
        %v1782 = vadd.f32 0.0, %v1781
        %v1783 = vpop.f32.mrb[0].mxu0
        %v1784 = vadd.f32 0.0, %v1783
        %1785 = vmatprep.mubr.bf16.mxu0 0
        %1786 = vmatmul.mubr.bf16.gmra.mrb[0].mxu0 %v358
        %v1787 = vpop.f32.mrb[0].mxu0
        %v1788 = vadd.f32 0.0, %v1787
        %v1789 = vpop.f32.mrb[0].mxu0
        %v1790 = vadd.f32 0.0, %v1789
        %v1791 = vpop.f32.mrb[0].mxu0
        %v1792 = vadd.f32 0.0, %v1791
        %v1793 = vpop.f32.mrb[0].mxu0
        %v1794 = vadd.f32 0.0, %v1793
        %1795 = vmatprep.mubr.bf16.mxu0 0
        %1796 = vmatmul.mubr.bf16.gmra.mrb[0].mxu0 %v359
        %v1797 = vpop.f32.mrb[0].mxu0
        %v1798 = vadd.f32 0.0, %v1797
        %v1799 = vpop.f32.mrb[0].mxu0
        %v1800 = vadd.f32 0.0, %v1799
        %v1801 = vpop.f32.mrb[0].mxu0
        %v1802 = vadd.f32 0.0, %v1801
        %v1803 = vpop.f32.mrb[0].mxu0
        %v1804 = vadd.f32 0.0, %v1803
        %1805 = vmatprep.mubr.bf16.mxu0 0
        %1806 = vmatmul.mubr.bf16.gmra.mrb[0].mxu0 %v360
        %v1807 = vpop.f32.mrb[0].mxu0
        %v1808 = vadd.f32 0.0, %v1807
        %v1809 = vpop.f32.mrb[0].mxu0
        %v1810 = vadd.f32 0.0, %v1809
        %v1811 = vpop.f32.mrb[0].mxu0
        %v1812 = vadd.f32 0.0, %v1811
        %v1813 = vpop.f32.mrb[0].mxu0
        %v1814 = vadd.f32 0.0, %v1813
        %1815 = vmatprep.mubr.bf16.mxu0 0
        %1816 = vmatmul.mubr.bf16.gmra.mrb[0].mxu0 %v361
        %v1817 = vpop.f32.mrb[0].mxu0
        %v1818 = vadd.f32 0.0, %v1817
        %v1819 = vpop.f32.mrb[0].mxu0
        %v1820 = vadd.f32 0.0, %v1819
        %v1821 = vpop.f32.mrb[0].mxu0
        %v1822 = vadd.f32 0.0, %v1821
        %v1823 = vpop.f32.mrb[0].mxu0
        %v1824 = vadd.f32 0.0, %v1823
        %1825 = vmatprep.mubr.bf16.mxu0 0
        %1826 = vmatmul.mubr.bf16.gmra.mrb[0].mxu0 %v362
        %v1827 = vpop.f32.mrb[0].mxu0
        %v1828 = vadd.f32 0.0, %v1827
        %v1829 = vpop.f32.mrb[0].mxu0
        %v1830 = vadd.f32 0.0, %v1829
        %v1831 = vpop.f32.mrb[0].mxu0
        %v1832 = vadd.f32 0.0, %v1831
        %v1833 = vpop.f32.mrb[0].mxu0
        %v1834 = vadd.f32 0.0, %v1833
        %1835 = vmatprep.mubr.bf16.mxu0 0
        %1836 = vmatmul.mubr.bf16.gmra.mrb[0].mxu0 %v363
        %v1837 = vpop.f32.mrb[0].mxu0
        %v1838 = vadd.f32 0.0, %v1837
        %v1839 = vpop.f32.mrb[0].mxu0
        %v1840 = vadd.f32 0.0, %v1839
        %v1841 = vpop.f32.mrb[0].mxu0
        %v1842 = vadd.f32 0.0, %v1841
        %v1843 = vpop.f32.mrb[0].mxu0
        %v1844 = vadd.f32 0.0, %v1843
        %1845 = vmatprep.mubr.bf16.mxu0 0
        %1846 = vmatmul.mubr.bf16.gmra.mrb[0].mxu0 %v364
        %v1847 = vpop.f32.mrb[0].mxu0
        %v1848 = vadd.f32 0.0, %v1847
        %v1849 = vpop.f32.mrb[0].mxu0
        %v1850 = vadd.f32 0.0, %v1849
        %v1851 = vpop.f32.mrb[0].mxu0
        %v1852 = vadd.f32 0.0, %v1851
        %v1853 = vpop.f32.mrb[0].mxu0
        %v1854 = vadd.f32 0.0, %v1853
        %1855 = vmatprep.mubr.bf16.mxu0 0
        %1856 = vmatmul.mubr.bf16.gmra.mrb[0].mxu0 %v365
        %v1857 = vpop.f32.mrb[0].mxu0
        %v1858 = vadd.f32 0.0, %v1857
        %v1859 = vpop.f32.mrb[0].mxu0
        %v1860 = vadd.f32 0.0, %v1859
        %v1861 = vpop.f32.mrb[0].mxu0
        %v1862 = vadd.f32 0.0, %v1861
        %v1863 = vpop.f32.mrb[0].mxu0
        %v1864 = vadd.f32 0.0, %v1863
        %1865 = vmatprep.mubr.bf16.mxu0 0
        %1866 = vmatmul.mubr.bf16.gmra.mrb[0].mxu0 %v366
        %v1867 = vpop.f32.mrb[0].mxu0
        %v1868 = vadd.f32 0.0, %v1867
        %v1869 = vpop.f32.mrb[0].mxu0
        %v1870 = vadd.f32 0.0, %v1869
        %v1871 = vpop.f32.mrb[0].mxu0
        %v1872 = vadd.f32 0.0, %v1871
        %v1873 = vpop.f32.mrb[0].mxu0
        %v1874 = vadd.f32 0.0, %v1873
        %1875 = vdwg.mxu0
        %v1876 = vpack.c.bf16 %v1722, %v1718
        %v1877 = vpack.c.bf16 %v1724, %v1720
        %v1878 = vpack.c.bf16 %v1732, %v1728
        %v1879 = vpack.c.bf16 %v1734, %v1730
        %v1880 = vpack.c.bf16 %v1742, %v1738
        %v1881 = vpack.c.bf16 %v1744, %v1740
        %v1882 = vpack.c.bf16 %v1752, %v1748
        %v1883 = vpack.c.bf16 %v1754, %v1750
        %v1884 = vpack.c.bf16 %v1762, %v1758
        %v1885 = vpack.c.bf16 %v1764, %v1760
        %v1886 = vpack.c.bf16 %v1772, %v1768
        %v1887 = vpack.c.bf16 %v1774, %v1770
        %v1888 = vpack.c.bf16 %v1782, %v1778
        %v1889 = vpack.c.bf16 %v1784, %v1780
        %v1890 = vpack.c.bf16 %v1792, %v1788
        %v1891 = vpack.c.bf16 %v1794, %v1790
        %v1892 = vpack.c.bf16 %v1802, %v1798
        %v1893 = vpack.c.bf16 %v1804, %v1800
        %v1894 = vpack.c.bf16 %v1812, %v1808
        %v1895 = vpack.c.bf16 %v1814, %v1810
        %v1896 = vpack.c.bf16 %v1822, %v1818
        %v1897 = vpack.c.bf16 %v1824, %v1820
        %v1898 = vpack.c.bf16 %v1832, %v1828
        %v1899 = vpack.c.bf16 %v1834, %v1830
        %v1900 = vpack.c.bf16 %v1842, %v1838
        %v1901 = vpack.c.bf16 %v1844, %v1840
        %v1902 = vpack.c.bf16 %v1852, %v1848
        %v1903 = vpack.c.bf16 %v1854, %v1850
        %v1904 = vpack.c.bf16 %v1862, %v1858
        %v1905 = vpack.c.bf16 %v1864, %v1860
        %v1906 = vpack.c.bf16 %v1872, %v1868
        %v1907 = vpack.c.bf16 %v1874, %v1870
        %v1908 = vld [vmem:[#allocation6 + $0x100] sm:$0xf]
        %v1909 = vld [vmem:[#allocation6 + $0x104] sm:$0xf]
        %v1910 = vld [vmem:[#allocation6 + $0x108] sm:$0xf]
        %v1911 = vld [vmem:[#allocation6 + $0x10c] sm:$0xf]
        %v1912 = vld [vmem:[#allocation6 + $0x110] sm:$0xf]
        %v1913 = vld [vmem:[#allocation6 + $0x114] sm:$0xf]
        %v1914 = vld [vmem:[#allocation6 + $0x118] sm:$0xf]
        %v1915 = vld [vmem:[#allocation6 + $0x11c] sm:$0xf]
        %v1916 = vld [vmem:[#allocation6 + $0x120] sm:$0xf]
        %v1917 = vld [vmem:[#allocation6 + $0x124] sm:$0xf]
        %v1918 = vld [vmem:[#allocation6 + $0x128] sm:$0xf]
        %v1919 = vld [vmem:[#allocation6 + $0x12c] sm:$0xf]
        %v1920 = vld [vmem:[#allocation6 + $0x130] sm:$0xf]
        %v1921 = vld [vmem:[#allocation6 + $0x134] sm:$0xf]
        %v1922 = vld [vmem:[#allocation6 + $0x138] sm:$0xf]
        %v1923 = vld [vmem:[#allocation6 + $0x13c] sm:$0xf]
        %v1924 = vld [vmem:[#allocation6 + $0x140] sm:$0xf]
        %v1925 = vld [vmem:[#allocation6 + $0x144] sm:$0xf]
        %v1926 = vld [vmem:[#allocation6 + $0x148] sm:$0xf]
        %v1927 = vld [vmem:[#allocation6 + $0x14c] sm:$0xf]
        %v1928 = vld [vmem:[#allocation6 + $0x150] sm:$0xf]
        %v1929 = vld [vmem:[#allocation6 + $0x154] sm:$0xf]
        %v1930 = vld [vmem:[#allocation6 + $0x158] sm:$0xf]
        %v1931 = vld [vmem:[#allocation6 + $0x15c] sm:$0xf]
        %v1932 = vld [vmem:[#allocation6 + $0x160] sm:$0xf]
        %v1933 = vld [vmem:[#allocation6 + $0x164] sm:$0xf]
        %v1934 = vld [vmem:[#allocation6 + $0x168] sm:$0xf]
        %v1935 = vld [vmem:[#allocation6 + $0x16c] sm:$0xf]
        %v1936 = vld [vmem:[#allocation6 + $0x170] sm:$0xf]
        %v1937 = vld [vmem:[#allocation6 + $0x174] sm:$0xf]
        %v1938 = vld [vmem:[#allocation6 + $0x178] sm:$0xf]
        %v1939 = vld [vmem:[#allocation6 + $0x17c] sm:$0xf]
        %v1972 = vunpack.c.l.b16 %v1908
        %v1973 = vunpack.c.l.b16 %v1909
        %v1974 = vunpack.c.l.b16 %v1910
        %v1975 = vunpack.c.l.b16 %v1911
        %v1976 = vunpack.c.l.b16 %v1912
        %v1977 = vunpack.c.l.b16 %v1913
        %v1978 = vunpack.c.l.b16 %v1914
        %v1979 = vunpack.c.l.b16 %v1915
        %v1980 = vunpack.c.l.b16 %v1916
        %v1981 = vunpack.c.l.b16 %v1917
        %v1982 = vunpack.c.l.b16 %v1918
        %v1983 = vunpack.c.l.b16 %v1919
        %v1984 = vunpack.c.l.b16 %v1920
        %v1985 = vunpack.c.l.b16 %v1921
        %v1986 = vunpack.c.l.b16 %v1922
        %v1987 = vunpack.c.l.b16 %v1923
        %v1988 = vunpack.c.l.b16 %v1924
        %v1989 = vunpack.c.l.b16 %v1925
        %v1990 = vunpack.c.l.b16 %v1926
        %v1991 = vunpack.c.l.b16 %v1927
        %v1992 = vunpack.c.l.b16 %v1928
        %v1993 = vunpack.c.l.b16 %v1929
        %v1994 = vunpack.c.l.b16 %v1930
        %v1995 = vunpack.c.l.b16 %v1931
        %v1996 = vunpack.c.l.b16 %v1932
        %v1997 = vunpack.c.l.b16 %v1933
        %v1998 = vunpack.c.l.b16 %v1934
        %v1999 = vunpack.c.l.b16 %v1935
        %v2000 = vunpack.c.l.b16 %v1936
        %v2001 = vunpack.c.l.b16 %v1937
        %v2002 = vunpack.c.l.b16 %v1938
        %v2003 = vunpack.c.l.b16 %v1939
        %v2004 = vpack.c.b16 %v1973, %v1972
        %v2005 = vpack.c.b16 %v1975, %v1974
        %v2006 = vpack.c.b16 %v1977, %v1976
        %v2007 = vpack.c.b16 %v1979, %v1978
        %v2008 = vpack.c.b16 %v1981, %v1980
        %v2009 = vpack.c.b16 %v1983, %v1982
        %v2010 = vpack.c.b16 %v1985, %v1984
        %v2011 = vpack.c.b16 %v1987, %v1986
        %v2012 = vpack.c.b16 %v1989, %v1988
        %v2013 = vpack.c.b16 %v1991, %v1990
        %v2014 = vpack.c.b16 %v1993, %v1992
        %v2015 = vpack.c.b16 %v1995, %v1994
        %v2016 = vpack.c.b16 %v1997, %v1996
        %v2017 = vpack.c.b16 %v1999, %v1998
        %v2018 = vpack.c.b16 %v2001, %v2000
        %v2019 = vpack.c.b16 %v2003, %v2002
        %2036 = vmatprep.subr.bf16.mxu0 0
        %2037 = vmatpush1.bf16.msra.mxu0 %v2004
        %2038 = vmatprep.subr.bf16.mxu0 0
        %2039 = vmatpush1.bf16.msra.mxu0 %v2005
        %2040 = vmatprep.subr.bf16.mxu0 0
        %2041 = vmatpush1.bf16.msra.mxu0 %v2006
        %2042 = vmatprep.subr.bf16.mxu0 0
        %2043 = vmatpush1.bf16.msra.mxu0 %v2007
        %2044 = vmatprep.subr.bf16.mxu0 0
        %2045 = vmatpush1.bf16.msra.mxu0 %v2008
        %2046 = vmatprep.subr.bf16.mxu0 0
        %2047 = vmatpush1.bf16.msra.mxu0 %v2009
        %2048 = vmatprep.subr.bf16.mxu0 0
        %2049 = vmatpush1.bf16.msra.mxu0 %v2010
        %2050 = vmatprep.subr.bf16.mxu0 0
        %2051 = vmatpush1.bf16.msra.mxu0 %v2011
        %2052 = vmatprep.subr.bf16.mxu0 0
        %2053 = vmatpush1.bf16.msra.mxu0 %v2012
        %2054 = vmatprep.subr.bf16.mxu0 0
        %2055 = vmatpush1.bf16.msra.mxu0 %v2013
        %2056 = vmatprep.subr.bf16.mxu0 0
        %2057 = vmatpush1.bf16.msra.mxu0 %v2014
        %2058 = vmatprep.subr.bf16.mxu0 0
        %2059 = vmatpush1.bf16.msra.mxu0 %v2015
        %2060 = vmatprep.subr.bf16.mxu0 0
        %2061 = vmatpush1.bf16.msra.mxu0 %v2016
        %2062 = vmatprep.subr.bf16.mxu0 0
        %2063 = vmatpush1.bf16.msra.mxu0 %v2017
        %2064 = vmatprep.subr.bf16.mxu0 0
        %2065 = vmatpush1.bf16.msra.mxu0 %v2018
        %2066 = vmatprep.subr.bf16.mxu0 0
        %2067 = vmatpush1.bf16.msra.mxu0 %v2019
        %2068 = vmatprep.mubr.bf16.mxu0 %v1877
        %2069 = vmatmul.mubr.bf16.gmra.mrb[0].mxu0 %v1876
        %v2070 = vpop.f32.mrb[0].mxu0
        %v2071 = vadd.f32 0.0, %v2070
        %v2072 = vpop.f32.mrb[0].mxu0
        %v2073 = vpop.f32.mrb[0].mxu0
        %v2074 = vadd.f32 0.0, %v2073
        %v2075 = vpop.f32.mrb[0].mxu0
        %2076 = vmatprep.mubr.bf16.mxu0 %v1879
        %2077 = vmatmul.mubr.bf16.gmra.mrb[0].mxu0 %v1878
        %v2078 = vpop.f32.mrb[0].mxu0
        %v2079 = vadd.f32 0.0, %v2078
        %v2080 = vpop.f32.mrb[0].mxu0
        %v2081 = vpop.f32.mrb[0].mxu0
        %v2082 = vadd.f32 0.0, %v2081
        %v2083 = vpop.f32.mrb[0].mxu0
        %2084 = vmatprep.mubr.bf16.mxu0 %v1881
        %2085 = vmatmul.mubr.bf16.gmra.mrb[0].mxu0 %v1880
        %v2086 = vpop.f32.mrb[0].mxu0
        %v2087 = vadd.f32 0.0, %v2086
        %v2088 = vpop.f32.mrb[0].mxu0
        %v2089 = vpop.f32.mrb[0].mxu0
        %v2090 = vadd.f32 0.0, %v2089
        %v2091 = vpop.f32.mrb[0].mxu0
        %2092 = vmatprep.mubr.bf16.mxu0 %v1883
        %2093 = vmatmul.mubr.bf16.gmra.mrb[0].mxu0 %v1882
        %v2094 = vpop.f32.mrb[0].mxu0
        %v2095 = vadd.f32 0.0, %v2094
        %v2096 = vpop.f32.mrb[0].mxu0
        %v2097 = vpop.f32.mrb[0].mxu0
        %v2098 = vadd.f32 0.0, %v2097
        %v2099 = vpop.f32.mrb[0].mxu0
        %2100 = vmatprep.mubr.bf16.mxu0 %v1885
        %2101 = vmatmul.mubr.bf16.gmra.mrb[0].mxu0 %v1884
        %v2102 = vpop.f32.mrb[0].mxu0
        %v2103 = vadd.f32 0.0, %v2102
        %v2104 = vpop.f32.mrb[0].mxu0
        %v2105 = vpop.f32.mrb[0].mxu0
        %v2106 = vadd.f32 0.0, %v2105
        %v2107 = vpop.f32.mrb[0].mxu0
        %2108 = vmatprep.mubr.bf16.mxu0 %v1887
        %2109 = vmatmul.mubr.bf16.gmra.mrb[0].mxu0 %v1886
        %v2110 = vpop.f32.mrb[0].mxu0
        %v2111 = vadd.f32 0.0, %v2110
        %v2112 = vpop.f32.mrb[0].mxu0
        %v2113 = vpop.f32.mrb[0].mxu0
        %v2114 = vadd.f32 0.0, %v2113
        %v2115 = vpop.f32.mrb[0].mxu0
        %2116 = vmatprep.mubr.bf16.mxu0 %v1889
        %2117 = vmatmul.mubr.bf16.gmra.mrb[0].mxu0 %v1888
        %v2118 = vpop.f32.mrb[0].mxu0
        %v2119 = vadd.f32 0.0, %v2118
        %v2120 = vpop.f32.mrb[0].mxu0
        %v2121 = vpop.f32.mrb[0].mxu0
        %v2122 = vadd.f32 0.0, %v2121
        %v2123 = vpop.f32.mrb[0].mxu0
        %2124 = vmatprep.mubr.bf16.mxu0 %v1891
        %2125 = vmatmul.mubr.bf16.gmra.mrb[0].mxu0 %v1890
        %v2126 = vpop.f32.mrb[0].mxu0
        %v2127 = vadd.f32 0.0, %v2126
        %v2128 = vpop.f32.mrb[0].mxu0
        %v2129 = vpop.f32.mrb[0].mxu0
        %v2130 = vadd.f32 0.0, %v2129
        %v2131 = vpop.f32.mrb[0].mxu0
        %2132 = vmatprep.mubr.bf16.mxu0 %v1893
        %2133 = vmatmul.mubr.bf16.gmra.mrb[0].mxu0 %v1892
        %v2134 = vpop.f32.mrb[0].mxu0
        %v2135 = vadd.f32 0.0, %v2134
        %v2136 = vpop.f32.mrb[0].mxu0
        %v2137 = vpop.f32.mrb[0].mxu0
        %v2138 = vadd.f32 0.0, %v2137
        %v2139 = vpop.f32.mrb[0].mxu0
        %2140 = vmatprep.mubr.bf16.mxu0 %v1895
        %2141 = vmatmul.mubr.bf16.gmra.mrb[0].mxu0 %v1894
        %v2142 = vpop.f32.mrb[0].mxu0
        %v2143 = vadd.f32 0.0, %v2142
        %v2144 = vpop.f32.mrb[0].mxu0
        %v2145 = vpop.f32.mrb[0].mxu0
        %v2146 = vadd.f32 0.0, %v2145
        %v2147 = vpop.f32.mrb[0].mxu0
        %2148 = vmatprep.mubr.bf16.mxu0 %v1897
        %2149 = vmatmul.mubr.bf16.gmra.mrb[0].mxu0 %v1896
        %v2150 = vpop.f32.mrb[0].mxu0
        %v2151 = vadd.f32 0.0, %v2150
        %v2152 = vpop.f32.mrb[0].mxu0
        %v2153 = vpop.f32.mrb[0].mxu0
        %v2154 = vadd.f32 0.0, %v2153
        %v2155 = vpop.f32.mrb[0].mxu0
        %2156 = vmatprep.mubr.bf16.mxu0 %v1899
        %2157 = vmatmul.mubr.bf16.gmra.mrb[0].mxu0 %v1898
        %v2158 = vpop.f32.mrb[0].mxu0
        %v2159 = vadd.f32 0.0, %v2158
        %v2160 = vpop.f32.mrb[0].mxu0
        %v2161 = vpop.f32.mrb[0].mxu0
        %v2162 = vadd.f32 0.0, %v2161
        %v2163 = vpop.f32.mrb[0].mxu0
        %2164 = vmatprep.mubr.bf16.mxu0 %v1901
        %2165 = vmatmul.mubr.bf16.gmra.mrb[0].mxu0 %v1900
        %v2166 = vpop.f32.mrb[0].mxu0
        %v2167 = vadd.f32 0.0, %v2166
        %v2168 = vpop.f32.mrb[0].mxu0
        %v2169 = vpop.f32.mrb[0].mxu0
        %v2170 = vadd.f32 0.0, %v2169
        %v2171 = vpop.f32.mrb[0].mxu0
        %2172 = vmatprep.mubr.bf16.mxu0 %v1903
        %2173 = vmatmul.mubr.bf16.gmra.mrb[0].mxu0 %v1902
        %v2174 = vpop.f32.mrb[0].mxu0
        %v2175 = vadd.f32 0.0, %v2174
        %v2176 = vpop.f32.mrb[0].mxu0
        %v2177 = vpop.f32.mrb[0].mxu0
        %v2178 = vadd.f32 0.0, %v2177
        %v2179 = vpop.f32.mrb[0].mxu0
        %2180 = vmatprep.mubr.bf16.mxu0 %v1905
        %2181 = vmatmul.mubr.bf16.gmra.mrb[0].mxu0 %v1904
        %v2182 = vpop.f32.mrb[0].mxu0
        %v2183 = vadd.f32 0.0, %v2182
        %v2184 = vpop.f32.mrb[0].mxu0
        %v2185 = vpop.f32.mrb[0].mxu0
        %v2186 = vadd.f32 0.0, %v2185
        %v2187 = vpop.f32.mrb[0].mxu0
        %2188 = vmatprep.mubr.bf16.mxu0 %v1907
        %2189 = vmatmul.mubr.bf16.gmra.mrb[0].mxu0 %v1906
        %v2190 = vpop.f32.mrb[0].mxu0
        %v2191 = vadd.f32 0.0, %v2190
        %v2192 = vpop.f32.mrb[0].mxu0
        %v2193 = vpop.f32.mrb[0].mxu0
        %v2194 = vadd.f32 0.0, %v2193
        %v2195 = vpop.f32.mrb[0].mxu0
        %2196 = vdwg.mxu0
        %v2197 = vadd.f32 %v1461, %v2071
        %v2198 = vadd.f32 %v1464, %v2074
        %v2199 = vadd.f32 %v1469, %v2079
        %v2200 = vadd.f32 %v1472, %v2082
        %v2201 = vadd.f32 %v1477, %v2087
        %v2202 = vadd.f32 %v1480, %v2090
        %v2203 = vadd.f32 %v1485, %v2095
        %v2204 = vadd.f32 %v1488, %v2098
        %v2205 = vadd.f32 %v1493, %v2103
        %v2206 = vadd.f32 %v1496, %v2106
        %v2207 = vadd.f32 %v1501, %v2111
        %v2208 = vadd.f32 %v1504, %v2114
        %v2209 = vadd.f32 %v1509, %v2119
        %v2210 = vadd.f32 %v1512, %v2122
        %v2211 = vadd.f32 %v1517, %v2127
        %v2212 = vadd.f32 %v1520, %v2130
        %v2213 = vadd.f32 %v1525, %v2135
        %v2214 = vadd.f32 %v1528, %v2138
        %v2215 = vadd.f32 %v1533, %v2143
        %v2216 = vadd.f32 %v1536, %v2146
        %v2217 = vadd.f32 %v1541, %v2151
        %v2218 = vadd.f32 %v1544, %v2154
        %v2219 = vadd.f32 %v1549, %v2159
        %v2220 = vadd.f32 %v1552, %v2162
        %v2221 = vadd.f32 %v1557, %v2167
        %v2222 = vadd.f32 %v1560, %v2170
        %v2223 = vadd.f32 %v1565, %v2175
        %v2224 = vadd.f32 %v1568, %v2178
        %v2225 = vadd.f32 %v1573, %v2183
        %v2226 = vadd.f32 %v1576, %v2186
        %v2227 = vadd.f32 %v1581, %v2191
        %v2228 = vadd.f32 %v1584, %v2194
        %v2229 = vld [vmem:[#allocation4 + $0x18] sm:$0xff]
        %v2230 = vld [vmem:[#allocation4 + $0x3c] sm:$0xff]
        %v2231 = vld [vmem:[#allocation4 + $0x60] sm:$0xff]
        %v2232 = vld [vmem:[#allocation4 + $0x84] sm:$0xff]
        %v2233 = vld [vmem:[#allocation4 + $0xa8] sm:$0xff]
        %v2234 = vld [vmem:[#allocation4 + $0xcc] sm:$0xff]
        %v2235 = vld [vmem:[#allocation4 + $0xf0] sm:$0xff]
        %v2236 = vld [vmem:[#allocation4 + $0x114] sm:$0xff]
        %v2237 = vld [vmem:[#allocation4 + $0x138] sm:$0xff]
        %v2238 = vld [vmem:[#allocation4 + $0x15c] sm:$0xff]
        %v2239 = vld [vmem:[#allocation4 + $0x180] sm:$0xff]
        %v2240 = vld [vmem:[#allocation4 + $0x1a4] sm:$0xff]
        %v2241 = vld [vmem:[#allocation4 + $0x1c8] sm:$0xff]
        %v2242 = vld [vmem:[#allocation4 + $0x1ec] sm:$0xff]
        %v2243 = vld [vmem:[#allocation4 + $0x210] sm:$0xff]
        %v2244 = vld [vmem:[#allocation4 + $0x234] sm:$0xff]
        %v2261 = vunpack.c.l.b16 %v2229
        %v2262 = vunpack.c.h.b16 %v2229
        %v2263 = vunpack.c.l.b16 %v2230
        %v2264 = vunpack.c.h.b16 %v2230
        %v2265 = vunpack.c.l.b16 %v2231
        %v2266 = vunpack.c.h.b16 %v2231
        %v2267 = vunpack.c.l.b16 %v2232
        %v2268 = vunpack.c.h.b16 %v2232
        %v2269 = vunpack.c.l.b16 %v2233
        %v2270 = vunpack.c.h.b16 %v2233
        %v2271 = vunpack.c.l.b16 %v2234
        %v2272 = vunpack.c.h.b16 %v2234
        %v2273 = vunpack.c.l.b16 %v2235
        %v2274 = vunpack.c.h.b16 %v2235
        %v2275 = vunpack.c.l.b16 %v2236
        %v2276 = vunpack.c.h.b16 %v2236
        %v2277 = vunpack.c.l.b16 %v2237
        %v2278 = vunpack.c.h.b16 %v2237
        %v2279 = vunpack.c.l.b16 %v2238
        %v2280 = vunpack.c.h.b16 %v2238
        %v2281 = vunpack.c.l.b16 %v2239
        %v2282 = vunpack.c.h.b16 %v2239
        %v2283 = vunpack.c.l.b16 %v2240
        %v2284 = vunpack.c.h.b16 %v2240
        %v2285 = vunpack.c.l.b16 %v2241
        %v2286 = vunpack.c.h.b16 %v2241
        %v2287 = vunpack.c.l.b16 %v2242
        %v2288 = vunpack.c.h.b16 %v2242
        %v2289 = vunpack.c.l.b16 %v2243
        %v2290 = vunpack.c.h.b16 %v2243
        %v2291 = vunpack.c.l.b16 %v2244
        %v2292 = vunpack.c.h.b16 %v2244
        %v2293 = vpack.c.b16 %v2263, %v2261
        %v2294 = vpack.c.b16 %v2264, %v2262
        %v2295 = vpack.c.b16 %v2267, %v2265
        %v2296 = vpack.c.b16 %v2268, %v2266
        %v2297 = vpack.c.b16 %v2271, %v2269
        %v2298 = vpack.c.b16 %v2272, %v2270
        %v2299 = vpack.c.b16 %v2275, %v2273
        %v2300 = vpack.c.b16 %v2276, %v2274
        %v2301 = vpack.c.b16 %v2279, %v2277
        %v2302 = vpack.c.b16 %v2280, %v2278
        %v2303 = vpack.c.b16 %v2283, %v2281
        %v2304 = vpack.c.b16 %v2284, %v2282
        %v2305 = vpack.c.b16 %v2287, %v2285
        %v2306 = vpack.c.b16 %v2288, %v2286
        %v2307 = vpack.c.b16 %v2291, %v2289
        %v2308 = vpack.c.b16 %v2292, %v2290
        %2325 = vmatprep.subr.bf16.mxu0 %v2294
        %2326 = vmatpush1.bf16.msra.mxu0 %v2293
        %2327 = vmatprep.subr.bf16.mxu0 %v2296
        %2328 = vmatpush1.bf16.msra.mxu0 %v2295
        %2329 = vmatprep.subr.bf16.mxu0 %v2298
        %2330 = vmatpush1.bf16.msra.mxu0 %v2297
        %2331 = vmatprep.subr.bf16.mxu0 %v2300
        %2332 = vmatpush1.bf16.msra.mxu0 %v2299
        %2333 = vmatprep.subr.bf16.mxu0 %v2302
        %2334 = vmatpush1.bf16.msra.mxu0 %v2301
        %2335 = vmatprep.subr.bf16.mxu0 %v2304
        %2336 = vmatpush1.bf16.msra.mxu0 %v2303
        %2337 = vmatprep.subr.bf16.mxu0 %v2306
        %2338 = vmatpush1.bf16.msra.mxu0 %v2305
        %2339 = vmatprep.subr.bf16.mxu0 %v2308
        %2340 = vmatpush1.bf16.msra.mxu0 %v2307
        %2341 = vmatprep.subr.bf16.mxu0 0
        %2342 = vmatpush1.bf16.msra.mxu0 0
        %2343 = vmatprep.subr.bf16.mxu0 0
        %2344 = vmatpush1.bf16.msra.mxu0 0
        %2345 = vmatprep.subr.bf16.mxu0 0
        %2346 = vmatpush1.bf16.msra.mxu0 0
        %2347 = vmatprep.subr.bf16.mxu0 0
        %2348 = vmatpush1.bf16.msra.mxu0 0
        %2349 = vmatprep.subr.bf16.mxu0 0
        %2350 = vmatpush1.bf16.msra.mxu0 0
        %2351 = vmatprep.subr.bf16.mxu0 0
        %2352 = vmatpush1.bf16.msra.mxu0 0
        %2353 = vmatprep.subr.bf16.mxu0 0
        %2354 = vmatpush1.bf16.msra.mxu0 0
        %2355 = vmatprep.subr.bf16.mxu0 0
        %2356 = vmatpush1.bf16.msra.mxu0 0
        %2357 = vmatprep.mubr.bf16.mxu0 0
        %2358 = vmatmul.mubr.bf16.gmra.mrb[0].mxu0 %v351
        %v2359 = vpop.f32.mrb[0].mxu0
        %v2360 = vadd.f32 0.0, %v2359
        %v2361 = vpop.f32.mrb[0].mxu0
        %v2362 = vadd.f32 0.0, %v2361
        %v2363 = vpop.f32.mrb[0].mxu0
        %v2364 = vadd.f32 0.0, %v2363
        %v2365 = vpop.f32.mrb[0].mxu0
        %v2366 = vadd.f32 0.0, %v2365
        %2367 = vmatprep.mubr.bf16.mxu0 0
        %2368 = vmatmul.mubr.bf16.gmra.mrb[0].mxu0 %v352
        %v2369 = vpop.f32.mrb[0].mxu0
        %v2370 = vadd.f32 0.0, %v2369
        %v2371 = vpop.f32.mrb[0].mxu0
        %v2372 = vadd.f32 0.0, %v2371
        %v2373 = vpop.f32.mrb[0].mxu0
        %v2374 = vadd.f32 0.0, %v2373
        %v2375 = vpop.f32.mrb[0].mxu0
        %v2376 = vadd.f32 0.0, %v2375
        %2377 = vmatprep.mubr.bf16.mxu0 0
        %2378 = vmatmul.mubr.bf16.gmra.mrb[0].mxu0 %v353
        %v2379 = vpop.f32.mrb[0].mxu0
        %v2380 = vadd.f32 0.0, %v2379
        %v2381 = vpop.f32.mrb[0].mxu0
        %v2382 = vadd.f32 0.0, %v2381
        %v2383 = vpop.f32.mrb[0].mxu0
        %v2384 = vadd.f32 0.0, %v2383
        %v2385 = vpop.f32.mrb[0].mxu0
        %v2386 = vadd.f32 0.0, %v2385
        %2387 = vmatprep.mubr.bf16.mxu0 0
        %2388 = vmatmul.mubr.bf16.gmra.mrb[0].mxu0 %v354
        %v2389 = vpop.f32.mrb[0].mxu0
        %v2390 = vadd.f32 0.0, %v2389
        %v2391 = vpop.f32.mrb[0].mxu0
        %v2392 = vadd.f32 0.0, %v2391
        %v2393 = vpop.f32.mrb[0].mxu0
        %v2394 = vadd.f32 0.0, %v2393
        %v2395 = vpop.f32.mrb[0].mxu0
        %v2396 = vadd.f32 0.0, %v2395
        %2397 = vmatprep.mubr.bf16.mxu0 0
        %2398 = vmatmul.mubr.bf16.gmra.mrb[0].mxu0 %v355
        %v2399 = vpop.f32.mrb[0].mxu0
        %v2400 = vadd.f32 0.0, %v2399
        %v2401 = vpop.f32.mrb[0].mxu0
        %v2402 = vadd.f32 0.0, %v2401
        %v2403 = vpop.f32.mrb[0].mxu0
        %v2404 = vadd.f32 0.0, %v2403
        %v2405 = vpop.f32.mrb[0].mxu0
        %v2406 = vadd.f32 0.0, %v2405
        %2407 = vmatprep.mubr.bf16.mxu0 0
        %2408 = vmatmul.mubr.bf16.gmra.mrb[0].mxu0 %v356
        %v2409 = vpop.f32.mrb[0].mxu0
        %v2410 = vadd.f32 0.0, %v2409
        %v2411 = vpop.f32.mrb[0].mxu0
        %v2412 = vadd.f32 0.0, %v2411
        %v2413 = vpop.f32.mrb[0].mxu0
        %v2414 = vadd.f32 0.0, %v2413
        %v2415 = vpop.f32.mrb[0].mxu0
        %v2416 = vadd.f32 0.0, %v2415
        %2417 = vmatprep.mubr.bf16.mxu0 0
        %2418 = vmatmul.mubr.bf16.gmra.mrb[0].mxu0 %v357
        %v2419 = vpop.f32.mrb[0].mxu0
        %v2420 = vadd.f32 0.0, %v2419
        %v2421 = vpop.f32.mrb[0].mxu0
        %v2422 = vadd.f32 0.0, %v2421
        %v2423 = vpop.f32.mrb[0].mxu0
        %v2424 = vadd.f32 0.0, %v2423
        %v2425 = vpop.f32.mrb[0].mxu0
        %v2426 = vadd.f32 0.0, %v2425
        %2427 = vmatprep.mubr.bf16.mxu0 0
        %2428 = vmatmul.mubr.bf16.gmra.mrb[0].mxu0 %v358
        %v2429 = vpop.f32.mrb[0].mxu0
        %v2430 = vadd.f32 0.0, %v2429
        %v2431 = vpop.f32.mrb[0].mxu0
        %v2432 = vadd.f32 0.0, %v2431
        %v2433 = vpop.f32.mrb[0].mxu0
        %v2434 = vadd.f32 0.0, %v2433
        %v2435 = vpop.f32.mrb[0].mxu0
        %v2436 = vadd.f32 0.0, %v2435
        %2437 = vmatprep.mubr.bf16.mxu0 0
        %2438 = vmatmul.mubr.bf16.gmra.mrb[0].mxu0 %v359
        %v2439 = vpop.f32.mrb[0].mxu0
        %v2440 = vadd.f32 0.0, %v2439
        %v2441 = vpop.f32.mrb[0].mxu0
        %v2442 = vadd.f32 0.0, %v2441
        %v2443 = vpop.f32.mrb[0].mxu0
        %v2444 = vadd.f32 0.0, %v2443
        %v2445 = vpop.f32.mrb[0].mxu0
        %v2446 = vadd.f32 0.0, %v2445
        %2447 = vmatprep.mubr.bf16.mxu0 0
        %2448 = vmatmul.mubr.bf16.gmra.mrb[0].mxu0 %v360
        %v2449 = vpop.f32.mrb[0].mxu0
        %v2450 = vadd.f32 0.0, %v2449
        %v2451 = vpop.f32.mrb[0].mxu0
        %v2452 = vadd.f32 0.0, %v2451
        %v2453 = vpop.f32.mrb[0].mxu0
        %v2454 = vadd.f32 0.0, %v2453
        %v2455 = vpop.f32.mrb[0].mxu0
        %v2456 = vadd.f32 0.0, %v2455
        %2457 = vmatprep.mubr.bf16.mxu0 0
        %2458 = vmatmul.mubr.bf16.gmra.mrb[0].mxu0 %v361
        %v2459 = vpop.f32.mrb[0].mxu0
        %v2460 = vadd.f32 0.0, %v2459
        %v2461 = vpop.f32.mrb[0].mxu0
        %v2462 = vadd.f32 0.0, %v2461
        %v2463 = vpop.f32.mrb[0].mxu0
        %v2464 = vadd.f32 0.0, %v2463
        %v2465 = vpop.f32.mrb[0].mxu0
        %v2466 = vadd.f32 0.0, %v2465
        %2467 = vmatprep.mubr.bf16.mxu0 0
        %2468 = vmatmul.mubr.bf16.gmra.mrb[0].mxu0 %v362
        %v2469 = vpop.f32.mrb[0].mxu0
        %v2470 = vadd.f32 0.0, %v2469
        %v2471 = vpop.f32.mrb[0].mxu0
        %v2472 = vadd.f32 0.0, %v2471
        %v2473 = vpop.f32.mrb[0].mxu0
        %v2474 = vadd.f32 0.0, %v2473
        %v2475 = vpop.f32.mrb[0].mxu0
        %v2476 = vadd.f32 0.0, %v2475
        %2477 = vmatprep.mubr.bf16.mxu0 0
        %2478 = vmatmul.mubr.bf16.gmra.mrb[0].mxu0 %v363
        %v2479 = vpop.f32.mrb[0].mxu0
        %v2480 = vadd.f32 0.0, %v2479
        %v2481 = vpop.f32.mrb[0].mxu0
        %v2482 = vadd.f32 0.0, %v2481
        %v2483 = vpop.f32.mrb[0].mxu0
        %v2484 = vadd.f32 0.0, %v2483
        %v2485 = vpop.f32.mrb[0].mxu0
        %v2486 = vadd.f32 0.0, %v2485
        %2487 = vmatprep.mubr.bf16.mxu0 0
        %2488 = vmatmul.mubr.bf16.gmra.mrb[0].mxu0 %v364
        %v2489 = vpop.f32.mrb[0].mxu0
        %v2490 = vadd.f32 0.0, %v2489
        %v2491 = vpop.f32.mrb[0].mxu0
        %v2492 = vadd.f32 0.0, %v2491
        %v2493 = vpop.f32.mrb[0].mxu0
        %v2494 = vadd.f32 0.0, %v2493
        %v2495 = vpop.f32.mrb[0].mxu0
        %v2496 = vadd.f32 0.0, %v2495
        %2497 = vmatprep.mubr.bf16.mxu0 0
        %2498 = vmatmul.mubr.bf16.gmra.mrb[0].mxu0 %v365
        %v2499 = vpop.f32.mrb[0].mxu0
        %v2500 = vadd.f32 0.0, %v2499
        %v2501 = vpop.f32.mrb[0].mxu0
        %v2502 = vadd.f32 0.0, %v2501
        %v2503 = vpop.f32.mrb[0].mxu0
        %v2504 = vadd.f32 0.0, %v2503
        %v2505 = vpop.f32.mrb[0].mxu0
        %v2506 = vadd.f32 0.0, %v2505
        %2507 = vmatprep.mubr.bf16.mxu0 0
        %2508 = vmatmul.mubr.bf16.gmra.mrb[0].mxu0 %v366
        %v2509 = vpop.f32.mrb[0].mxu0
        %v2510 = vadd.f32 0.0, %v2509
        %v2511 = vpop.f32.mrb[0].mxu0
        %v2512 = vadd.f32 0.0, %v2511
        %v2513 = vpop.f32.mrb[0].mxu0
        %v2514 = vadd.f32 0.0, %v2513
        %v2515 = vpop.f32.mrb[0].mxu0
        %v2516 = vadd.f32 0.0, %v2515
        %2517 = vdwg.mxu0
        %v2518 = vpack.c.bf16 %v2364, %v2360
        %v2519 = vpack.c.bf16 %v2366, %v2362
        %v2520 = vpack.c.bf16 %v2374, %v2370
        %v2521 = vpack.c.bf16 %v2376, %v2372
        %v2522 = vpack.c.bf16 %v2384, %v2380
        %v2523 = vpack.c.bf16 %v2386, %v2382
        %v2524 = vpack.c.bf16 %v2394, %v2390
        %v2525 = vpack.c.bf16 %v2396, %v2392
        %v2526 = vpack.c.bf16 %v2404, %v2400
        %v2527 = vpack.c.bf16 %v2406, %v2402
        %v2528 = vpack.c.bf16 %v2414, %v2410
        %v2529 = vpack.c.bf16 %v2416, %v2412
        %v2530 = vpack.c.bf16 %v2424, %v2420
        %v2531 = vpack.c.bf16 %v2426, %v2422
        %v2532 = vpack.c.bf16 %v2434, %v2430
        %v2533 = vpack.c.bf16 %v2436, %v2432
        %v2534 = vpack.c.bf16 %v2444, %v2440
        %v2535 = vpack.c.bf16 %v2446, %v2442
        %v2536 = vpack.c.bf16 %v2454, %v2450
        %v2537 = vpack.c.bf16 %v2456, %v2452
        %v2538 = vpack.c.bf16 %v2464, %v2460
        %v2539 = vpack.c.bf16 %v2466, %v2462
        %v2540 = vpack.c.bf16 %v2474, %v2470
        %v2541 = vpack.c.bf16 %v2476, %v2472
        %v2542 = vpack.c.bf16 %v2484, %v2480
        %v2543 = vpack.c.bf16 %v2486, %v2482
        %v2544 = vpack.c.bf16 %v2494, %v2490
        %v2545 = vpack.c.bf16 %v2496, %v2492
        %v2546 = vpack.c.bf16 %v2504, %v2500
        %v2547 = vpack.c.bf16 %v2506, %v2502
        %v2548 = vpack.c.bf16 %v2514, %v2510
        %v2549 = vpack.c.bf16 %v2516, %v2512
        %v2550 = vld [vmem:[#allocation6 + $0x180] sm:$0xf]
        %v2551 = vld [vmem:[#allocation6 + $0x184] sm:$0xf]
        %v2552 = vld [vmem:[#allocation6 + $0x188] sm:$0xf]
        %v2553 = vld [vmem:[#allocation6 + $0x18c] sm:$0xf]
        %v2554 = vld [vmem:[#allocation6 + $0x190] sm:$0xf]
        %v2555 = vld [vmem:[#allocation6 + $0x194] sm:$0xf]
        %v2556 = vld [vmem:[#allocation6 + $0x198] sm:$0xf]
        %v2557 = vld [vmem:[#allocation6 + $0x19c] sm:$0xf]
        %v2558 = vld [vmem:[#allocation6 + $0x1a0] sm:$0xf]
        %v2559 = vld [vmem:[#allocation6 + $0x1a4] sm:$0xf]
        %v2560 = vld [vmem:[#allocation6 + $0x1a8] sm:$0xf]
        %v2561 = vld [vmem:[#allocation6 + $0x1ac] sm:$0xf]
        %v2562 = vld [vmem:[#allocation6 + $0x1b0] sm:$0xf]
        %v2563 = vld [vmem:[#allocation6 + $0x1b4] sm:$0xf]
        %v2564 = vld [vmem:[#allocation6 + $0x1b8] sm:$0xf]
        %v2565 = vld [vmem:[#allocation6 + $0x1bc] sm:$0xf]
        %v2566 = vld [vmem:[#allocation6 + $0x1c0] sm:$0xf]
        %v2567 = vld [vmem:[#allocation6 + $0x1c4] sm:$0xf]
        %v2568 = vld [vmem:[#allocation6 + $0x1c8] sm:$0xf]
        %v2569 = vld [vmem:[#allocation6 + $0x1cc] sm:$0xf]
        %v2570 = vld [vmem:[#allocation6 + $0x1d0] sm:$0xf]
        %v2571 = vld [vmem:[#allocation6 + $0x1d4] sm:$0xf]
        %v2572 = vld [vmem:[#allocation6 + $0x1d8] sm:$0xf]
        %v2573 = vld [vmem:[#allocation6 + $0x1dc] sm:$0xf]
        %v2574 = vld [vmem:[#allocation6 + $0x1e0] sm:$0xf]
        %v2575 = vld [vmem:[#allocation6 + $0x1e4] sm:$0xf]
        %v2576 = vld [vmem:[#allocation6 + $0x1e8] sm:$0xf]
        %v2577 = vld [vmem:[#allocation6 + $0x1ec] sm:$0xf]
        %v2578 = vld [vmem:[#allocation6 + $0x1f0] sm:$0xf]
        %v2579 = vld [vmem:[#allocation6 + $0x1f4] sm:$0xf]
        %v2580 = vld [vmem:[#allocation6 + $0x1f8] sm:$0xf]
        %v2581 = vld [vmem:[#allocation6 + $0x1fc] sm:$0xf]
        %v2614 = vunpack.c.l.b16 %v2550
        %v2615 = vunpack.c.l.b16 %v2551
        %v2616 = vunpack.c.l.b16 %v2552
        %v2617 = vunpack.c.l.b16 %v2553
        %v2618 = vunpack.c.l.b16 %v2554
        %v2619 = vunpack.c.l.b16 %v2555
        %v2620 = vunpack.c.l.b16 %v2556
        %v2621 = vunpack.c.l.b16 %v2557
        %v2622 = vunpack.c.l.b16 %v2558
        %v2623 = vunpack.c.l.b16 %v2559
        %v2624 = vunpack.c.l.b16 %v2560
        %v2625 = vunpack.c.l.b16 %v2561
        %v2626 = vunpack.c.l.b16 %v2562
        %v2627 = vunpack.c.l.b16 %v2563
        %v2628 = vunpack.c.l.b16 %v2564
        %v2629 = vunpack.c.l.b16 %v2565
        %v2630 = vunpack.c.l.b16 %v2566
        %v2631 = vunpack.c.l.b16 %v2567
        %v2632 = vunpack.c.l.b16 %v2568
        %v2633 = vunpack.c.l.b16 %v2569
        %v2634 = vunpack.c.l.b16 %v2570
        %v2635 = vunpack.c.l.b16 %v2571
        %v2636 = vunpack.c.l.b16 %v2572
        %v2637 = vunpack.c.l.b16 %v2573
        %v2638 = vunpack.c.l.b16 %v2574
        %v2639 = vunpack.c.l.b16 %v2575
        %v2640 = vunpack.c.l.b16 %v2576
        %v2641 = vunpack.c.l.b16 %v2577
        %v2642 = vunpack.c.l.b16 %v2578
        %v2643 = vunpack.c.l.b16 %v2579
        %v2644 = vunpack.c.l.b16 %v2580
        %v2645 = vunpack.c.l.b16 %v2581
        %v2646 = vpack.c.b16 %v2615, %v2614
        %v2647 = vpack.c.b16 %v2617, %v2616
        %v2648 = vpack.c.b16 %v2619, %v2618
        %v2649 = vpack.c.b16 %v2621, %v2620
        %v2650 = vpack.c.b16 %v2623, %v2622
        %v2651 = vpack.c.b16 %v2625, %v2624
        %v2652 = vpack.c.b16 %v2627, %v2626
        %v2653 = vpack.c.b16 %v2629, %v2628
        %v2654 = vpack.c.b16 %v2631, %v2630
        %v2655 = vpack.c.b16 %v2633, %v2632
        %v2656 = vpack.c.b16 %v2635, %v2634
        %v2657 = vpack.c.b16 %v2637, %v2636
        %v2658 = vpack.c.b16 %v2639, %v2638
        %v2659 = vpack.c.b16 %v2641, %v2640
        %v2660 = vpack.c.b16 %v2643, %v2642
        %v2661 = vpack.c.b16 %v2645, %v2644
        %2678 = vmatprep.subr.bf16.mxu0 0
        %2679 = vmatpush1.bf16.msra.mxu0 %v2646
        %2680 = vmatprep.subr.bf16.mxu0 0
        %2681 = vmatpush1.bf16.msra.mxu0 %v2647
        %2682 = vmatprep.subr.bf16.mxu0 0
        %2683 = vmatpush1.bf16.msra.mxu0 %v2648
        %2684 = vmatprep.subr.bf16.mxu0 0
        %2685 = vmatpush1.bf16.msra.mxu0 %v2649
        %2686 = vmatprep.subr.bf16.mxu0 0
        %2687 = vmatpush1.bf16.msra.mxu0 %v2650
        %2688 = vmatprep.subr.bf16.mxu0 0
        %2689 = vmatpush1.bf16.msra.mxu0 %v2651
        %2690 = vmatprep.subr.bf16.mxu0 0
        %2691 = vmatpush1.bf16.msra.mxu0 %v2652
        %2692 = vmatprep.subr.bf16.mxu0 0
        %2693 = vmatpush1.bf16.msra.mxu0 %v2653
        %2694 = vmatprep.subr.bf16.mxu0 0
        %2695 = vmatpush1.bf16.msra.mxu0 %v2654
        %2696 = vmatprep.subr.bf16.mxu0 0
        %2697 = vmatpush1.bf16.msra.mxu0 %v2655
        %2698 = vmatprep.subr.bf16.mxu0 0
        %2699 = vmatpush1.bf16.msra.mxu0 %v2656
        %2700 = vmatprep.subr.bf16.mxu0 0
        %2701 = vmatpush1.bf16.msra.mxu0 %v2657
        %2702 = vmatprep.subr.bf16.mxu0 0
        %2703 = vmatpush1.bf16.msra.mxu0 %v2658
        %2704 = vmatprep.subr.bf16.mxu0 0
        %2705 = vmatpush1.bf16.msra.mxu0 %v2659
        %2706 = vmatprep.subr.bf16.mxu0 0
        %2707 = vmatpush1.bf16.msra.mxu0 %v2660
        %2708 = vmatprep.subr.bf16.mxu0 0
        %2709 = vmatpush1.bf16.msra.mxu0 %v2661
        %2710 = vmatprep.mubr.bf16.mxu0 %v2519
        %2711 = vmatmul.mubr.bf16.gmra.mrb[0].mxu0 %v2518
        %v2712 = vpop.f32.mrb[0].mxu0
        %v2713 = vadd.f32 0.0, %v2712
        %v2714 = vpop.f32.mrb[0].mxu0
        %v2715 = vpop.f32.mrb[0].mxu0
        %v2716 = vadd.f32 0.0, %v2715
        %v2717 = vpop.f32.mrb[0].mxu0
        %2718 = vmatprep.mubr.bf16.mxu0 %v2521
        %2719 = vmatmul.mubr.bf16.gmra.mrb[0].mxu0 %v2520
        %v2720 = vpop.f32.mrb[0].mxu0
        %v2721 = vadd.f32 0.0, %v2720
        %v2722 = vpop.f32.mrb[0].mxu0
        %v2723 = vpop.f32.mrb[0].mxu0
        %v2724 = vadd.f32 0.0, %v2723
        %v2725 = vpop.f32.mrb[0].mxu0
        %2726 = vmatprep.mubr.bf16.mxu0 %v2523
        %2727 = vmatmul.mubr.bf16.gmra.mrb[0].mxu0 %v2522
        %v2728 = vpop.f32.mrb[0].mxu0
        %v2729 = vadd.f32 0.0, %v2728
        %v2730 = vpop.f32.mrb[0].mxu0
        %v2731 = vpop.f32.mrb[0].mxu0
        %v2732 = vadd.f32 0.0, %v2731
        %v2733 = vpop.f32.mrb[0].mxu0
        %2734 = vmatprep.mubr.bf16.mxu0 %v2525
        %2735 = vmatmul.mubr.bf16.gmra.mrb[0].mxu0 %v2524
        %v2736 = vpop.f32.mrb[0].mxu0
        %v2737 = vadd.f32 0.0, %v2736
        %v2738 = vpop.f32.mrb[0].mxu0
        %v2739 = vpop.f32.mrb[0].mxu0
        %v2740 = vadd.f32 0.0, %v2739
        %v2741 = vpop.f32.mrb[0].mxu0
        %2742 = vmatprep.mubr.bf16.mxu0 %v2527
        %2743 = vmatmul.mubr.bf16.gmra.mrb[0].mxu0 %v2526
        %v2744 = vpop.f32.mrb[0].mxu0
        %v2745 = vadd.f32 0.0, %v2744
        %v2746 = vpop.f32.mrb[0].mxu0
        %v2747 = vpop.f32.mrb[0].mxu0
        %v2748 = vadd.f32 0.0, %v2747
        %v2749 = vpop.f32.mrb[0].mxu0
        %2750 = vmatprep.mubr.bf16.mxu0 %v2529
        %2751 = vmatmul.mubr.bf16.gmra.mrb[0].mxu0 %v2528
        %v2752 = vpop.f32.mrb[0].mxu0
        %v2753 = vadd.f32 0.0, %v2752
        %v2754 = vpop.f32.mrb[0].mxu0
        %v2755 = vpop.f32.mrb[0].mxu0
        %v2756 = vadd.f32 0.0, %v2755
        %v2757 = vpop.f32.mrb[0].mxu0
        %2758 = vmatprep.mubr.bf16.mxu0 %v2531
        %2759 = vmatmul.mubr.bf16.gmra.mrb[0].mxu0 %v2530
        %v2760 = vpop.f32.mrb[0].mxu0
        %v2761 = vadd.f32 0.0, %v2760
        %v2762 = vpop.f32.mrb[0].mxu0
        %v2763 = vpop.f32.mrb[0].mxu0
        %v2764 = vadd.f32 0.0, %v2763
        %v2765 = vpop.f32.mrb[0].mxu0
        %2766 = vmatprep.mubr.bf16.mxu0 %v2533
        %2767 = vmatmul.mubr.bf16.gmra.mrb[0].mxu0 %v2532
        %v2768 = vpop.f32.mrb[0].mxu0
        %v2769 = vadd.f32 0.0, %v2768
        %v2770 = vpop.f32.mrb[0].mxu0
        %v2771 = vpop.f32.mrb[0].mxu0
        %v2772 = vadd.f32 0.0, %v2771
        %v2773 = vpop.f32.mrb[0].mxu0
        %2774 = vmatprep.mubr.bf16.mxu0 %v2535
        %2775 = vmatmul.mubr.bf16.gmra.mrb[0].mxu0 %v2534
        %v2776 = vpop.f32.mrb[0].mxu0
        %v2777 = vadd.f32 0.0, %v2776
        %v2778 = vpop.f32.mrb[0].mxu0
        %v2779 = vpop.f32.mrb[0].mxu0
        %v2780 = vadd.f32 0.0, %v2779
        %v2781 = vpop.f32.mrb[0].mxu0
        %2782 = vmatprep.mubr.bf16.mxu0 %v2537
        %2783 = vmatmul.mubr.bf16.gmra.mrb[0].mxu0 %v2536
        %v2784 = vpop.f32.mrb[0].mxu0
        %v2785 = vadd.f32 0.0, %v2784
        %v2786 = vpop.f32.mrb[0].mxu0
        %v2787 = vpop.f32.mrb[0].mxu0
        %v2788 = vadd.f32 0.0, %v2787
        %v2789 = vpop.f32.mrb[0].mxu0
        %2790 = vmatprep.mubr.bf16.mxu0 %v2539
        %2791 = vmatmul.mubr.bf16.gmra.mrb[0].mxu0 %v2538
        %v2792 = vpop.f32.mrb[0].mxu0
        %v2793 = vadd.f32 0.0, %v2792
        %v2794 = vpop.f32.mrb[0].mxu0
        %v2795 = vpop.f32.mrb[0].mxu0
        %v2796 = vadd.f32 0.0, %v2795
        %v2797 = vpop.f32.mrb[0].mxu0
        %2798 = vmatprep.mubr.bf16.mxu0 %v2541
        %2799 = vmatmul.mubr.bf16.gmra.mrb[0].mxu0 %v2540
        %v2800 = vpop.f32.mrb[0].mxu0
        %v2801 = vadd.f32 0.0, %v2800
        %v2802 = vpop.f32.mrb[0].mxu0
        %v2803 = vpop.f32.mrb[0].mxu0
        %v2804 = vadd.f32 0.0, %v2803
        %v2805 = vpop.f32.mrb[0].mxu0
        %2806 = vmatprep.mubr.bf16.mxu0 %v2543
        %2807 = vmatmul.mubr.bf16.gmra.mrb[0].mxu0 %v2542
        %v2808 = vpop.f32.mrb[0].mxu0
        %v2809 = vadd.f32 0.0, %v2808
        %v2810 = vpop.f32.mrb[0].mxu0
        %v2811 = vpop.f32.mrb[0].mxu0
        %v2812 = vadd.f32 0.0, %v2811
        %v2813 = vpop.f32.mrb[0].mxu0
        %2814 = vmatprep.mubr.bf16.mxu0 %v2545
        %2815 = vmatmul.mubr.bf16.gmra.mrb[0].mxu0 %v2544
        %v2816 = vpop.f32.mrb[0].mxu0
        %v2817 = vadd.f32 0.0, %v2816
        %v2818 = vpop.f32.mrb[0].mxu0
        %v2819 = vpop.f32.mrb[0].mxu0
        %v2820 = vadd.f32 0.0, %v2819
        %v2821 = vpop.f32.mrb[0].mxu0
        %2822 = vmatprep.mubr.bf16.mxu0 %v2547
        %2823 = vmatmul.mubr.bf16.gmra.mrb[0].mxu0 %v2546
        %v2824 = vpop.f32.mrb[0].mxu0
        %v2825 = vadd.f32 0.0, %v2824
        %v2826 = vpop.f32.mrb[0].mxu0
        %v2827 = vpop.f32.mrb[0].mxu0
        %v2828 = vadd.f32 0.0, %v2827
        %v2829 = vpop.f32.mrb[0].mxu0
        %2830 = vmatprep.mubr.bf16.mxu0 %v2549
        %2831 = vmatmul.mubr.bf16.gmra.mrb[0].mxu0 %v2548
        %v2832 = vpop.f32.mrb[0].mxu0
        %v2833 = vadd.f32 0.0, %v2832
        %v2834 = vpop.f32.mrb[0].mxu0
        %v2835 = vpop.f32.mrb[0].mxu0
        %v2836 = vadd.f32 0.0, %v2835
        %v2837 = vpop.f32.mrb[0].mxu0
        %2838 = vdwg.mxu0
        %v2839 = vadd.f32 %v2197, %v2713
        %v2840 = vadd.f32 %v2198, %v2716
        %v2841 = vadd.f32 %v2199, %v2721
        %v2842 = vadd.f32 %v2200, %v2724
        %v2843 = vadd.f32 %v2201, %v2729
        %v2844 = vadd.f32 %v2202, %v2732
        %v2845 = vadd.f32 %v2203, %v2737
        %v2846 = vadd.f32 %v2204, %v2740
        %v2847 = vadd.f32 %v2205, %v2745
        %v2848 = vadd.f32 %v2206, %v2748
        %v2849 = vadd.f32 %v2207, %v2753
        %v2850 = vadd.f32 %v2208, %v2756
        %v2851 = vadd.f32 %v2209, %v2761
        %v2852 = vadd.f32 %v2210, %v2764
        %v2853 = vadd.f32 %v2211, %v2769
        %v2854 = vadd.f32 %v2212, %v2772
        %v2855 = vadd.f32 %v2213, %v2777
        %v2856 = vadd.f32 %v2214, %v2780
        %v2857 = vadd.f32 %v2215, %v2785
        %v2858 = vadd.f32 %v2216, %v2788
        %v2859 = vadd.f32 %v2217, %v2793
        %v2860 = vadd.f32 %v2218, %v2796
        %v2861 = vadd.f32 %v2219, %v2801
        %v2862 = vadd.f32 %v2220, %v2804
        %v2863 = vadd.f32 %v2221, %v2809
        %v2864 = vadd.f32 %v2222, %v2812
        %v2865 = vadd.f32 %v2223, %v2817
        %v2866 = vadd.f32 %v2224, %v2820
        %v2867 = vadd.f32 %v2225, %v2825
        %v2868 = vadd.f32 %v2226, %v2828
        %v2869 = vadd.f32 %v2227, %v2833
        %v2870 = vadd.f32 %v2228, %v2836
        %v2871 = vld [vmem:[#allocation4 + $0x20] sm:$0xf]
        %v2872 = vld [vmem:[#allocation4 + $0x44] sm:$0xf]
        %v2873 = vld [vmem:[#allocation4 + $0x68] sm:$0xf]
        %v2874 = vld [vmem:[#allocation4 + $0x8c] sm:$0xf]
        %v2875 = vld [vmem:[#allocation4 + $0xb0] sm:$0xf]
        %v2876 = vld [vmem:[#allocation4 + $0xd4] sm:$0xf]
        %v2877 = vld [vmem:[#allocation4 + $0xf8] sm:$0xf]
        %v2878 = vld [vmem:[#allocation4 + $0x11c] sm:$0xf]
        %v2879 = vld [vmem:[#allocation4 + $0x140] sm:$0xf]
        %v2880 = vld [vmem:[#allocation4 + $0x164] sm:$0xf]
        %v2881 = vld [vmem:[#allocation4 + $0x188] sm:$0xf]
        %v2882 = vld [vmem:[#allocation4 + $0x1ac] sm:$0xf]
        %v2883 = vld [vmem:[#allocation4 + $0x1d0] sm:$0xf]
        %v2884 = vld [vmem:[#allocation4 + $0x1f4] sm:$0xf]
        %v2885 = vld [vmem:[#allocation4 + $0x218] sm:$0xf]
        %v2886 = vld [vmem:[#allocation4 + $0x23c] sm:$0xf]
        %v2903 = vunpack.c.l.b16 %v2871
        %v2904 = vunpack.c.l.b16 %v2872
        %v2905 = vunpack.c.l.b16 %v2873
        %v2906 = vunpack.c.l.b16 %v2874
        %v2907 = vunpack.c.l.b16 %v2875
        %v2908 = vunpack.c.l.b16 %v2876
        %v2909 = vunpack.c.l.b16 %v2877
        %v2910 = vunpack.c.l.b16 %v2878
        %v2911 = vunpack.c.l.b16 %v2879
        %v2912 = vunpack.c.l.b16 %v2880
        %v2913 = vunpack.c.l.b16 %v2881
        %v2914 = vunpack.c.l.b16 %v2882
        %v2915 = vunpack.c.l.b16 %v2883
        %v2916 = vunpack.c.l.b16 %v2884
        %v2917 = vunpack.c.l.b16 %v2885
        %v2918 = vunpack.c.l.b16 %v2886
        %v2919 = vpack.c.b16 %v2904, %v2903
        %v2920 = vpack.c.b16 %v2906, %v2905
        %v2921 = vpack.c.b16 %v2908, %v2907
        %v2922 = vpack.c.b16 %v2910, %v2909
        %v2923 = vpack.c.b16 %v2912, %v2911
        %v2924 = vpack.c.b16 %v2914, %v2913
        %v2925 = vpack.c.b16 %v2916, %v2915
        %v2926 = vpack.c.b16 %v2918, %v2917
        %2935 = vmatprep.subr.bf16.mxu0 0
        %2936 = vmatpush1.bf16.msra.mxu0 %v2919
        %2937 = vmatprep.subr.bf16.mxu0 0
        %2938 = vmatpush1.bf16.msra.mxu0 %v2920
        %2939 = vmatprep.subr.bf16.mxu0 0
        %2940 = vmatpush1.bf16.msra.mxu0 %v2921
        %2941 = vmatprep.subr.bf16.mxu0 0
        %2942 = vmatpush1.bf16.msra.mxu0 %v2922
        %2943 = vmatprep.subr.bf16.mxu0 0
        %2944 = vmatpush1.bf16.msra.mxu0 %v2923
        %2945 = vmatprep.subr.bf16.mxu0 0
        %2946 = vmatpush1.bf16.msra.mxu0 %v2924
        %2947 = vmatprep.subr.bf16.mxu0 0
        %2948 = vmatpush1.bf16.msra.mxu0 %v2925
        %2949 = vmatprep.subr.bf16.mxu0 0
        %2950 = vmatpush1.bf16.msra.mxu0 %v2926
        %2951 = vmatprep.subr.bf16.mxu0 0
        %2952 = vmatpush1.bf16.msra.mxu0 0
        %2953 = vmatprep.subr.bf16.mxu0 0
        %2954 = vmatpush1.bf16.msra.mxu0 0
        %2955 = vmatprep.subr.bf16.mxu0 0
        %2956 = vmatpush1.bf16.msra.mxu0 0
        %2957 = vmatprep.subr.bf16.mxu0 0
        %2958 = vmatpush1.bf16.msra.mxu0 0
        %2959 = vmatprep.subr.bf16.mxu0 0
        %2960 = vmatpush1.bf16.msra.mxu0 0
        %2961 = vmatprep.subr.bf16.mxu0 0
        %2962 = vmatpush1.bf16.msra.mxu0 0
        %2963 = vmatprep.subr.bf16.mxu0 0
        %2964 = vmatpush1.bf16.msra.mxu0 0
        %2965 = vmatprep.subr.bf16.mxu0 0
        %2966 = vmatpush1.bf16.msra.mxu0 0
        %2967 = vmatprep.mubr.bf16.mxu0 0
        %2968 = vmatmul.mubr.bf16.gmra.mrb[0].mxu0 %v351
        %v2969 = vpop.f32.mrb[0].mxu0
        %v2970 = vadd.f32 0.0, %v2969
        %v2971 = vpop.f32.mrb[0].mxu0
        %v2972 = vpop.f32.mrb[0].mxu0
        %v2973 = vadd.f32 0.0, %v2972
        %v2974 = vpop.f32.mrb[0].mxu0
        %2975 = vmatprep.mubr.bf16.mxu0 0
        %2976 = vmatmul.mubr.bf16.gmra.mrb[0].mxu0 %v352
        %v2977 = vpop.f32.mrb[0].mxu0
        %v2978 = vadd.f32 0.0, %v2977
        %v2979 = vpop.f32.mrb[0].mxu0
        %v2980 = vpop.f32.mrb[0].mxu0
        %v2981 = vadd.f32 0.0, %v2980
        %v2982 = vpop.f32.mrb[0].mxu0
        %2983 = vmatprep.mubr.bf16.mxu0 0
        %2984 = vmatmul.mubr.bf16.gmra.mrb[0].mxu0 %v353
        %v2985 = vpop.f32.mrb[0].mxu0
        %v2986 = vadd.f32 0.0, %v2985
        %v2987 = vpop.f32.mrb[0].mxu0
        %v2988 = vpop.f32.mrb[0].mxu0
        %v2989 = vadd.f32 0.0, %v2988
        %v2990 = vpop.f32.mrb[0].mxu0
        %2991 = vmatprep.mubr.bf16.mxu0 0
        %2992 = vmatmul.mubr.bf16.gmra.mrb[0].mxu0 %v354
        %v2993 = vpop.f32.mrb[0].mxu0
        %v2994 = vadd.f32 0.0, %v2993
        %v2995 = vpop.f32.mrb[0].mxu0
        %v2996 = vpop.f32.mrb[0].mxu0
        %v2997 = vadd.f32 0.0, %v2996
        %v2998 = vpop.f32.mrb[0].mxu0
        %2999 = vmatprep.mubr.bf16.mxu0 0
        %3000 = vmatmul.mubr.bf16.gmra.mrb[0].mxu0 %v355
        %v3001 = vpop.f32.mrb[0].mxu0
        %v3002 = vadd.f32 0.0, %v3001
        %v3003 = vpop.f32.mrb[0].mxu0
        %v3004 = vpop.f32.mrb[0].mxu0
        %v3005 = vadd.f32 0.0, %v3004
        %v3006 = vpop.f32.mrb[0].mxu0
        %3007 = vmatprep.mubr.bf16.mxu0 0
        %3008 = vmatmul.mubr.bf16.gmra.mrb[0].mxu0 %v356
        %v3009 = vpop.f32.mrb[0].mxu0
        %v3010 = vadd.f32 0.0, %v3009
        %v3011 = vpop.f32.mrb[0].mxu0
        %v3012 = vpop.f32.mrb[0].mxu0
        %v3013 = vadd.f32 0.0, %v3012
        %v3014 = vpop.f32.mrb[0].mxu0
        %3015 = vmatprep.mubr.bf16.mxu0 0
        %3016 = vmatmul.mubr.bf16.gmra.mrb[0].mxu0 %v357
        %v3017 = vpop.f32.mrb[0].mxu0
        %v3018 = vadd.f32 0.0, %v3017
        %v3019 = vpop.f32.mrb[0].mxu0
        %v3020 = vpop.f32.mrb[0].mxu0
        %v3021 = vadd.f32 0.0, %v3020
        %v3022 = vpop.f32.mrb[0].mxu0
        %3023 = vmatprep.mubr.bf16.mxu0 0
        %3024 = vmatmul.mubr.bf16.gmra.mrb[0].mxu0 %v358
        %v3025 = vpop.f32.mrb[0].mxu0
        %v3026 = vadd.f32 0.0, %v3025
        %v3027 = vpop.f32.mrb[0].mxu0
        %v3028 = vpop.f32.mrb[0].mxu0
        %v3029 = vadd.f32 0.0, %v3028
        %v3030 = vpop.f32.mrb[0].mxu0
        %3031 = vmatprep.mubr.bf16.mxu0 0
        %3032 = vmatmul.mubr.bf16.gmra.mrb[0].mxu0 %v359
        %v3033 = vpop.f32.mrb[0].mxu0
        %v3034 = vadd.f32 0.0, %v3033
        %v3035 = vpop.f32.mrb[0].mxu0
        %v3036 = vpop.f32.mrb[0].mxu0
        %v3037 = vadd.f32 0.0, %v3036
        %v3038 = vpop.f32.mrb[0].mxu0
        %3039 = vmatprep.mubr.bf16.mxu0 0
        %3040 = vmatmul.mubr.bf16.gmra.mrb[0].mxu0 %v360
        %v3041 = vpop.f32.mrb[0].mxu0
        %v3042 = vadd.f32 0.0, %v3041
        %v3043 = vpop.f32.mrb[0].mxu0
        %v3044 = vpop.f32.mrb[0].mxu0
        %v3045 = vadd.f32 0.0, %v3044
        %v3046 = vpop.f32.mrb[0].mxu0
        %3047 = vmatprep.mubr.bf16.mxu0 0
        %3048 = vmatmul.mubr.bf16.gmra.mrb[0].mxu0 %v361
        %v3049 = vpop.f32.mrb[0].mxu0
        %v3050 = vadd.f32 0.0, %v3049
        %v3051 = vpop.f32.mrb[0].mxu0
        %v3052 = vpop.f32.mrb[0].mxu0
        %v3053 = vadd.f32 0.0, %v3052
        %v3054 = vpop.f32.mrb[0].mxu0
        %3055 = vmatprep.mubr.bf16.mxu0 0
        %3056 = vmatmul.mubr.bf16.gmra.mrb[0].mxu0 %v362
        %v3057 = vpop.f32.mrb[0].mxu0
        %v3058 = vadd.f32 0.0, %v3057
        %v3059 = vpop.f32.mrb[0].mxu0
        %v3060 = vpop.f32.mrb[0].mxu0
        %v3061 = vadd.f32 0.0, %v3060
        %v3062 = vpop.f32.mrb[0].mxu0
        %3063 = vmatprep.mubr.bf16.mxu0 0
        %3064 = vmatmul.mubr.bf16.gmra.mrb[0].mxu0 %v363
        %v3065 = vpop.f32.mrb[0].mxu0
        %v3066 = vadd.f32 0.0, %v3065
        %v3067 = vpop.f32.mrb[0].mxu0
        %v3068 = vpop.f32.mrb[0].mxu0
        %v3069 = vadd.f32 0.0, %v3068
        %v3070 = vpop.f32.mrb[0].mxu0
        %3071 = vmatprep.mubr.bf16.mxu0 0
        %3072 = vmatmul.mubr.bf16.gmra.mrb[0].mxu0 %v364
        %v3073 = vpop.f32.mrb[0].mxu0
        %v3074 = vadd.f32 0.0, %v3073
        %v3075 = vpop.f32.mrb[0].mxu0
        %v3076 = vpop.f32.mrb[0].mxu0
        %v3077 = vadd.f32 0.0, %v3076
        %v3078 = vpop.f32.mrb[0].mxu0
        %3079 = vmatprep.mubr.bf16.mxu0 0
        %3080 = vmatmul.mubr.bf16.gmra.mrb[0].mxu0 %v365
        %v3081 = vpop.f32.mrb[0].mxu0
        %v3082 = vadd.f32 0.0, %v3081
        %v3083 = vpop.f32.mrb[0].mxu0
        %v3084 = vpop.f32.mrb[0].mxu0
        %v3085 = vadd.f32 0.0, %v3084
        %v3086 = vpop.f32.mrb[0].mxu0
        %3087 = vmatprep.mubr.bf16.mxu0 0
        %3088 = vmatmul.mubr.bf16.gmra.mrb[0].mxu0 %v366
        %v3089 = vpop.f32.mrb[0].mxu0
        %v3090 = vadd.f32 0.0, %v3089
        %v3091 = vpop.f32.mrb[0].mxu0
        %v3092 = vpop.f32.mrb[0].mxu0
        %v3093 = vadd.f32 0.0, %v3092
        %v3094 = vpop.f32.mrb[0].mxu0
        %3095 = vdwg.mxu0
        %v3096 = vpack.c.bf16 %v2973, %v2970
        %v3097 = vpack.c.bf16 %v2981, %v2978
        %v3098 = vpack.c.bf16 %v2989, %v2986
        %v3099 = vpack.c.bf16 %v2997, %v2994
        %v3100 = vpack.c.bf16 %v3005, %v3002
        %v3101 = vpack.c.bf16 %v3013, %v3010
        %v3102 = vpack.c.bf16 %v3021, %v3018
        %v3103 = vpack.c.bf16 %v3029, %v3026
        %v3104 = vpack.c.bf16 %v3037, %v3034
        %v3105 = vpack.c.bf16 %v3045, %v3042
        %v3106 = vpack.c.bf16 %v3053, %v3050
        %v3107 = vpack.c.bf16 %v3061, %v3058
        %v3108 = vpack.c.bf16 %v3069, %v3066
        %v3109 = vpack.c.bf16 %v3077, %v3074
        %v3110 = vpack.c.bf16 %v3085, %v3082
        %v3111 = vpack.c.bf16 %v3093, %v3090
        %v3112 = vld [vmem:[#allocation6 + $0x200] sm:$0xf]
        %v3113 = vld [vmem:[#allocation6 + $0x204] sm:$0xf]
        %v3114 = vld [vmem:[#allocation6 + $0x208] sm:$0xf]
        %v3115 = vld [vmem:[#allocation6 + $0x20c] sm:$0xf]
        %v3116 = vld [vmem:[#allocation6 + $0x210] sm:$0xf]
        %v3117 = vld [vmem:[#allocation6 + $0x214] sm:$0xf]
        %v3118 = vld [vmem:[#allocation6 + $0x218] sm:$0xf]
        %v3119 = vld [vmem:[#allocation6 + $0x21c] sm:$0xf]
        %v3120 = vld [vmem:[#allocation6 + $0x220] sm:$0xf]
        %v3121 = vld [vmem:[#allocation6 + $0x224] sm:$0xf]
        %v3122 = vld [vmem:[#allocation6 + $0x228] sm:$0xf]
        %v3123 = vld [vmem:[#allocation6 + $0x22c] sm:$0xf]
        %v3124 = vld [vmem:[#allocation6 + $0x230] sm:$0xf]
        %v3125 = vld [vmem:[#allocation6 + $0x234] sm:$0xf]
        %v3126 = vld [vmem:[#allocation6 + $0x238] sm:$0xf]
        %v3127 = vld [vmem:[#allocation6 + $0x23c] sm:$0xf]
        %v3144 = vunpack.c.l.b16 %v3112
        %v3145 = vunpack.c.l.b16 %v3113
        %v3146 = vunpack.c.l.b16 %v3114
        %v3147 = vunpack.c.l.b16 %v3115
        %v3148 = vunpack.c.l.b16 %v3116
        %v3149 = vunpack.c.l.b16 %v3117
        %v3150 = vunpack.c.l.b16 %v3118
        %v3151 = vunpack.c.l.b16 %v3119
        %v3152 = vunpack.c.l.b16 %v3120
        %v3153 = vunpack.c.l.b16 %v3121
        %v3154 = vunpack.c.l.b16 %v3122
        %v3155 = vunpack.c.l.b16 %v3123
        %v3156 = vunpack.c.l.b16 %v3124
        %v3157 = vunpack.c.l.b16 %v3125
        %v3158 = vunpack.c.l.b16 %v3126
        %v3159 = vunpack.c.l.b16 %v3127
        %v3160 = vpack.c.b16 %v3145, %v3144
        %v3161 = vpack.c.b16 %v3147, %v3146
        %v3162 = vpack.c.b16 %v3149, %v3148
        %v3163 = vpack.c.b16 %v3151, %v3150
        %v3164 = vpack.c.b16 %v3153, %v3152
        %v3165 = vpack.c.b16 %v3155, %v3154
        %v3166 = vpack.c.b16 %v3157, %v3156
        %v3167 = vpack.c.b16 %v3159, %v3158
        %3176 = vmatprep.subr.bf16.mxu0 0
        %3177 = vmatpush1.bf16.msra.mxu0 %v3160
        %3178 = vmatprep.subr.bf16.mxu0 0
        %3179 = vmatpush1.bf16.msra.mxu0 %v3161
        %3180 = vmatprep.subr.bf16.mxu0 0
        %3181 = vmatpush1.bf16.msra.mxu0 %v3162
        %3182 = vmatprep.subr.bf16.mxu0 0
        %3183 = vmatpush1.bf16.msra.mxu0 %v3163
        %3184 = vmatprep.subr.bf16.mxu0 0
        %3185 = vmatpush1.bf16.msra.mxu0 %v3164
        %3186 = vmatprep.subr.bf16.mxu0 0
        %3187 = vmatpush1.bf16.msra.mxu0 %v3165
        %3188 = vmatprep.subr.bf16.mxu0 0
        %3189 = vmatpush1.bf16.msra.mxu0 %v3166
        %3190 = vmatprep.subr.bf16.mxu0 0
        %3191 = vmatpush1.bf16.msra.mxu0 %v3167
        %3192 = vmatprep.subr.bf16.mxu0 0
        %3193 = vmatpush1.bf16.msra.mxu0 0
        %3194 = vmatprep.subr.bf16.mxu0 0
        %3195 = vmatpush1.bf16.msra.mxu0 0
        %3196 = vmatprep.subr.bf16.mxu0 0
        %3197 = vmatpush1.bf16.msra.mxu0 0
        %3198 = vmatprep.subr.bf16.mxu0 0
        %3199 = vmatpush1.bf16.msra.mxu0 0
        %3200 = vmatprep.subr.bf16.mxu0 0
        %3201 = vmatpush1.bf16.msra.mxu0 0
        %3202 = vmatprep.subr.bf16.mxu0 0
        %3203 = vmatpush1.bf16.msra.mxu0 0
        %3204 = vmatprep.subr.bf16.mxu0 0
        %3205 = vmatpush1.bf16.msra.mxu0 0
        %3206 = vmatprep.subr.bf16.mxu0 0
        %3207 = vmatpush1.bf16.msra.mxu0 0
        %3208 = vmatprep.mubr.bf16.mxu0 0
        %3209 = vmatmul.mubr.bf16.gmra.mrb[0].mxu0 %v3096
        %v3210 = vpop.f32.mrb[0].mxu0
        %v3211 = vadd.f32 0.0, %v3210
        %v3212 = vpop.f32.mrb[0].mxu0
        %v3213 = vpop.f32.mrb[0].mxu0
        %v3214 = vadd.f32 0.0, %v3213
        %v3215 = vpop.f32.mrb[0].mxu0
        %3216 = vmatprep.mubr.bf16.mxu0 0
        %3217 = vmatmul.mubr.bf16.gmra.mrb[0].mxu0 %v3097
        %v3218 = vpop.f32.mrb[0].mxu0
        %v3219 = vadd.f32 0.0, %v3218
        %v3220 = vpop.f32.mrb[0].mxu0
        %v3221 = vpop.f32.mrb[0].mxu0
        %v3222 = vadd.f32 0.0, %v3221
        %v3223 = vpop.f32.mrb[0].mxu0
        %3224 = vmatprep.mubr.bf16.mxu0 0
        %3225 = vmatmul.mubr.bf16.gmra.mrb[0].mxu0 %v3098
        %v3226 = vpop.f32.mrb[0].mxu0
        %v3227 = vadd.f32 0.0, %v3226
        %v3228 = vpop.f32.mrb[0].mxu0
        %v3229 = vpop.f32.mrb[0].mxu0
        %v3230 = vadd.f32 0.0, %v3229
        %v3231 = vpop.f32.mrb[0].mxu0
        %3232 = vmatprep.mubr.bf16.mxu0 0
        %3233 = vmatmul.mubr.bf16.gmra.mrb[0].mxu0 %v3099
        %v3234 = vpop.f32.mrb[0].mxu0
        %v3235 = vadd.f32 0.0, %v3234
        %v3236 = vpop.f32.mrb[0].mxu0
        %v3237 = vpop.f32.mrb[0].mxu0
        %v3238 = vadd.f32 0.0, %v3237
        %v3239 = vpop.f32.mrb[0].mxu0
        %3240 = vmatprep.mubr.bf16.mxu0 0
        %3241 = vmatmul.mubr.bf16.gmra.mrb[0].mxu0 %v3100
        %v3242 = vpop.f32.mrb[0].mxu0
        %v3243 = vadd.f32 0.0, %v3242
        %v3244 = vpop.f32.mrb[0].mxu0
        %v3245 = vpop.f32.mrb[0].mxu0
        %v3246 = vadd.f32 0.0, %v3245
        %v3247 = vpop.f32.mrb[0].mxu0
        %3248 = vmatprep.mubr.bf16.mxu0 0
        %3249 = vmatmul.mubr.bf16.gmra.mrb[0].mxu0 %v3101
        %v3250 = vpop.f32.mrb[0].mxu0
        %v3251 = vadd.f32 0.0, %v3250
        %v3252 = vpop.f32.mrb[0].mxu0
        %v3253 = vpop.f32.mrb[0].mxu0
        %v3254 = vadd.f32 0.0, %v3253
        %v3255 = vpop.f32.mrb[0].mxu0
        %3256 = vmatprep.mubr.bf16.mxu0 0
        %3257 = vmatmul.mubr.bf16.gmra.mrb[0].mxu0 %v3102
        %v3258 = vpop.f32.mrb[0].mxu0
        %v3259 = vadd.f32 0.0, %v3258
        %v3260 = vpop.f32.mrb[0].mxu0
        %v3261 = vpop.f32.mrb[0].mxu0
        %v3262 = vadd.f32 0.0, %v3261
        %v3263 = vpop.f32.mrb[0].mxu0
        %3264 = vmatprep.mubr.bf16.mxu0 0
        %3265 = vmatmul.mubr.bf16.gmra.mrb[0].mxu0 %v3103
        %v3266 = vpop.f32.mrb[0].mxu0
        %v3267 = vadd.f32 0.0, %v3266
        %v3268 = vpop.f32.mrb[0].mxu0
        %v3269 = vpop.f32.mrb[0].mxu0
        %v3270 = vadd.f32 0.0, %v3269
        %v3271 = vpop.f32.mrb[0].mxu0
        %3272 = vmatprep.mubr.bf16.mxu0 0
        %3273 = vmatmul.mubr.bf16.gmra.mrb[0].mxu0 %v3104
        %v3274 = vpop.f32.mrb[0].mxu0
        %v3275 = vadd.f32 0.0, %v3274
        %v3276 = vpop.f32.mrb[0].mxu0
        %v3277 = vpop.f32.mrb[0].mxu0
        %v3278 = vadd.f32 0.0, %v3277
        %v3279 = vpop.f32.mrb[0].mxu0
        %3280 = vmatprep.mubr.bf16.mxu0 0
        %3281 = vmatmul.mubr.bf16.gmra.mrb[0].mxu0 %v3105
        %v3282 = vpop.f32.mrb[0].mxu0
        %v3283 = vadd.f32 0.0, %v3282
        %v3284 = vpop.f32.mrb[0].mxu0
        %v3285 = vpop.f32.mrb[0].mxu0
        %v3286 = vadd.f32 0.0, %v3285
        %v3287 = vpop.f32.mrb[0].mxu0
        %3288 = vmatprep.mubr.bf16.mxu0 0
        %3289 = vmatmul.mubr.bf16.gmra.mrb[0].mxu0 %v3106
        %v3290 = vpop.f32.mrb[0].mxu0
        %v3291 = vadd.f32 0.0, %v3290
        %v3292 = vpop.f32.mrb[0].mxu0
        %v3293 = vpop.f32.mrb[0].mxu0
        %v3294 = vadd.f32 0.0, %v3293
        %v3295 = vpop.f32.mrb[0].mxu0
        %3296 = vmatprep.mubr.bf16.mxu0 0
        %3297 = vmatmul.mubr.bf16.gmra.mrb[0].mxu0 %v3107
        %v3298 = vpop.f32.mrb[0].mxu0
        %v3299 = vadd.f32 0.0, %v3298
        %v3300 = vpop.f32.mrb[0].mxu0
        %v3301 = vpop.f32.mrb[0].mxu0
        %v3302 = vadd.f32 0.0, %v3301
        %v3303 = vpop.f32.mrb[0].mxu0
        %3304 = vmatprep.mubr.bf16.mxu0 0
        %3305 = vmatmul.mubr.bf16.gmra.mrb[0].mxu0 %v3108
        %v3306 = vpop.f32.mrb[0].mxu0
        %v3307 = vadd.f32 0.0, %v3306
        %v3308 = vpop.f32.mrb[0].mxu0
        %v3309 = vpop.f32.mrb[0].mxu0
        %v3310 = vadd.f32 0.0, %v3309
        %v3311 = vpop.f32.mrb[0].mxu0
        %3312 = vmatprep.mubr.bf16.mxu0 0
        %3313 = vmatmul.mubr.bf16.gmra.mrb[0].mxu0 %v3109
        %v3314 = vpop.f32.mrb[0].mxu0
        %v3315 = vadd.f32 0.0, %v3314
        %v3316 = vpop.f32.mrb[0].mxu0
        %v3317 = vpop.f32.mrb[0].mxu0
        %v3318 = vadd.f32 0.0, %v3317
        %v3319 = vpop.f32.mrb[0].mxu0
        %3320 = vmatprep.mubr.bf16.mxu0 0
        %3321 = vmatmul.mubr.bf16.gmra.mrb[0].mxu0 %v3110
        %v3322 = vpop.f32.mrb[0].mxu0
        %v3323 = vadd.f32 0.0, %v3322
        %v3324 = vpop.f32.mrb[0].mxu0
        %v3325 = vpop.f32.mrb[0].mxu0
        %v3326 = vadd.f32 0.0, %v3325
        %v3327 = vpop.f32.mrb[0].mxu0
        %3328 = vmatprep.mubr.bf16.mxu0 0
        %3329 = vmatmul.mubr.bf16.gmra.mrb[0].mxu0 %v3111
        %v3330 = vpop.f32.mrb[0].mxu0
        %v3331 = vadd.f32 0.0, %v3330
        %v3332 = vpop.f32.mrb[0].mxu0
        %v3333 = vpop.f32.mrb[0].mxu0
        %v3334 = vadd.f32 0.0, %v3333
        %v3335 = vpop.f32.mrb[0].mxu0
        %3336 = vdwg.mxu0
        %v3337 = vadd.f32 %v2839, %v3211
        %v3338 = vadd.f32 %v2840, %v3214
        %v3339 = vadd.f32 %v2841, %v3219
        %v3340 = vadd.f32 %v2842, %v3222
        %v3341 = vadd.f32 %v2843, %v3227
        %v3342 = vadd.f32 %v2844, %v3230
        %v3343 = vadd.f32 %v2845, %v3235
        %v3344 = vadd.f32 %v2846, %v3238
        %v3345 = vadd.f32 %v2847, %v3243
        %v3346 = vadd.f32 %v2848, %v3246
        %v3347 = vadd.f32 %v2849, %v3251
        %v3348 = vadd.f32 %v2850, %v3254
        %v3349 = vadd.f32 %v2851, %v3259
        %v3350 = vadd.f32 %v2852, %v3262
        %v3351 = vadd.f32 %v2853, %v3267
        %v3352 = vadd.f32 %v2854, %v3270
        %v3353 = vadd.f32 %v2855, %v3275
        %v3354 = vadd.f32 %v2856, %v3278
        %v3355 = vadd.f32 %v2857, %v3283
        %v3356 = vadd.f32 %v2858, %v3286
        %v3357 = vadd.f32 %v2859, %v3291
        %v3358 = vadd.f32 %v2860, %v3294
        %v3359 = vadd.f32 %v2861, %v3299
        %v3360 = vadd.f32 %v2862, %v3302
        %v3361 = vadd.f32 %v2863, %v3307
        %v3362 = vadd.f32 %v2864, %v3310
        %v3363 = vadd.f32 %v2865, %v3315
        %v3364 = vadd.f32 %v2866, %v3318
        %v3365 = vadd.f32 %v2867, %v3323
        %v3366 = vadd.f32 %v2868, %v3326
        %v3367 = vadd.f32 %v2869, %v3331
        %v3368 = vadd.f32 %v2870, %v3334
        %v3369 = vld [vmem:[%s3] sm:$0x1]
        %v3371 = vlaneseq
        %v3372 = vshrl.u32 %v3371, 7
        %v3373 = vsub.s32 0, %v3372
        %v3374 = vrot.slane %v3369, %v3373
        %v3376 = vadd.f32 %v3337, %v3374
        %v3377 = vadd.f32 %v3338, %v3374
        %v3378 = vadd.f32 %v3339, %v3374
        %v3379 = vadd.f32 %v3340, %v3374
        %v3380 = vadd.f32 %v3341, %v3374
        %v3381 = vadd.f32 %v3342, %v3374
        %v3382 = vadd.f32 %v3343, %v3374
        %v3383 = vadd.f32 %v3344, %v3374
        %v3384 = vadd.f32 %v3345, %v3374
        %v3385 = vadd.f32 %v3346, %v3374
        %v3386 = vadd.f32 %v3347, %v3374
        %v3387 = vadd.f32 %v3348, %v3374
        %v3388 = vadd.f32 %v3349, %v3374
        %v3389 = vadd.f32 %v3350, %v3374
        %v3390 = vadd.f32 %v3351, %v3374
        %v3391 = vadd.f32 %v3352, %v3374
        %v3392 = vadd.f32 %v3353, %v3374
        %v3393 = vadd.f32 %v3354, %v3374
        %v3394 = vadd.f32 %v3355, %v3374
        %v3395 = vadd.f32 %v3356, %v3374
        %v3396 = vadd.f32 %v3357, %v3374
        %v3397 = vadd.f32 %v3358, %v3374
        %v3398 = vadd.f32 %v3359, %v3374
        %v3399 = vadd.f32 %v3360, %v3374
        %v3400 = vadd.f32 %v3361, %v3374
        %v3401 = vadd.f32 %v3362, %v3374
        %v3402 = vadd.f32 %v3363, %v3374
        %v3403 = vadd.f32 %v3364, %v3374
        %v3404 = vadd.f32 %v3365, %v3374
        %v3405 = vadd.f32 %v3366, %v3374
        %v3406 = vadd.f32 %v3367, %v3374
        %v3407 = vadd.f32 %v3368, %v3374
        %v3408 = vpack.c.bf16 %v3377, %v3376
        %v3409 = vpack.c.bf16 %v3379, %v3378
        %v3410 = vpack.c.bf16 %v3381, %v3380
        %v3411 = vpack.c.bf16 %v3383, %v3382
        %v3412 = vpack.c.bf16 %v3385, %v3384
        %v3413 = vpack.c.bf16 %v3387, %v3386
        %v3414 = vpack.c.bf16 %v3389, %v3388
        %v3415 = vpack.c.bf16 %v3391, %v3390
        %v3416 = vpack.c.bf16 %v3393, %v3392
        %v3417 = vpack.c.bf16 %v3395, %v3394
        %v3418 = vpack.c.bf16 %v3397, %v3396
        %v3419 = vpack.c.bf16 %v3399, %v3398
        %v3420 = vpack.c.bf16 %v3401, %v3400
        %v3421 = vpack.c.bf16 %v3403, %v3402
        %v3422 = vpack.c.bf16 %v3405, %v3404
        %v3423 = vpack.c.bf16 %v3407, %v3406
        %v3424 = vld [vmem:[#allocation7] sm:$0xf]
        %v3425 = vld [vmem:[#allocation7 + $0x4] sm:$0xf]
        %v3426 = vld [vmem:[#allocation7 + $0x8] sm:$0xf]
        %v3427 = vld [vmem:[#allocation7 + $0xc] sm:$0xf]
        %v3428 = vld [vmem:[#allocation7 + $0x10] sm:$0xf]
        %v3429 = vld [vmem:[#allocation7 + $0x14] sm:$0xf]
        %v3430 = vld [vmem:[#allocation7 + $0x18] sm:$0xf]
        %v3431 = vld [vmem:[#allocation7 + $0x1c] sm:$0xf]
        %v3432 = vld [vmem:[#allocation7 + $0x20] sm:$0xf]
        %v3433 = vld [vmem:[#allocation7 + $0x24] sm:$0xf]
        %v3434 = vld [vmem:[#allocation7 + $0x28] sm:$0xf]
        %v3435 = vld [vmem:[#allocation7 + $0x2c] sm:$0xf]
        %v3436 = vld [vmem:[#allocation7 + $0x30] sm:$0xf]
        %v3437 = vld [vmem:[#allocation7 + $0x34] sm:$0xf]
        %v3438 = vld [vmem:[#allocation7 + $0x38] sm:$0xf]
        %v3439 = vld [vmem:[#allocation7 + $0x3c] sm:$0xf]
        %v3440 = vld [vmem:[%s5] sm:$0x1]
        %v3442 = vlaneseq
        %v3443 = vshrl.u32 %v3442, 7
        %v3444 = vsub.s32 0, %v3443
        %v3445 = vrot.slane %v3440, %v3444
        %v3463 = vunpack.c.l.b16 %v3424
        %v3464 = vunpack.c.l.b16 %v3425
        %v3465 = vunpack.c.l.b16 %v3426
        %v3466 = vunpack.c.l.b16 %v3427
        %v3467 = vunpack.c.l.b16 %v3428
        %v3468 = vunpack.c.l.b16 %v3429
        %v3469 = vunpack.c.l.b16 %v3430
        %v3470 = vunpack.c.l.b16 %v3431
        %v3471 = vunpack.c.l.b16 %v3432
        %v3472 = vunpack.c.l.b16 %v3433
        %v3473 = vunpack.c.l.b16 %v3434
        %v3474 = vunpack.c.l.b16 %v3435
        %v3475 = vunpack.c.l.b16 %v3436
        %v3476 = vunpack.c.l.b16 %v3437
        %v3477 = vunpack.c.l.b16 %v3438
        %v3478 = vunpack.c.l.b16 %v3439
        %v3479 = vpack.c.b16 %v3464, %v3463
        %v3480 = vpack.c.b16 %v3466, %v3465
        %v3481 = vpack.c.b16 %v3468, %v3467
        %v3482 = vpack.c.b16 %v3470, %v3469
        %v3483 = vpack.c.b16 %v3472, %v3471
        %v3484 = vpack.c.b16 %v3474, %v3473
        %v3485 = vpack.c.b16 %v3476, %v3475
        %v3486 = vpack.c.b16 %v3478, %v3477
        %3495 = vmatprep.subr.bf16.mxu0 0
        %3496 = vmatpush1.bf16.msra.mxu0 %v3479
        %3497 = vmatprep.subr.bf16.mxu0 0
        %3498 = vmatpush1.bf16.msra.mxu0 %v3480
        %3499 = vmatprep.subr.bf16.mxu0 0
        %3500 = vmatpush1.bf16.msra.mxu0 %v3481
        %3501 = vmatprep.subr.bf16.mxu0 0
        %3502 = vmatpush1.bf16.msra.mxu0 %v3482
        %3503 = vmatprep.subr.bf16.mxu0 0
        %3504 = vmatpush1.bf16.msra.mxu0 %v3483
        %3505 = vmatprep.subr.bf16.mxu0 0
        %3506 = vmatpush1.bf16.msra.mxu0 %v3484
        %3507 = vmatprep.subr.bf16.mxu0 0
        %3508 = vmatpush1.bf16.msra.mxu0 %v3485
        %3509 = vmatprep.subr.bf16.mxu0 0
        %3510 = vmatpush1.bf16.msra.mxu0 %v3486
        %3511 = vmatprep.subr.bf16.mxu0 0
        %3512 = vmatpush1.bf16.msra.mxu0 0
        %3513 = vmatprep.subr.bf16.mxu0 0
        %3514 = vmatpush1.bf16.msra.mxu0 0
        %3515 = vmatprep.subr.bf16.mxu0 0
        %3516 = vmatpush1.bf16.msra.mxu0 0
        %3517 = vmatprep.subr.bf16.mxu0 0
        %3518 = vmatpush1.bf16.msra.mxu0 0
        %3519 = vmatprep.subr.bf16.mxu0 0
        %3520 = vmatpush1.bf16.msra.mxu0 0
        %3521 = vmatprep.subr.bf16.mxu0 0
        %3522 = vmatpush1.bf16.msra.mxu0 0
        %3523 = vmatprep.subr.bf16.mxu0 0
        %3524 = vmatpush1.bf16.msra.mxu0 0
        %3525 = vmatprep.subr.bf16.mxu0 0
        %3526 = vmatpush1.bf16.msra.mxu0 0
        %3527 = vmatprep.mubr.bf16.mxu0 0
        %3528 = vmatmul.mubr.bf16.gmra.mrb[0].mxu0 %v3408
        %v3529 = vpop.f32.mrb[0].mxu0
        %v3530 = vadd.f32 %v3445, %v3529
        %v3531 = vpop.f32.mrb[0].mxu0
        %v3532 = vpop.f32.mrb[0].mxu0
        %v3533 = vadd.f32 %v3445, %v3532
        %v3534 = vpop.f32.mrb[0].mxu0
        %3535 = vmatprep.mubr.bf16.mxu0 0
        %3536 = vmatmul.mubr.bf16.gmra.mrb[0].mxu0 %v3409
        %v3537 = vpop.f32.mrb[0].mxu0
        %v3538 = vadd.f32 %v3445, %v3537
        %v3539 = vpop.f32.mrb[0].mxu0
        %v3540 = vpop.f32.mrb[0].mxu0
        %v3541 = vadd.f32 %v3445, %v3540
        %v3542 = vpop.f32.mrb[0].mxu0
        %3543 = vmatprep.mubr.bf16.mxu0 0
        %3544 = vmatmul.mubr.bf16.gmra.mrb[0].mxu0 %v3410
        %v3545 = vpop.f32.mrb[0].mxu0
        %v3546 = vadd.f32 %v3445, %v3545
        %v3547 = vpop.f32.mrb[0].mxu0
        %v3548 = vpop.f32.mrb[0].mxu0
        %v3549 = vadd.f32 %v3445, %v3548
        %v3550 = vpop.f32.mrb[0].mxu0
        %3551 = vmatprep.mubr.bf16.mxu0 0
        %3552 = vmatmul.mubr.bf16.gmra.mrb[0].mxu0 %v3411
        %v3553 = vpop.f32.mrb[0].mxu0
        %v3554 = vadd.f32 %v3445, %v3553
        %v3555 = vpop.f32.mrb[0].mxu0
        %v3556 = vpop.f32.mrb[0].mxu0
        %v3557 = vadd.f32 %v3445, %v3556
        %v3558 = vpop.f32.mrb[0].mxu0
        %3559 = vmatprep.mubr.bf16.mxu0 0
        %3560 = vmatmul.mubr.bf16.gmra.mrb[0].mxu0 %v3412
        %v3561 = vpop.f32.mrb[0].mxu0
        %v3562 = vadd.f32 %v3445, %v3561
        %v3563 = vpop.f32.mrb[0].mxu0
        %v3564 = vpop.f32.mrb[0].mxu0
        %v3565 = vadd.f32 %v3445, %v3564
        %v3566 = vpop.f32.mrb[0].mxu0
        %3567 = vmatprep.mubr.bf16.mxu0 0
        %3568 = vmatmul.mubr.bf16.gmra.mrb[0].mxu0 %v3413
        %v3569 = vpop.f32.mrb[0].mxu0
        %v3570 = vadd.f32 %v3445, %v3569
        %v3571 = vpop.f32.mrb[0].mxu0
        %v3572 = vpop.f32.mrb[0].mxu0
        %v3573 = vadd.f32 %v3445, %v3572
        %v3574 = vpop.f32.mrb[0].mxu0
        %3575 = vmatprep.mubr.bf16.mxu0 0
        %3576 = vmatmul.mubr.bf16.gmra.mrb[0].mxu0 %v3414
        %v3577 = vpop.f32.mrb[0].mxu0
        %v3578 = vadd.f32 %v3445, %v3577
        %v3579 = vpop.f32.mrb[0].mxu0
        %v3580 = vpop.f32.mrb[0].mxu0
        %v3581 = vadd.f32 %v3445, %v3580
        %v3582 = vpop.f32.mrb[0].mxu0
        %3583 = vmatprep.mubr.bf16.mxu0 0
        %3584 = vmatmul.mubr.bf16.gmra.mrb[0].mxu0 %v3415
        %v3585 = vpop.f32.mrb[0].mxu0
        %v3586 = vadd.f32 %v3445, %v3585
        %v3587 = vpop.f32.mrb[0].mxu0
        %v3588 = vpop.f32.mrb[0].mxu0
        %v3589 = vadd.f32 %v3445, %v3588
        %v3590 = vpop.f32.mrb[0].mxu0
        %3591 = vmatprep.mubr.bf16.mxu0 0
        %3592 = vmatmul.mubr.bf16.gmra.mrb[0].mxu0 %v3416
        %v3593 = vpop.f32.mrb[0].mxu0
        %v3594 = vadd.f32 %v3445, %v3593
        %v3595 = vpop.f32.mrb[0].mxu0
        %v3596 = vpop.f32.mrb[0].mxu0
        %v3597 = vadd.f32 %v3445, %v3596
        %v3598 = vpop.f32.mrb[0].mxu0
        %3599 = vmatprep.mubr.bf16.mxu0 0
        %3600 = vmatmul.mubr.bf16.gmra.mrb[0].mxu0 %v3417
        %v3601 = vpop.f32.mrb[0].mxu0
        %v3602 = vadd.f32 %v3445, %v3601
        %v3603 = vpop.f32.mrb[0].mxu0
        %v3604 = vpop.f32.mrb[0].mxu0
        %v3605 = vadd.f32 %v3445, %v3604
        %v3606 = vpop.f32.mrb[0].mxu0
        %3607 = vmatprep.mubr.bf16.mxu0 0
        %3608 = vmatmul.mubr.bf16.gmra.mrb[0].mxu0 %v3418
        %v3609 = vpop.f32.mrb[0].mxu0
        %v3610 = vadd.f32 %v3445, %v3609
        %v3611 = vpop.f32.mrb[0].mxu0
        %v3612 = vpop.f32.mrb[0].mxu0
        %v3613 = vadd.f32 %v3445, %v3612
        %v3614 = vpop.f32.mrb[0].mxu0
        %3615 = vmatprep.mubr.bf16.mxu0 0
        %3616 = vmatmul.mubr.bf16.gmra.mrb[0].mxu0 %v3419
        %v3617 = vpop.f32.mrb[0].mxu0
        %v3618 = vadd.f32 %v3445, %v3617
        %v3619 = vpop.f32.mrb[0].mxu0
        %v3620 = vpop.f32.mrb[0].mxu0
        %v3621 = vadd.f32 %v3445, %v3620
        %v3622 = vpop.f32.mrb[0].mxu0
        %3623 = vmatprep.mubr.bf16.mxu0 0
        %3624 = vmatmul.mubr.bf16.gmra.mrb[0].mxu0 %v3420
        %v3625 = vpop.f32.mrb[0].mxu0
        %v3626 = vadd.f32 %v3445, %v3625
        %v3627 = vpop.f32.mrb[0].mxu0
        %v3628 = vpop.f32.mrb[0].mxu0
        %v3629 = vadd.f32 %v3445, %v3628
        %v3630 = vpop.f32.mrb[0].mxu0
        %3631 = vmatprep.mubr.bf16.mxu0 0
        %3632 = vmatmul.mubr.bf16.gmra.mrb[0].mxu0 %v3421
        %v3633 = vpop.f32.mrb[0].mxu0
        %v3634 = vadd.f32 %v3445, %v3633
        %v3635 = vpop.f32.mrb[0].mxu0
        %v3636 = vpop.f32.mrb[0].mxu0
        %v3637 = vadd.f32 %v3445, %v3636
        %v3638 = vpop.f32.mrb[0].mxu0
        %3639 = vmatprep.mubr.bf16.mxu0 0
        %3640 = vmatmul.mubr.bf16.gmra.mrb[0].mxu0 %v3422
        %v3641 = vpop.f32.mrb[0].mxu0
        %v3642 = vadd.f32 %v3445, %v3641
        %v3643 = vpop.f32.mrb[0].mxu0
        %v3644 = vpop.f32.mrb[0].mxu0
        %v3645 = vadd.f32 %v3445, %v3644
        %v3646 = vpop.f32.mrb[0].mxu0
        %3647 = vmatprep.mubr.bf16.mxu0 0
        %3648 = vmatmul.mubr.bf16.gmra.mrb[0].mxu0 %v3423
        %v3649 = vpop.f32.mrb[0].mxu0
        %v3650 = vadd.f32 %v3445, %v3649
        %v3651 = vpop.f32.mrb[0].mxu0
        %v3652 = vpop.f32.mrb[0].mxu0
        %v3653 = vadd.f32 %v3445, %v3652
        %v3654 = vpop.f32.mrb[0].mxu0
        %3655 = vdwg.mxu0
        %vm3656 = vcmask 15360
        %3657 = vst.msk [vmem:[%s316] sm:$0xff] %vm3656, %v3530
        %3658 = vst.msk [vmem:[%s316 + $0x8] sm:$0xff] %vm3656, %v3533
        %3659 = vst.msk [vmem:[%s316 + $0x10] sm:$0xff] %vm3656, %v3538
        %3660 = vst.msk [vmem:[%s316 + $0x18] sm:$0xff] %vm3656, %v3541
        %3661 = vst.msk [vmem:[%s316 + $0x20] sm:$0xff] %vm3656, %v3546
        %3662 = vst.msk [vmem:[%s316 + $0x28] sm:$0xff] %vm3656, %v3549
        %3663 = vst.msk [vmem:[%s316 + $0x30] sm:$0xff] %vm3656, %v3554
        %3664 = vst.msk [vmem:[%s316 + $0x38] sm:$0xff] %vm3656, %v3557
        %3665 = vst.msk [vmem:[%s316 + $0x40] sm:$0xff] %vm3656, %v3562
        %3666 = vst.msk [vmem:[%s316 + $0x48] sm:$0xff] %vm3656, %v3565
        %3667 = vst.msk [vmem:[%s316 + $0x50] sm:$0xff] %vm3656, %v3570
        %3668 = vst.msk [vmem:[%s316 + $0x58] sm:$0xff] %vm3656, %v3573
        %3669 = vst.msk [vmem:[%s316 + $0x60] sm:$0xff] %vm3656, %v3578
        %3670 = vst.msk [vmem:[%s316 + $0x68] sm:$0xff] %vm3656, %v3581
        %3671 = vst.msk [vmem:[%s316 + $0x70] sm:$0xff] %vm3656, %v3586
        %3672 = vst.msk [vmem:[%s316 + $0x78] sm:$0xff] %vm3656, %v3589
        %3673 = vst.msk [vmem:[%s316 + $0x80] sm:$0xff] %vm3656, %v3594
        %3674 = vst.msk [vmem:[%s316 + $0x88] sm:$0xff] %vm3656, %v3597
        %3675 = vst.msk [vmem:[%s316 + $0x90] sm:$0xff] %vm3656, %v3602
        %3676 = vst.msk [vmem:[%s316 + $0x98] sm:$0xff] %vm3656, %v3605
        %3677 = vst.msk [vmem:[%s316 + $0xa0] sm:$0xff] %vm3656, %v3610
        %3678 = vst.msk [vmem:[%s316 + $0xa8] sm:$0xff] %vm3656, %v3613
        %3679 = vst.msk [vmem:[%s316 + $0xb0] sm:$0xff] %vm3656, %v3618
        %3680 = vst.msk [vmem:[%s316 + $0xb8] sm:$0xff] %vm3656, %v3621
        %3681 = vst.msk [vmem:[%s316 + $0xc0] sm:$0xff] %vm3656, %v3626
        %3682 = vst.msk [vmem:[%s316 + $0xc8] sm:$0xff] %vm3656, %v3629
        %3683 = vst.msk [vmem:[%s316 + $0xd0] sm:$0xff] %vm3656, %v3634
        %3684 = vst.msk [vmem:[%s316 + $0xd8] sm:$0xff] %vm3656, %v3637
        %3685 = vst.msk [vmem:[%s316 + $0xe0] sm:$0xff] %vm3656, %v3642
        %3686 = vst.msk [vmem:[%s316 + $0xe8] sm:$0xff] %vm3656, %v3645
        %3687 = vst.msk [vmem:[%s316 + $0xf0] sm:$0xff] %vm3656, %v3650
        %3688 = vst.msk [vmem:[%s316 + $0xf8] sm:$0xff] %vm3656, %v3653
        %s3689 = smul.u32 32, %s22
        %p3690 = scmp.lt.s32.totalorder %s3689, 63
        %s3691 = scalar_select %p3690, %s3689, 63
        %s3692 = smul.addr %s3691, 8
        %s3693 = scalar_lea.vmem %s6, %s3692
        // Predicated region
        $region61: #{tpu_custom_call.1} parent=43 // pred_check
          %p3694 = pneg %p171
        $region62: #{tpu_custom_call.1} parent=43 // pred_check_branch
          %3696 = sbr.rel (%p3694) target = $region64
        $region63: #{tpu_custom_call.1} parent=43 // pred_region
          %s3697 = smul.u32 32, %s22
        $region64: #{tpu_custom_call.1} parent=43 // pred_fallthru
          _
      $region44: #{tpu_custom_call.1} parent=5 // pred_fallthru
        _
      %p3698 = scmp.le.s32.totalorder 2, %s17
      // Predicated region
      $region65: #{tpu_custom_call.1} parent=5 // pred_check
        %p3699 = pneg %p3698
      $region66: #{tpu_custom_call.1} parent=5 // pred_check_branch
        %3701 = sbr.rel (%p3699) target = $region68
      $region67: #{tpu_custom_call.1} parent=5 // pred_region
        %s3702 = ssub.s32 %s17, 2
        // Predicated region
        $region69: #{tpu_custom_call.1} parent=67 // pred_check
          %p3703 = pneg %p177
        $region70: #{tpu_custom_call.1} parent=67 // pred_check_branch
          %3705 = sbr.rel (%p3703) target = $region72
        $region71: #{tpu_custom_call.1} parent=67 // pred_region
          %s3706 = smul.u32 32, %s23
          %p3707 = scmp.lt.s32.totalorder %s3706, 63
          %s3708 = scalar_select %p3707, %s3706, 63
          %s3709 = smul.addr %s3708, 8
          %s3710 = scalar_lea.vmem %s6, %s3709
        $region72: #{tpu_custom_call.1} parent=67 // pred_fallthru
          _
      $region68: #{tpu_custom_call.1} parent=5 // pred_fallthru
        _
    $region6: #{tpu_custom_call.1} parent=1 // loop_footer
      %s21 = sadd.s32 1, %s17
    $region7: #{tpu_custom_call.1} parent=1 // loop_footer_branch
      %16 = sbr.rel target = $region3
    $region8: #{tpu_custom_call.1} parent=1 // loop_exit
      _
    %3711 = vsyncpa [#allocation3], 1
    %s3712 = scalar_lea.sflag [#allocation3], 1
    %3713 = vsyncpa %s3712, 1
    %3714 = vsyncpa [#allocation5], 1
    %3715 = vsyncpa [#allocation8], 1

</llo_original>
